<compile_context>
chip_gen: v7x
topology: tpu7x:2x2x1
jax: 0.10.0
libtpu: 0.0.40
codegen_flags: <defaults>
</compile_context>

<pallas_src>
import functools

import jax
import jax.numpy as jnp
from jax.experimental import pallas as pl
from jax.experimental.pallas import tpu as pltpu

# MXU-native operand dtype on all of v5e / v6e / v7x. Accumulation stays f32.
MATMUL_DTYPE = jnp.bfloat16


# ----------------------------- in-kernel helpers -----------------------------

def _gelu(x):
    # TODO(synk): PyTorch BERT uses exact erf-based gelu; tanh approximation used here.
    return 0.5 * x * (1.0 + jnp.tanh(0.7978845608028654 * (x + 0.044715 * x * x * x)))


def _layernorm(x, g, b, eps):
    mean = jnp.mean(x, axis=-1, keepdims=True)
    var = jnp.mean(jnp.square(x - mean), axis=-1, keepdims=True)
    return (x - mean) * jax.lax.rsqrt(var + eps) * g + b


# ------------------------------- fused kernel --------------------------------

def _adapter_kernel(hid_ref, down_w_ref, down_b_ref,
                    qkv_w_ref, qkv_b_ref, ao_w_ref,
                    i_w_ref, i_b_ref, o_w_ref, vec_a_ref,
                    up_w_ref, up_b_ref, o_ref,
                    *, num_heads, num_layers, eps):
    mm = MATMUL_DTYPE
    f32 = jnp.float32

    # down_project: bf16 MXU operands, f32 accumulation + bias
    h = jnp.dot(hid_ref[...].astype(mm), down_w_ref[...],
                preferred_element_type=f32) + down_b_ref[...]          # (S, A) f32

    for layer in range(num_layers):
        hb = h.astype(mm)
        base = layer * 3 * num_heads
        vbase = layer * 6

        # ---- self-attention ------------------------------------------------
        # Heads are handled purely through leading-axis weight indexing (free);
        # the head merge is folded into the per-head output-projection matmul,
        # so there are no lane slices, concatenates or reshapes on activations.
        attn = None
        for head in range(num_heads):
            qi = base + head
            ki = base + num_heads + head
            vi = base + 2 * num_heads + head

            qh = jnp.dot(hb, qkv_w_ref[qi], preferred_element_type=f32) + qkv_b_ref[qi]
            kh = jnp.dot(hb, qkv_w_ref[ki], preferred_element_type=f32) + qkv_b_ref[ki]
            vh = jnp.dot(hb, qkv_w_ref[vi], preferred_element_type=f32) + qkv_b_ref[vi]

            # scores (S, S): q . k^T via dot_general contracting the last dims.
            # The 1/sqrt(head_dim) scale is folded into the Q weights/bias at pack
            # time; the additive attention mask is identically zero (mask = ones).
            s = jax.lax.dot_general(qh.astype(mm), kh.astype(mm),
                                    (((1,), (1,)), ((), ())),
                                    preferred_element_type=f32)
            s = s - jnp.max(s, axis=-1, keepdims=True)
            p = jnp.exp(s)
            p = p * pl.reciprocal(jnp.sum(p, axis=-1, keepdims=True), approx=True)

            ctx = jnp.dot(p.astype(mm), vh.astype(mm),
                          preferred_element_type=f32)                   # (S, Dh)
            part = jnp.dot(ctx.astype(mm), ao_w_ref[layer * num_heads + head],
                           preferred_element_type=f32)                  # (S, A)
            attn = part if attn is None else attn + part

        attn = attn + vec_a_ref[vbase + 0]                              # ao_b
        h = _layernorm(attn + h, vec_a_ref[vbase + 1], vec_a_ref[vbase + 2], eps)

        # ---- feed-forward ----------------------------------------------------
        inter = jnp.dot(h.astype(mm), i_w_ref[layer],
                        preferred_element_type=f32) + i_b_ref[layer]
        inter = _gelu(inter)
        out = jnp.dot(inter.astype(mm), o_w_ref[layer],
                      preferred_element_type=f32) + vec_a_ref[vbase + 3]
        h = _layernorm(out + h, vec_a_ref[vbase + 4], vec_a_ref[vbase + 5], eps)

    # up_project + final residual. hid_ref is re-read here (rather than keeping an
    # f32 copy live across all layers) to shorten the input's live range.
    up = jnp.dot(h.astype(mm), up_w_ref[...],
                 preferred_element_type=f32) + up_b_ref[...]
    o_ref[...] = (hid_ref[...].astype(f32) + up).astype(o_ref.dtype)


# ------------------------------ forward wrapper -------------------------------

def adapter_forward(packed, hidden_states, cfg):
    B, S, H = hidden_states.shape
    hid2d = hidden_states.reshape(B * S, H)

    kernel = functools.partial(
        _adapter_kernel,
        num_heads=cfg["num_attention_heads"],
        num_layers=cfg["num_hidden_layers"],
        eps=1e-12,
    )

    weight_args = (
        packed["down_w"], packed["down_b"],
        packed["qkv_w"], packed["qkv_b"], packed["ao_w"],
        packed["i_w"], packed["i_b"], packed["o_w"], packed["vec_a"],
        packed["up_w"], packed["up_b"],
    )

    def resident(a):
        # Constant index map: block == full array, stays VMEM-resident across grid.
        return pl.BlockSpec(a.shape, lambda b, n=a.ndim: (0,) * n)

    # Grid over batches: each step processes one full sequence (S rows), so the
    # attention block never crosses a grid/megacore boundary. Row tile (S, H)
    # satisfies (8, 128) tiling (S multiple of 8, H == full last dim).
    # NOTE: at real BERT scale, size the row tile (multiple of S) so
    # rows*max(H, I)*4B*(~3 live buffers) + resident weights fits the per-chip
    # VMEM budget (64 MiB on v7x).
    out2d = pl.pallas_call(
        kernel,
        out_shape=jax.ShapeDtypeStruct((B * S, H), hidden_states.dtype),
        grid=(B,),
        in_specs=[pl.BlockSpec((S, H), lambda b: (b, 0))]
                 + [resident(a) for a in weight_args],
        out_specs=pl.BlockSpec((S, H), lambda b: (b, 0)),
        compiler_params=pltpu.CompilerParams(
            dimension_semantics=("parallel",),
            vmem_limit_bytes=32 * 1024 * 1024,
        ),
    )(hid2d, *weight_args)
    return out2d.reshape(B, S, H)


# ----------------------------- Parameter handling -----------------------------

def init_params(key, cfg):
    ir = cfg["initializer_range"]
    H, A, I = cfg["project_hidden_size"], cfg["adapter_size"], cfg["intermediate_size"]
    n_layers = cfg["num_hidden_layers"]

    keys = iter(jax.random.split(key, 2 + 6 * n_layers))

    def lin(din, dout):
        w = jax.random.uniform(next(keys), (din, dout), jnp.float32, -ir, ir)
        b = jnp.zeros((dout,), jnp.float32)
        return w, b

    params = {}
    params["down_w"], params["down_b"] = lin(H, A)
    layers = []
    for _ in range(n_layers):
        layer = {}
        layer["q_w"], layer["q_b"] = lin(A, A)
        layer["k_w"], layer["k_b"] = lin(A, A)
        layer["v_w"], layer["v_b"] = lin(A, A)
        layer["ao_w"], layer["ao_b"] = lin(A, A)
        layer["ln1_g"] = jnp.ones((A,), jnp.float32)
        layer["ln1_b"] = jnp.zeros((A,), jnp.float32)
        layer["i_w"], layer["i_b"] = lin(A, I)
        layer["o_w"], layer["o_b"] = lin(I, A)
        layer["ln2_g"] = jnp.ones((A,), jnp.float32)
        layer["ln2_b"] = jnp.zeros((A,), jnp.float32)
        layers.append(layer)
    params["layers"] = layers
    params["up_w"], params["up_b"] = lin(A, H)
    return params


def pack_params(params, cfg):
    """One-time packing: per-head weight blocks (head split/merge baked in), the
    1/sqrt(head_dim) scale folded into Q, bf16 matmul weights, and all width-A
    vectors stacked into a single blob (fewer, larger DMAs)."""
    A = cfg["adapter_size"]
    nH = cfg["num_attention_heads"]
    Dh = A // nH
    scale = 1.0 / float(Dh) ** 0.5
    layers = params["layers"]
    mm = MATMUL_DTYPE

    def heads_w(w):                                   # (A, A) -> nH x (A, Dh)
        return [w[:, h * Dh:(h + 1) * Dh] for h in range(nH)]

    def heads_b(b):                                   # (A,) -> nH x (1, Dh)
        return [b[h * Dh:(h + 1) * Dh][None, :] for h in range(nH)]

    qkv_w, qkv_b, ao_w, vec_a = [], [], [], []
    i_w, i_b, o_w = [], [], []
    for ly in layers:
        for (w, b, sc) in ((ly["q_w"], ly["q_b"], scale),
                           (ly["k_w"], ly["k_b"], 1.0),
                           (ly["v_w"], ly["v_b"], 1.0)):
            qkv_w.extend(heads_w(w * sc))
            qkv_b.extend(heads_b(b * sc))
        ao_w.extend([ly["ao_w"][h * Dh:(h + 1) * Dh, :] for h in range(nH)])
        vec_a.extend([ly["ao_b"][None, :], ly["ln1_g"][None, :], ly["ln1_b"][None, :],
                      ly["o_b"][None, :], ly["ln2_g"][None, :], ly["ln2_b"][None, :]])
        i_w.append(ly["i_w"])
        i_b.append(ly["i_b"][None, :])
        o_w.append(ly["o_w"])

    return dict(
        down_w=params["down_w"].astype(mm),           # (H, A)        bf16
        down_b=params["down_b"][None, :],             # (1, A)        f32
        up_w=params["up_w"].astype(mm),               # (A, H)        bf16
        up_b=params["up_b"][None, :],                 # (1, H)        f32
        qkv_w=jnp.stack(qkv_w).astype(mm),            # (L*3*nH, A, Dh) bf16
        qkv_b=jnp.stack(qkv_b),                       # (L*3*nH, 1, Dh) f32
        ao_w=jnp.stack(ao_w).astype(mm),              # (L*nH, Dh, A) bf16
        i_w=jnp.stack(i_w).astype(mm),                # (L, A, I)     bf16
        i_b=jnp.stack(i_b),                           # (L, 1, I)     f32
        o_w=jnp.stack(o_w).astype(mm),                # (L, I, A)     bf16
        vec_a=jnp.stack(vec_a),                       # (L*6, 1, A)   f32
    )


# ---------------------------------- main --------------------------------------

if __name__ == "__main__":
    cfg = dict(
        project_hidden_size=32,
        adapter_size=16,
        num_hidden_layers=2,
        num_attention_heads=4,
        intermediate_size=64,
        initializer_range=0.02,
    )
    key = jax.random.PRNGKey(0)
    pkey, xkey = jax.random.split(key)
    params = init_params(pkey, cfg)
    packed = pack_params(params, cfg)

    B, S = 2, 8
    hidden_states = jax.random.normal(
        xkey, (B, S, cfg["project_hidden_size"]), jnp.float32)

    out = adapter_forward(packed, hidden_states, cfg)
    out = jax.block_until_ready(out)
    assert out.shape == hidden_states.shape and out.dtype == jnp.float32
    print("KERNEL_OK")
</pallas_src>

<mosaic_0001>
module attributes {stable_mosaic.version = 11 : i64} {
  func.func @_adapter_kernel(%arg0: i32, %arg1: memref<8x32xf32, #tpu.memory_space<vmem>>, %arg2: memref<32x16xbf16, #tpu.memory_space<vmem>>, %arg3: memref<1x16xf32, #tpu.memory_space<vmem>>, %arg4: memref<24x16x4xbf16, #tpu.memory_space<vmem>>, %arg5: memref<24x1x4xf32, #tpu.memory_space<vmem>>, %arg6: memref<8x4x16xbf16, #tpu.memory_space<vmem>>, %arg7: memref<2x16x64xbf16, #tpu.memory_space<vmem>>, %arg8: memref<2x1x64xf32, #tpu.memory_space<vmem>>, %arg9: memref<2x64x16xbf16, #tpu.memory_space<vmem>>, %arg10: memref<12x1x16xf32, #tpu.memory_space<vmem>>, %arg11: memref<16x32xbf16, #tpu.memory_space<vmem>>, %arg12: memref<1x32xf32, #tpu.memory_space<vmem>>, %arg13: memref<8x32xf32, #tpu.memory_space<vmem>>) attributes {dimension_semantics = [#tpu.dimension_semantics<parallel>], iteration_bounds = array<i64: 2>, scalar_prefetch = 0 : i64, scratch_operands = 0 : i64, tpu.core_type = #tpu.core_type<tc>, window_params = [{transform_indices = @transform_0, window_bounds = array<i64: 8, 32>}, {pipeline_mode = #tpu.pipeline_mode<synchronous>, transform_indices = @transform_1, window_bounds = array<i64: 32, 16>}, {pipeline_mode = #tpu.pipeline_mode<synchronous>, transform_indices = @transform_2, window_bounds = array<i64: 1, 16>}, {pipeline_mode = #tpu.pipeline_mode<synchronous>, transform_indices = @transform_3, window_bounds = array<i64: 24, 16, 4>}, {pipeline_mode = #tpu.pipeline_mode<synchronous>, transform_indices = @transform_4, window_bounds = array<i64: 24, 1, 4>}, {pipeline_mode = #tpu.pipeline_mode<synchronous>, transform_indices = @transform_5, window_bounds = array<i64: 8, 4, 16>}, {pipeline_mode = #tpu.pipeline_mode<synchronous>, transform_indices = @transform_6, window_bounds = array<i64: 2, 16, 64>}, {pipeline_mode = #tpu.pipeline_mode<synchronous>, transform_indices = @transform_7, window_bounds = array<i64: 2, 1, 64>}, {pipeline_mode = #tpu.pipeline_mode<synchronous>, transform_indices = @transform_8, window_bounds = array<i64: 2, 64, 16>}, {pipeline_mode = #tpu.pipeline_mode<synchronous>, transform_indices = @transform_9, window_bounds = array<i64: 12, 1, 16>}, {pipeline_mode = #tpu.pipeline_mode<synchronous>, transform_indices = @transform_10, window_bounds = array<i64: 16, 32>}, {pipeline_mode = #tpu.pipeline_mode<synchronous>, transform_indices = @transform_11, window_bounds = array<i64: 1, 32>}, {transform_indices = @transform_12, window_bounds = array<i64: 8, 32>}]} {
    %c0 = arith.constant 0 : index
    %c0_0 = arith.constant 0 : index
    %0 = vector.load %arg1[%c0, %c0_0] : memref<8x32xf32, #tpu.memory_space<vmem>>, vector<8x32xf32>
    %1 = arith.truncf %0 : vector<8x32xf32> to vector<8x32xbf16>
    %c0_1 = arith.constant 0 : index
    %c0_2 = arith.constant 0 : index
    %2 = vector.load %arg2[%c0_1, %c0_2] : memref<32x16xbf16, #tpu.memory_space<vmem>>, vector<32x16xbf16>
    %cst = arith.constant dense<0.000000e+00> : vector<8x16xf32>
    %3 = tpu.matmul %1, %2, %cst {dimension_numbers = #tpu.dot_dimension_numbers<[1], [0], [0], [1], [0, 0, 1, 1], [], []>} : vector<8x32xbf16>, vector<32x16xbf16>, vector<8x16xf32> -> vector<8x16xf32>
    %c0_3 = arith.constant 0 : index
    %c0_4 = arith.constant 0 : index
    %4 = vector.load %arg3[%c0_3, %c0_4] : memref<1x16xf32, #tpu.memory_space<vmem>>, vector<1x16xf32>
    %5 = vector.broadcast %4 : vector<1x16xf32> to vector<8x16xf32>
    %6 = arith.addf %3, %5 : vector<8x16xf32>
    %7 = arith.truncf %6 : vector<8x16xf32> to vector<8x16xbf16>
    %c0_5 = arith.constant 0 : index
    %c0_6 = arith.constant 0 : index
    %c0_7 = arith.constant 0 : index
    %8 = vector.load %arg4[%c0_5, %c0_6, %c0_7] : memref<24x16x4xbf16, #tpu.memory_space<vmem>>, vector<1x16x4xbf16>
    %9 = vector.shape_cast %8 : vector<1x16x4xbf16> to vector<16x4xbf16>
    %cst_8 = arith.constant dense<0.000000e+00> : vector<8x4xf32>
    %10 = tpu.matmul %7, %9, %cst_8 {dimension_numbers = #tpu.dot_dimension_numbers<[1], [0], [0], [1], [0, 0, 1, 1], [], []>} : vector<8x16xbf16>, vector<16x4xbf16>, vector<8x4xf32> -> vector<8x4xf32>
    %c0_9 = arith.constant 0 : index
    %c0_10 = arith.constant 0 : index
    %c0_11 = arith.constant 0 : index
    %11 = vector.load %arg5[%c0_9, %c0_10, %c0_11] : memref<24x1x4xf32, #tpu.memory_space<vmem>>, vector<1x1x4xf32>
    %12 = vector.shape_cast %11 : vector<1x1x4xf32> to vector<1x4xf32>
    %13 = vector.broadcast %12 : vector<1x4xf32> to vector<8x4xf32>
    %14 = arith.addf %10, %13 : vector<8x4xf32>
    %c4 = arith.constant 4 : index
    %c0_12 = arith.constant 0 : index
    %c0_13 = arith.constant 0 : index
    %15 = vector.load %arg4[%c4, %c0_12, %c0_13] : memref<24x16x4xbf16, #tpu.memory_space<vmem>>, vector<1x16x4xbf16>
    %16 = vector.shape_cast %15 : vector<1x16x4xbf16> to vector<16x4xbf16>
    %cst_14 = arith.constant dense<0.000000e+00> : vector<8x4xf32>
    %17 = tpu.matmul %7, %16, %cst_14 {dimension_numbers = #tpu.dot_dimension_numbers<[1], [0], [0], [1], [0, 0, 1, 1], [], []>} : vector<8x16xbf16>, vector<16x4xbf16>, vector<8x4xf32> -> vector<8x4xf32>
    %c4_15 = arith.constant 4 : index
    %c0_16 = arith.constant 0 : index
    %c0_17 = arith.constant 0 : index
    %18 = vector.load %arg5[%c4_15, %c0_16, %c0_17] : memref<24x1x4xf32, #tpu.memory_space<vmem>>, vector<1x1x4xf32>
    %19 = vector.shape_cast %18 : vector<1x1x4xf32> to vector<1x4xf32>
    %20 = vector.broadcast %19 : vector<1x4xf32> to vector<8x4xf32>
    %21 = arith.addf %17, %20 : vector<8x4xf32>
    %c8 = arith.constant 8 : index
    %c0_18 = arith.constant 0 : index
    %c0_19 = arith.constant 0 : index
    %22 = vector.load %arg4[%c8, %c0_18, %c0_19] : memref<24x16x4xbf16, #tpu.memory_space<vmem>>, vector<1x16x4xbf16>
    %23 = vector.shape_cast %22 : vector<1x16x4xbf16> to vector<16x4xbf16>
    %cst_20 = arith.constant dense<0.000000e+00> : vector<8x4xf32>
    %24 = tpu.matmul %7, %23, %cst_20 {dimension_numbers = #tpu.dot_dimension_numbers<[1], [0], [0], [1], [0, 0, 1, 1], [], []>} : vector<8x16xbf16>, vector<16x4xbf16>, vector<8x4xf32> -> vector<8x4xf32>
    %c8_21 = arith.constant 8 : index
    %c0_22 = arith.constant 0 : index
    %c0_23 = arith.constant 0 : index
    %25 = vector.load %arg5[%c8_21, %c0_22, %c0_23] : memref<24x1x4xf32, #tpu.memory_space<vmem>>, vector<1x1x4xf32>
    %26 = vector.shape_cast %25 : vector<1x1x4xf32> to vector<1x4xf32>
    %27 = vector.broadcast %26 : vector<1x4xf32> to vector<8x4xf32>
    %28 = arith.addf %24, %27 : vector<8x4xf32>
    %29 = arith.truncf %14 : vector<8x4xf32> to vector<8x4xbf16>
    %30 = arith.truncf %21 : vector<8x4xf32> to vector<8x4xbf16>
    %cst_24 = arith.constant dense<0.000000e+00> : vector<8x8xf32>
    %31 = tpu.matmul %29, %30, %cst_24 {dimension_numbers = #tpu.dot_dimension_numbers<[1], [1], [0], [0], [0, 0, 1, 0], [], []>} : vector<8x4xbf16>, vector<8x4xbf16>, vector<8x8xf32> -> vector<8x8xf32>
    %cst_25 = arith.constant dense<0xFF800000> : vector<8xf32>
    %32 = vector.multi_reduction <maximumf>, %31, %cst_25 [1] : vector<8x8xf32> to vector<8xf32>
    %33 = vector.shape_cast %32 : vector<8xf32> to vector<8x1xf32>
    %34 = vector.broadcast %33 : vector<8x1xf32> to vector<8x8xf32>
    %35 = arith.subf %31, %34 : vector<8x8xf32>
    %36 = math.exp %35 : vector<8x8xf32>
    %cst_26 = arith.constant dense<0.000000e+00> : vector<8xf32>
    %37 = vector.multi_reduction <add>, %36, %cst_26 [1] : vector<8x8xf32> to vector<8xf32>
    %38 = vector.shape_cast %37 : vector<8xf32> to vector<8x1xf32>
    %39 = tpu.reciprocal %38 {approx = true} : vector<8x1xf32> -> vector<8x1xf32>
    %40 = vector.broadcast %39 : vector<8x1xf32> to vector<8x8xf32>
    %41 = arith.mulf %36, %40 : vector<8x8xf32>
    %42 = arith.truncf %41 : vector<8x8xf32> to vector<8x8xbf16>
    %43 = arith.truncf %28 : vector<8x4xf32> to vector<8x4xbf16>
    %cst_27 = arith.constant dense<0.000000e+00> : vector<8x4xf32>
    %44 = tpu.matmul %42, %43, %cst_27 {dimension_numbers = #tpu.dot_dimension_numbers<[1], [0], [0], [1], [0, 0, 1, 1], [], []>} : vector<8x8xbf16>, vector<8x4xbf16>, vector<8x4xf32> -> vector<8x4xf32>
    %45 = arith.truncf %44 : vector<8x4xf32> to vector<8x4xbf16>
    %c0_28 = arith.constant 0 : index
    %c0_29 = arith.constant 0 : index
    %c0_30 = arith.constant 0 : index
    %46 = vector.load %arg6[%c0_28, %c0_29, %c0_30] : memref<8x4x16xbf16, #tpu.memory_space<vmem>>, vector<1x4x16xbf16>
    %47 = vector.shape_cast %46 : vector<1x4x16xbf16> to vector<4x16xbf16>
    %cst_31 = arith.constant dense<0.000000e+00> : vector<8x16xf32>
    %48 = tpu.matmul %45, %47, %cst_31 {dimension_numbers = #tpu.dot_dimension_numbers<[1], [0], [0], [1], [0, 0, 1, 1], [], []>} : vector<8x4xbf16>, vector<4x16xbf16>, vector<8x16xf32> -> vector<8x16xf32>
    %c1 = arith.constant 1 : index
    %c0_32 = arith.constant 0 : index
    %c0_33 = arith.constant 0 : index
    %49 = vector.load %arg4[%c1, %c0_32, %c0_33] : memref<24x16x4xbf16, #tpu.memory_space<vmem>>, vector<1x16x4xbf16>
    %50 = vector.shape_cast %49 : vector<1x16x4xbf16> to vector<16x4xbf16>
    %cst_34 = arith.constant dense<0.000000e+00> : vector<8x4xf32>
    %51 = tpu.matmul %7, %50, %cst_34 {dimension_numbers = #tpu.dot_dimension_numbers<[1], [0], [0], [1], [0, 0, 1, 1], [], []>} : vector<8x16xbf16>, vector<16x4xbf16>, vector<8x4xf32> -> vector<8x4xf32>
    %c1_35 = arith.constant 1 : index
    %c0_36 = arith.constant 0 : index
    %c0_37 = arith.constant 0 : index
    %52 = vector.load %arg5[%c1_35, %c0_36, %c0_37] : memref<24x1x4xf32, #tpu.memory_space<vmem>>, vector<1x1x4xf32>
    %53 = vector.shape_cast %52 : vector<1x1x4xf32> to vector<1x4xf32>
    %54 = vector.broadcast %53 : vector<1x4xf32> to vector<8x4xf32>
    %55 = arith.addf %51, %54 : vector<8x4xf32>
    %c5 = arith.constant 5 : index
    %c0_38 = arith.constant 0 : index
    %c0_39 = arith.constant 0 : index
    %56 = vector.load %arg4[%c5, %c0_38, %c0_39] : memref<24x16x4xbf16, #tpu.memory_space<vmem>>, vector<1x16x4xbf16>
    %57 = vector.shape_cast %56 : vector<1x16x4xbf16> to vector<16x4xbf16>
    %cst_40 = arith.constant dense<0.000000e+00> : vector<8x4xf32>
    %58 = tpu.matmul %7, %57, %cst_40 {dimension_numbers = #tpu.dot_dimension_numbers<[1], [0], [0], [1], [0, 0, 1, 1], [], []>} : vector<8x16xbf16>, vector<16x4xbf16>, vector<8x4xf32> -> vector<8x4xf32>
    %c5_41 = arith.constant 5 : index
    %c0_42 = arith.constant 0 : index
    %c0_43 = arith.constant 0 : index
    %59 = vector.load %arg5[%c5_41, %c0_42, %c0_43] : memref<24x1x4xf32, #tpu.memory_space<vmem>>, vector<1x1x4xf32>
    %60 = vector.shape_cast %59 : vector<1x1x4xf32> to vector<1x4xf32>
    %61 = vector.broadcast %60 : vector<1x4xf32> to vector<8x4xf32>
    %62 = arith.addf %58, %61 : vector<8x4xf32>
    %c9 = arith.constant 9 : index
    %c0_44 = arith.constant 0 : index
    %c0_45 = arith.constant 0 : index
    %63 = vector.load %arg4[%c9, %c0_44, %c0_45] : memref<24x16x4xbf16, #tpu.memory_space<vmem>>, vector<1x16x4xbf16>
    %64 = vector.shape_cast %63 : vector<1x16x4xbf16> to vector<16x4xbf16>
    %cst_46 = arith.constant dense<0.000000e+00> : vector<8x4xf32>
    %65 = tpu.matmul %7, %64, %cst_46 {dimension_numbers = #tpu.dot_dimension_numbers<[1], [0], [0], [1], [0, 0, 1, 1], [], []>} : vector<8x16xbf16>, vector<16x4xbf16>, vector<8x4xf32> -> vector<8x4xf32>
    %c9_47 = arith.constant 9 : index
    %c0_48 = arith.constant 0 : index
    %c0_49 = arith.constant 0 : index
    %66 = vector.load %arg5[%c9_47, %c0_48, %c0_49] : memref<24x1x4xf32, #tpu.memory_space<vmem>>, vector<1x1x4xf32>
    %67 = vector.shape_cast %66 : vector<1x1x4xf32> to vector<1x4xf32>
    %68 = vector.broadcast %67 : vector<1x4xf32> to vector<8x4xf32>
    %69 = arith.addf %65, %68 : vector<8x4xf32>
    %70 = arith.truncf %55 : vector<8x4xf32> to vector<8x4xbf16>
    %71 = arith.truncf %62 : vector<8x4xf32> to vector<8x4xbf16>
    %cst_50 = arith.constant dense<0.000000e+00> : vector<8x8xf32>
    %72 = tpu.matmul %70, %71, %cst_50 {dimension_numbers = #tpu.dot_dimension_numbers<[1], [1], [0], [0], [0, 0, 1, 0], [], []>} : vector<8x4xbf16>, vector<8x4xbf16>, vector<8x8xf32> -> vector<8x8xf32>
    %cst_51 = arith.constant dense<0xFF800000> : vector<8xf32>
    %73 = vector.multi_reduction <maximumf>, %72, %cst_51 [1] : vector<8x8xf32> to vector<8xf32>
    %74 = vector.shape_cast %73 : vector<8xf32> to vector<8x1xf32>
    %75 = vector.broadcast %74 : vector<8x1xf32> to vector<8x8xf32>
    %76 = arith.subf %72, %75 : vector<8x8xf32>
    %77 = math.exp %76 : vector<8x8xf32>
    %cst_52 = arith.constant dense<0.000000e+00> : vector<8xf32>
    %78 = vector.multi_reduction <add>, %77, %cst_52 [1] : vector<8x8xf32> to vector<8xf32>
    %79 = vector.shape_cast %78 : vector<8xf32> to vector<8x1xf32>
    %80 = tpu.reciprocal %79 {approx = true} : vector<8x1xf32> -> vector<8x1xf32>
    %81 = vector.broadcast %80 : vector<8x1xf32> to vector<8x8xf32>
    %82 = arith.mulf %77, %81 : vector<8x8xf32>
    %83 = arith.truncf %82 : vector<8x8xf32> to vector<8x8xbf16>
    %84 = arith.truncf %69 : vector<8x4xf32> to vector<8x4xbf16>
    %cst_53 = arith.constant dense<0.000000e+00> : vector<8x4xf32>
    %85 = tpu.matmul %83, %84, %cst_53 {dimension_numbers = #tpu.dot_dimension_numbers<[1], [0], [0], [1], [0, 0, 1, 1], [], []>} : vector<8x8xbf16>, vector<8x4xbf16>, vector<8x4xf32> -> vector<8x4xf32>
    %86 = arith.truncf %85 : vector<8x4xf32> to vector<8x4xbf16>
    %c1_54 = arith.constant 1 : index
    %c0_55 = arith.constant 0 : index
    %c0_56 = arith.constant 0 : index
    %87 = vector.load %arg6[%c1_54, %c0_55, %c0_56] : memref<8x4x16xbf16, #tpu.memory_space<vmem>>, vector<1x4x16xbf16>
    %88 = vector.shape_cast %87 : vector<1x4x16xbf16> to vector<4x16xbf16>
    %cst_57 = arith.constant dense<0.000000e+00> : vector<8x16xf32>
    %89 = tpu.matmul %86, %88, %cst_57 {dimension_numbers = #tpu.dot_dimension_numbers<[1], [0], [0], [1], [0, 0, 1, 1], [], []>} : vector<8x4xbf16>, vector<4x16xbf16>, vector<8x16xf32> -> vector<8x16xf32>
    %90 = arith.addf %48, %89 : vector<8x16xf32>
    %c2 = arith.constant 2 : index
    %c0_58 = arith.constant 0 : index
    %c0_59 = arith.constant 0 : index
    %91 = vector.load %arg4[%c2, %c0_58, %c0_59] : memref<24x16x4xbf16, #tpu.memory_space<vmem>>, vector<1x16x4xbf16>
    %92 = vector.shape_cast %91 : vector<1x16x4xbf16> to vector<16x4xbf16>
    %cst_60 = arith.constant dense<0.000000e+00> : vector<8x4xf32>
    %93 = tpu.matmul %7, %92, %cst_60 {dimension_numbers = #tpu.dot_dimension_numbers<[1], [0], [0], [1], [0, 0, 1, 1], [], []>} : vector<8x16xbf16>, vector<16x4xbf16>, vector<8x4xf32> -> vector<8x4xf32>
    %c2_61 = arith.constant 2 : index
    %c0_62 = arith.constant 0 : index
    %c0_63 = arith.constant 0 : index
    %94 = vector.load %arg5[%c2_61, %c0_62, %c0_63] : memref<24x1x4xf32, #tpu.memory_space<vmem>>, vector<1x1x4xf32>
    %95 = vector.shape_cast %94 : vector<1x1x4xf32> to vector<1x4xf32>
    %96 = vector.broadcast %95 : vector<1x4xf32> to vector<8x4xf32>
    %97 = arith.addf %93, %96 : vector<8x4xf32>
    %c6 = arith.constant 6 : index
    %c0_64 = arith.constant 0 : index
    %c0_65 = arith.constant 0 : index
    %98 = vector.load %arg4[%c6, %c0_64, %c0_65] : memref<24x16x4xbf16, #tpu.memory_space<vmem>>, vector<1x16x4xbf16>
    %99 = vector.shape_cast %98 : vector<1x16x4xbf16> to vector<16x4xbf16>
    %cst_66 = arith.constant dense<0.000000e+00> : vector<8x4xf32>
    %100 = tpu.matmul %7, %99, %cst_66 {dimension_numbers = #tpu.dot_dimension_numbers<[1], [0], [0], [1], [0, 0, 1, 1], [], []>} : vector<8x16xbf16>, vector<16x4xbf16>, vector<8x4xf32> -> vector<8x4xf32>
    %c6_67 = arith.constant 6 : index
    %c0_68 = arith.constant 0 : index
    %c0_69 = arith.constant 0 : index
    %101 = vector.load %arg5[%c6_67, %c0_68, %c0_69] : memref<24x1x4xf32, #tpu.memory_space<vmem>>, vector<1x1x4xf32>
    %102 = vector.shape_cast %101 : vector<1x1x4xf32> to vector<1x4xf32>
    %103 = vector.broadcast %102 : vector<1x4xf32> to vector<8x4xf32>
    %104 = arith.addf %100, %103 : vector<8x4xf32>
    %c10 = arith.constant 10 : index
    %c0_70 = arith.constant 0 : index
    %c0_71 = arith.constant 0 : index
    %105 = vector.load %arg4[%c10, %c0_70, %c0_71] : memref<24x16x4xbf16, #tpu.memory_space<vmem>>, vector<1x16x4xbf16>
    %106 = vector.shape_cast %105 : vector<1x16x4xbf16> to vector<16x4xbf16>
    %cst_72 = arith.constant dense<0.000000e+00> : vector<8x4xf32>
    %107 = tpu.matmul %7, %106, %cst_72 {dimension_numbers = #tpu.dot_dimension_numbers<[1], [0], [0], [1], [0, 0, 1, 1], [], []>} : vector<8x16xbf16>, vector<16x4xbf16>, vector<8x4xf32> -> vector<8x4xf32>
    %c10_73 = arith.constant 10 : index
    %c0_74 = arith.constant 0 : index
    %c0_75 = arith.constant 0 : index
    %108 = vector.load %arg5[%c10_73, %c0_74, %c0_75] : memref<24x1x4xf32, #tpu.memory_space<vmem>>, vector<1x1x4xf32>
    %109 = vector.shape_cast %108 : vector<1x1x4xf32> to vector<1x4xf32>
    %110 = vector.broadcast %109 : vector<1x4xf32> to vector<8x4xf32>
    %111 = arith.addf %107, %110 : vector<8x4xf32>
    %112 = arith.truncf %97 : vector<8x4xf32> to vector<8x4xbf16>
    %113 = arith.truncf %104 : vector<8x4xf32> to vector<8x4xbf16>
    %cst_76 = arith.constant dense<0.000000e+00> : vector<8x8xf32>
    %114 = tpu.matmul %112, %113, %cst_76 {dimension_numbers = #tpu.dot_dimension_numbers<[1], [1], [0], [0], [0, 0, 1, 0], [], []>} : vector<8x4xbf16>, vector<8x4xbf16>, vector<8x8xf32> -> vector<8x8xf32>
    %cst_77 = arith.constant dense<0xFF800000> : vector<8xf32>
    %115 = vector.multi_reduction <maximumf>, %114, %cst_77 [1] : vector<8x8xf32> to vector<8xf32>
    %116 = vector.shape_cast %115 : vector<8xf32> to vector<8x1xf32>
    %117 = vector.broadcast %116 : vector<8x1xf32> to vector<8x8xf32>
    %118 = arith.subf %114, %117 : vector<8x8xf32>
    %119 = math.exp %118 : vector<8x8xf32>
    %cst_78 = arith.constant dense<0.000000e+00> : vector<8xf32>
    %120 = vector.multi_reduction <add>, %119, %cst_78 [1] : vector<8x8xf32> to vector<8xf32>
    %121 = vector.shape_cast %120 : vector<8xf32> to vector<8x1xf32>
    %122 = tpu.reciprocal %121 {approx = true} : vector<8x1xf32> -> vector<8x1xf32>
    %123 = vector.broadcast %122 : vector<8x1xf32> to vector<8x8xf32>
    %124 = arith.mulf %119, %123 : vector<8x8xf32>
    %125 = arith.truncf %124 : vector<8x8xf32> to vector<8x8xbf16>
    %126 = arith.truncf %111 : vector<8x4xf32> to vector<8x4xbf16>
    %cst_79 = arith.constant dense<0.000000e+00> : vector<8x4xf32>
    %127 = tpu.matmul %125, %126, %cst_79 {dimension_numbers = #tpu.dot_dimension_numbers<[1], [0], [0], [1], [0, 0, 1, 1], [], []>} : vector<8x8xbf16>, vector<8x4xbf16>, vector<8x4xf32> -> vector<8x4xf32>
    %128 = arith.truncf %127 : vector<8x4xf32> to vector<8x4xbf16>
    %c2_80 = arith.constant 2 : index
    %c0_81 = arith.constant 0 : index
    %c0_82 = arith.constant 0 : index
    %129 = vector.load %arg6[%c2_80, %c0_81, %c0_82] : memref<8x4x16xbf16, #tpu.memory_space<vmem>>, vector<1x4x16xbf16>
    %130 = vector.shape_cast %129 : vector<1x4x16xbf16> to vector<4x16xbf16>
    %cst_83 = arith.constant dense<0.000000e+00> : vector<8x16xf32>
    %131 = tpu.matmul %128, %130, %cst_83 {dimension_numbers = #tpu.dot_dimension_numbers<[1], [0], [0], [1], [0, 0, 1, 1], [], []>} : vector<8x4xbf16>, vector<4x16xbf16>, vector<8x16xf32> -> vector<8x16xf32>
    %132 = arith.addf %90, %131 : vector<8x16xf32>
    %c3 = arith.constant 3 : index
    %c0_84 = arith.constant 0 : index
    %c0_85 = arith.constant 0 : index
    %133 = vector.load %arg4[%c3, %c0_84, %c0_85] : memref<24x16x4xbf16, #tpu.memory_space<vmem>>, vector<1x16x4xbf16>
    %134 = vector.shape_cast %133 : vector<1x16x4xbf16> to vector<16x4xbf16>
    %cst_86 = arith.constant dense<0.000000e+00> : vector<8x4xf32>
    %135 = tpu.matmul %7, %134, %cst_86 {dimension_numbers = #tpu.dot_dimension_numbers<[1], [0], [0], [1], [0, 0, 1, 1], [], []>} : vector<8x16xbf16>, vector<16x4xbf16>, vector<8x4xf32> -> vector<8x4xf32>
    %c3_87 = arith.constant 3 : index
    %c0_88 = arith.constant 0 : index
    %c0_89 = arith.constant 0 : index
    %136 = vector.load %arg5[%c3_87, %c0_88, %c0_89] : memref<24x1x4xf32, #tpu.memory_space<vmem>>, vector<1x1x4xf32>
    %137 = vector.shape_cast %136 : vector<1x1x4xf32> to vector<1x4xf32>
    %138 = vector.broadcast %137 : vector<1x4xf32> to vector<8x4xf32>
    %139 = arith.addf %135, %138 : vector<8x4xf32>
    %c7 = arith.constant 7 : index
    %c0_90 = arith.constant 0 : index
    %c0_91 = arith.constant 0 : index
    %140 = vector.load %arg4[%c7, %c0_90, %c0_91] : memref<24x16x4xbf16, #tpu.memory_space<vmem>>, vector<1x16x4xbf16>
    %141 = vector.shape_cast %140 : vector<1x16x4xbf16> to vector<16x4xbf16>
    %cst_92 = arith.constant dense<0.000000e+00> : vector<8x4xf32>
    %142 = tpu.matmul %7, %141, %cst_92 {dimension_numbers = #tpu.dot_dimension_numbers<[1], [0], [0], [1], [0, 0, 1, 1], [], []>} : vector<8x16xbf16>, vector<16x4xbf16>, vector<8x4xf32> -> vector<8x4xf32>
    %c7_93 = arith.constant 7 : index
    %c0_94 = arith.constant 0 : index
    %c0_95 = arith.constant 0 : index
    %143 = vector.load %arg5[%c7_93, %c0_94, %c0_95] : memref<24x1x4xf32, #tpu.memory_space<vmem>>, vector<1x1x4xf32>
    %144 = vector.shape_cast %143 : vector<1x1x4xf32> to vector<1x4xf32>
    %145 = vector.broadcast %144 : vector<1x4xf32> to vector<8x4xf32>
    %146 = arith.addf %142, %145 : vector<8x4xf32>
    %c11 = arith.constant 11 : index
    %c0_96 = arith.constant 0 : index
    %c0_97 = arith.constant 0 : index
    %147 = vector.load %arg4[%c11, %c0_96, %c0_97] : memref<24x16x4xbf16, #tpu.memory_space<vmem>>, vector<1x16x4xbf16>
    %148 = vector.shape_cast %147 : vector<1x16x4xbf16> to vector<16x4xbf16>
    %cst_98 = arith.constant dense<0.000000e+00> : vector<8x4xf32>
    %149 = tpu.matmul %7, %148, %cst_98 {dimension_numbers = #tpu.dot_dimension_numbers<[1], [0], [0], [1], [0, 0, 1, 1], [], []>} : vector<8x16xbf16>, vector<16x4xbf16>, vector<8x4xf32> -> vector<8x4xf32>
    %c11_99 = arith.constant 11 : index
    %c0_100 = arith.constant 0 : index
    %c0_101 = arith.constant 0 : index
    %150 = vector.load %arg5[%c11_99, %c0_100, %c0_101] : memref<24x1x4xf32, #tpu.memory_space<vmem>>, vector<1x1x4xf32>
    %151 = vector.shape_cast %150 : vector<1x1x4xf32> to vector<1x4xf32>
    %152 = vector.broadcast %151 : vector<1x4xf32> to vector<8x4xf32>
    %153 = arith.addf %149, %152 : vector<8x4xf32>
    %154 = arith.truncf %139 : vector<8x4xf32> to vector<8x4xbf16>
    %155 = arith.truncf %146 : vector<8x4xf32> to vector<8x4xbf16>
    %cst_102 = arith.constant dense<0.000000e+00> : vector<8x8xf32>
    %156 = tpu.matmul %154, %155, %cst_102 {dimension_numbers = #tpu.dot_dimension_numbers<[1], [1], [0], [0], [0, 0, 1, 0], [], []>} : vector<8x4xbf16>, vector<8x4xbf16>, vector<8x8xf32> -> vector<8x8xf32>
    %cst_103 = arith.constant dense<0xFF800000> : vector<8xf32>
    %157 = vector.multi_reduction <maximumf>, %156, %cst_103 [1] : vector<8x8xf32> to vector<8xf32>
    %158 = vector.shape_cast %157 : vector<8xf32> to vector<8x1xf32>
    %159 = vector.broadcast %158 : vector<8x1xf32> to vector<8x8xf32>
    %160 = arith.subf %156, %159 : vector<8x8xf32>
    %161 = math.exp %160 : vector<8x8xf32>
    %cst_104 = arith.constant dense<0.000000e+00> : vector<8xf32>
    %162 = vector.multi_reduction <add>, %161, %cst_104 [1] : vector<8x8xf32> to vector<8xf32>
    %163 = vector.shape_cast %162 : vector<8xf32> to vector<8x1xf32>
    %164 = tpu.reciprocal %163 {approx = true} : vector<8x1xf32> -> vector<8x1xf32>
    %165 = vector.broadcast %164 : vector<8x1xf32> to vector<8x8xf32>
    %166 = arith.mulf %161, %165 : vector<8x8xf32>
    %167 = arith.truncf %166 : vector<8x8xf32> to vector<8x8xbf16>
    %168 = arith.truncf %153 : vector<8x4xf32> to vector<8x4xbf16>
    %cst_105 = arith.constant dense<0.000000e+00> : vector<8x4xf32>
    %169 = tpu.matmul %167, %168, %cst_105 {dimension_numbers = #tpu.dot_dimension_numbers<[1], [0], [0], [1], [0, 0, 1, 1], [], []>} : vector<8x8xbf16>, vector<8x4xbf16>, vector<8x4xf32> -> vector<8x4xf32>
    %170 = arith.truncf %169 : vector<8x4xf32> to vector<8x4xbf16>
    %c3_106 = arith.constant 3 : index
    %c0_107 = arith.constant 0 : index
    %c0_108 = arith.constant 0 : index
    %171 = vector.load %arg6[%c3_106, %c0_107, %c0_108] : memref<8x4x16xbf16, #tpu.memory_space<vmem>>, vector<1x4x16xbf16>
    %172 = vector.shape_cast %171 : vector<1x4x16xbf16> to vector<4x16xbf16>
    %cst_109 = arith.constant dense<0.000000e+00> : vector<8x16xf32>
    %173 = tpu.matmul %170, %172, %cst_109 {dimension_numbers = #tpu.dot_dimension_numbers<[1], [0], [0], [1], [0, 0, 1, 1], [], []>} : vector<8x4xbf16>, vector<4x16xbf16>, vector<8x16xf32> -> vector<8x16xf32>
    %174 = arith.addf %132, %173 : vector<8x16xf32>
    %c0_110 = arith.constant 0 : index
    %c0_111 = arith.constant 0 : index
    %c0_112 = arith.constant 0 : index
    %175 = vector.load %arg10[%c0_110, %c0_111, %c0_112] : memref<12x1x16xf32, #tpu.memory_space<vmem>>, vector<1x1x16xf32>
    %176 = vector.shape_cast %175 : vector<1x1x16xf32> to vector<1x16xf32>
    %177 = vector.broadcast %176 : vector<1x16xf32> to vector<8x16xf32>
    %178 = arith.addf %174, %177 : vector<8x16xf32>
    %179 = arith.addf %178, %6 : vector<8x16xf32>
    %c1_113 = arith.constant 1 : index
    %c0_114 = arith.constant 0 : index
    %c0_115 = arith.constant 0 : index
    %180 = vector.load %arg10[%c1_113, %c0_114, %c0_115] : memref<12x1x16xf32, #tpu.memory_space<vmem>>, vector<1x1x16xf32>
    %181 = vector.shape_cast %180 : vector<1x1x16xf32> to vector<1x16xf32>
    %c2_116 = arith.constant 2 : index
    %c0_117 = arith.constant 0 : index
    %c0_118 = arith.constant 0 : index
    %182 = vector.load %arg10[%c2_116, %c0_117, %c0_118] : memref<12x1x16xf32, #tpu.memory_space<vmem>>, vector<1x1x16xf32>
    %183 = vector.shape_cast %182 : vector<1x1x16xf32> to vector<1x16xf32>
    %cst_119 = arith.constant dense<0.000000e+00> : vector<8xf32>
    %184 = vector.multi_reduction <add>, %179, %cst_119 [1] : vector<8x16xf32> to vector<8xf32>
    %185 = vector.shape_cast %184 : vector<8xf32> to vector<8x1xf32>
    %cst_120 = arith.constant 1.600000e+01 : f32
    %186 = vector.broadcast %cst_120 : f32 to vector<8x1xf32>
    %187 = arith.divf %185, %186 : vector<8x1xf32>
    %188 = vector.broadcast %187 : vector<8x1xf32> to vector<8x16xf32>
    %189 = arith.subf %179, %188 : vector<8x16xf32>
    %190 = arith.mulf %189, %189 : vector<8x16xf32>
    %cst_121 = arith.constant dense<0.000000e+00> : vector<8xf32>
    %191 = vector.multi_reduction <add>, %190, %cst_121 [1] : vector<8x16xf32> to vector<8xf32>
    %192 = vector.shape_cast %191 : vector<8xf32> to vector<8x1xf32>
    %cst_122 = arith.constant 1.600000e+01 : f32
    %193 = vector.broadcast %cst_122 : f32 to vector<8x1xf32>
    %194 = arith.divf %192, %193 : vector<8x1xf32>
    %195 = vector.broadcast %187 : vector<8x1xf32> to vector<8x16xf32>
    %196 = arith.subf %179, %195 : vector<8x16xf32>
    %cst_123 = arith.constant 9.99999996E-13 : f32
    %197 = vector.broadcast %cst_123 : f32 to vector<8x1xf32>
    %198 = arith.addf %194, %197 : vector<8x1xf32>
    %199 = math.rsqrt %198 : vector<8x1xf32>
    %200 = vector.broadcast %199 : vector<8x1xf32> to vector<8x16xf32>
    %201 = arith.mulf %196, %200 : vector<8x16xf32>
    %202 = vector.broadcast %181 : vector<1x16xf32> to vector<8x16xf32>
    %203 = arith.mulf %201, %202 : vector<8x16xf32>
    %204 = vector.broadcast %183 : vector<1x16xf32> to vector<8x16xf32>
    %205 = arith.addf %203, %204 : vector<8x16xf32>
    %206 = arith.truncf %205 : vector<8x16xf32> to vector<8x16xbf16>
    %c0_124 = arith.constant 0 : index
    %c0_125 = arith.constant 0 : index
    %c0_126 = arith.constant 0 : index
    %207 = vector.load %arg7[%c0_124, %c0_125, %c0_126] : memref<2x16x64xbf16, #tpu.memory_space<vmem>>, vector<1x16x64xbf16>
    %208 = vector.shape_cast %207 : vector<1x16x64xbf16> to vector<16x64xbf16>
    %cst_127 = arith.constant dense<0.000000e+00> : vector<8x64xf32>
    %209 = tpu.matmul %206, %208, %cst_127 {dimension_numbers = #tpu.dot_dimension_numbers<[1], [0], [0], [1], [0, 0, 1, 1], [], []>} : vector<8x16xbf16>, vector<16x64xbf16>, vector<8x64xf32> -> vector<8x64xf32>
    %c0_128 = arith.constant 0 : index
    %c0_129 = arith.constant 0 : index
    %c0_130 = arith.constant 0 : index
    %210 = vector.load %arg8[%c0_128, %c0_129, %c0_130] : memref<2x1x64xf32, #tpu.memory_space<vmem>>, vector<1x1x64xf32>
    %211 = vector.shape_cast %210 : vector<1x1x64xf32> to vector<1x64xf32>
    %212 = vector.broadcast %211 : vector<1x64xf32> to vector<8x64xf32>
    %213 = arith.addf %209, %212 : vector<8x64xf32>
    %cst_131 = arith.constant 5.000000e-01 : f32
    %214 = vector.broadcast %cst_131 : f32 to vector<8x64xf32>
    %215 = arith.mulf %214, %213 : vector<8x64xf32>
    %cst_132 = arith.constant 4.471500e-02 : f32
    %216 = vector.broadcast %cst_132 : f32 to vector<8x64xf32>
    %217 = arith.mulf %216, %213 : vector<8x64xf32>
    %218 = arith.mulf %217, %213 : vector<8x64xf32>
    %219 = arith.mulf %218, %213 : vector<8x64xf32>
    %220 = arith.addf %213, %219 : vector<8x64xf32>
    %cst_133 = arith.constant 0.797884583 : f32
    %221 = vector.broadcast %cst_133 : f32 to vector<8x64xf32>
    %222 = arith.mulf %221, %220 : vector<8x64xf32>
    %223 = math.tanh %222 : vector<8x64xf32>
    %cst_134 = arith.constant 1.000000e+00 : f32
    %224 = vector.broadcast %cst_134 : f32 to vector<8x64xf32>
    %225 = arith.addf %224, %223 : vector<8x64xf32>
    %226 = arith.mulf %215, %225 : vector<8x64xf32>
    %227 = arith.truncf %226 : vector<8x64xf32> to vector<8x64xbf16>
    %c0_135 = arith.constant 0 : index
    %c0_136 = arith.constant 0 : index
    %c0_137 = arith.constant 0 : index
    %228 = vector.load %arg9[%c0_135, %c0_136, %c0_137] : memref<2x64x16xbf16, #tpu.memory_space<vmem>>, vector<1x64x16xbf16>
    %229 = vector.shape_cast %228 : vector<1x64x16xbf16> to vector<64x16xbf16>
    %cst_138 = arith.constant dense<0.000000e+00> : vector<8x16xf32>
    %230 = tpu.matmul %227, %229, %cst_138 {dimension_numbers = #tpu.dot_dimension_numbers<[1], [0], [0], [1], [0, 0, 1, 1], [], []>} : vector<8x64xbf16>, vector<64x16xbf16>, vector<8x16xf32> -> vector<8x16xf32>
    %c3_139 = arith.constant 3 : index
    %c0_140 = arith.constant 0 : index
    %c0_141 = arith.constant 0 : index
    %231 = vector.load %arg10[%c3_139, %c0_140, %c0_141] : memref<12x1x16xf32, #tpu.memory_space<vmem>>, vector<1x1x16xf32>
    %232 = vector.shape_cast %231 : vector<1x1x16xf32> to vector<1x16xf32>
    %233 = vector.broadcast %232 : vector<1x16xf32> to vector<8x16xf32>
    %234 = arith.addf %230, %233 : vector<8x16xf32>
    %235 = arith.addf %234, %205 : vector<8x16xf32>
    %c4_142 = arith.constant 4 : index
    %c0_143 = arith.constant 0 : index
    %c0_144 = arith.constant 0 : index
    %236 = vector.load %arg10[%c4_142, %c0_143, %c0_144] : memref<12x1x16xf32, #tpu.memory_space<vmem>>, vector<1x1x16xf32>
    %237 = vector.shape_cast %236 : vector<1x1x16xf32> to vector<1x16xf32>
    %c5_145 = arith.constant 5 : index
    %c0_146 = arith.constant 0 : index
    %c0_147 = arith.constant 0 : index
    %238 = vector.load %arg10[%c5_145, %c0_146, %c0_147] : memref<12x1x16xf32, #tpu.memory_space<vmem>>, vector<1x1x16xf32>
    %239 = vector.shape_cast %238 : vector<1x1x16xf32> to vector<1x16xf32>
    %cst_148 = arith.constant dense<0.000000e+00> : vector<8xf32>
    %240 = vector.multi_reduction <add>, %235, %cst_148 [1] : vector<8x16xf32> to vector<8xf32>
    %241 = vector.shape_cast %240 : vector<8xf32> to vector<8x1xf32>
    %cst_149 = arith.constant 1.600000e+01 : f32
    %242 = vector.broadcast %cst_149 : f32 to vector<8x1xf32>
    %243 = arith.divf %241, %242 : vector<8x1xf32>
    %244 = vector.broadcast %243 : vector<8x1xf32> to vector<8x16xf32>
    %245 = arith.subf %235, %244 : vector<8x16xf32>
    %246 = arith.mulf %245, %245 : vector<8x16xf32>
    %cst_150 = arith.constant dense<0.000000e+00> : vector<8xf32>
    %247 = vector.multi_reduction <add>, %246, %cst_150 [1] : vector<8x16xf32> to vector<8xf32>
    %248 = vector.shape_cast %247 : vector<8xf32> to vector<8x1xf32>
    %cst_151 = arith.constant 1.600000e+01 : f32
    %249 = vector.broadcast %cst_151 : f32 to vector<8x1xf32>
    %250 = arith.divf %248, %249 : vector<8x1xf32>
    %251 = vector.broadcast %243 : vector<8x1xf32> to vector<8x16xf32>
    %252 = arith.subf %235, %251 : vector<8x16xf32>
    %cst_152 = arith.constant 9.99999996E-13 : f32
    %253 = vector.broadcast %cst_152 : f32 to vector<8x1xf32>
    %254 = arith.addf %250, %253 : vector<8x1xf32>
    %255 = math.rsqrt %254 : vector<8x1xf32>
    %256 = vector.broadcast %255 : vector<8x1xf32> to vector<8x16xf32>
    %257 = arith.mulf %252, %256 : vector<8x16xf32>
    %258 = vector.broadcast %237 : vector<1x16xf32> to vector<8x16xf32>
    %259 = arith.mulf %257, %258 : vector<8x16xf32>
    %260 = vector.broadcast %239 : vector<1x16xf32> to vector<8x16xf32>
    %261 = arith.addf %259, %260 : vector<8x16xf32>
    %262 = arith.truncf %261 : vector<8x16xf32> to vector<8x16xbf16>
    %c12 = arith.constant 12 : index
    %c0_153 = arith.constant 0 : index
    %c0_154 = arith.constant 0 : index
    %263 = vector.load %arg4[%c12, %c0_153, %c0_154] : memref<24x16x4xbf16, #tpu.memory_space<vmem>>, vector<1x16x4xbf16>
    %264 = vector.shape_cast %263 : vector<1x16x4xbf16> to vector<16x4xbf16>
    %cst_155 = arith.constant dense<0.000000e+00> : vector<8x4xf32>
    %265 = tpu.matmul %262, %264, %cst_155 {dimension_numbers = #tpu.dot_dimension_numbers<[1], [0], [0], [1], [0, 0, 1, 1], [], []>} : vector<8x16xbf16>, vector<16x4xbf16>, vector<8x4xf32> -> vector<8x4xf32>
    %c12_156 = arith.constant 12 : index
    %c0_157 = arith.constant 0 : index
    %c0_158 = arith.constant 0 : index
    %266 = vector.load %arg5[%c12_156, %c0_157, %c0_158] : memref<24x1x4xf32, #tpu.memory_space<vmem>>, vector<1x1x4xf32>
    %267 = vector.shape_cast %266 : vector<1x1x4xf32> to vector<1x4xf32>
    %268 = vector.broadcast %267 : vector<1x4xf32> to vector<8x4xf32>
    %269 = arith.addf %265, %268 : vector<8x4xf32>
    %c16 = arith.constant 16 : index
    %c0_159 = arith.constant 0 : index
    %c0_160 = arith.constant 0 : index
    %270 = vector.load %arg4[%c16, %c0_159, %c0_160] : memref<24x16x4xbf16, #tpu.memory_space<vmem>>, vector<1x16x4xbf16>
    %271 = vector.shape_cast %270 : vector<1x16x4xbf16> to vector<16x4xbf16>
    %cst_161 = arith.constant dense<0.000000e+00> : vector<8x4xf32>
    %272 = tpu.matmul %262, %271, %cst_161 {dimension_numbers = #tpu.dot_dimension_numbers<[1], [0], [0], [1], [0, 0, 1, 1], [], []>} : vector<8x16xbf16>, vector<16x4xbf16>, vector<8x4xf32> -> vector<8x4xf32>
    %c16_162 = arith.constant 16 : index
    %c0_163 = arith.constant 0 : index
    %c0_164 = arith.constant 0 : index
    %273 = vector.load %arg5[%c16_162, %c0_163, %c0_164] : memref<24x1x4xf32, #tpu.memory_space<vmem>>, vector<1x1x4xf32>
    %274 = vector.shape_cast %273 : vector<1x1x4xf32> to vector<1x4xf32>
    %275 = vector.broadcast %274 : vector<1x4xf32> to vector<8x4xf32>
    %276 = arith.addf %272, %275 : vector<8x4xf32>
    %c20 = arith.constant 20 : index
    %c0_165 = arith.constant 0 : index
    %c0_166 = arith.constant 0 : index
    %277 = vector.load %arg4[%c20, %c0_165, %c0_166] : memref<24x16x4xbf16, #tpu.memory_space<vmem>>, vector<1x16x4xbf16>
    %278 = vector.shape_cast %277 : vector<1x16x4xbf16> to vector<16x4xbf16>
    %cst_167 = arith.constant dense<0.000000e+00> : vector<8x4xf32>
    %279 = tpu.matmul %262, %278, %cst_167 {dimension_numbers = #tpu.dot_dimension_numbers<[1], [0], [0], [1], [0, 0, 1, 1], [], []>} : vector<8x16xbf16>, vector<16x4xbf16>, vector<8x4xf32> -> vector<8x4xf32>
    %c20_168 = arith.constant 20 : index
    %c0_169 = arith.constant 0 : index
    %c0_170 = arith.constant 0 : index
    %280 = vector.load %arg5[%c20_168, %c0_169, %c0_170] : memref<24x1x4xf32, #tpu.memory_space<vmem>>, vector<1x1x4xf32>
    %281 = vector.shape_cast %280 : vector<1x1x4xf32> to vector<1x4xf32>
    %282 = vector.broadcast %281 : vector<1x4xf32> to vector<8x4xf32>
    %283 = arith.addf %279, %282 : vector<8x4xf32>
    %284 = arith.truncf %269 : vector<8x4xf32> to vector<8x4xbf16>
    %285 = arith.truncf %276 : vector<8x4xf32> to vector<8x4xbf16>
    %cst_171 = arith.constant dense<0.000000e+00> : vector<8x8xf32>
    %286 = tpu.matmul %284, %285, %cst_171 {dimension_numbers = #tpu.dot_dimension_numbers<[1], [1], [0], [0], [0, 0, 1, 0], [], []>} : vector<8x4xbf16>, vector<8x4xbf16>, vector<8x8xf32> -> vector<8x8xf32>
    %cst_172 = arith.constant dense<0xFF800000> : vector<8xf32>
    %287 = vector.multi_reduction <maximumf>, %286, %cst_172 [1] : vector<8x8xf32> to vector<8xf32>
    %288 = vector.shape_cast %287 : vector<8xf32> to vector<8x1xf32>
    %289 = vector.broadcast %288 : vector<8x1xf32> to vector<8x8xf32>
    %290 = arith.subf %286, %289 : vector<8x8xf32>
    %291 = math.exp %290 : vector<8x8xf32>
    %cst_173 = arith.constant dense<0.000000e+00> : vector<8xf32>
    %292 = vector.multi_reduction <add>, %291, %cst_173 [1] : vector<8x8xf32> to vector<8xf32>
    %293 = vector.shape_cast %292 : vector<8xf32> to vector<8x1xf32>
    %294 = tpu.reciprocal %293 {approx = true} : vector<8x1xf32> -> vector<8x1xf32>
    %295 = vector.broadcast %294 : vector<8x1xf32> to vector<8x8xf32>
    %296 = arith.mulf %291, %295 : vector<8x8xf32>
    %297 = arith.truncf %296 : vector<8x8xf32> to vector<8x8xbf16>
    %298 = arith.truncf %283 : vector<8x4xf32> to vector<8x4xbf16>
    %cst_174 = arith.constant dense<0.000000e+00> : vector<8x4xf32>
    %299 = tpu.matmul %297, %298, %cst_174 {dimension_numbers = #tpu.dot_dimension_numbers<[1], [0], [0], [1], [0, 0, 1, 1], [], []>} : vector<8x8xbf16>, vector<8x4xbf16>, vector<8x4xf32> -> vector<8x4xf32>
    %300 = arith.truncf %299 : vector<8x4xf32> to vector<8x4xbf16>
    %c4_175 = arith.constant 4 : index
    %c0_176 = arith.constant 0 : index
    %c0_177 = arith.constant 0 : index
    %301 = vector.load %arg6[%c4_175, %c0_176, %c0_177] : memref<8x4x16xbf16, #tpu.memory_space<vmem>>, vector<1x4x16xbf16>
    %302 = vector.shape_cast %301 : vector<1x4x16xbf16> to vector<4x16xbf16>
    %cst_178 = arith.constant dense<0.000000e+00> : vector<8x16xf32>
    %303 = tpu.matmul %300, %302, %cst_178 {dimension_numbers = #tpu.dot_dimension_numbers<[1], [0], [0], [1], [0, 0, 1, 1], [], []>} : vector<8x4xbf16>, vector<4x16xbf16>, vector<8x16xf32> -> vector<8x16xf32>
    %c13 = arith.constant 13 : index
    %c0_179 = arith.constant 0 : index
    %c0_180 = arith.constant 0 : index
    %304 = vector.load %arg4[%c13, %c0_179, %c0_180] : memref<24x16x4xbf16, #tpu.memory_space<vmem>>, vector<1x16x4xbf16>
    %305 = vector.shape_cast %304 : vector<1x16x4xbf16> to vector<16x4xbf16>
    %cst_181 = arith.constant dense<0.000000e+00> : vector<8x4xf32>
    %306 = tpu.matmul %262, %305, %cst_181 {dimension_numbers = #tpu.dot_dimension_numbers<[1], [0], [0], [1], [0, 0, 1, 1], [], []>} : vector<8x16xbf16>, vector<16x4xbf16>, vector<8x4xf32> -> vector<8x4xf32>
    %c13_182 = arith.constant 13 : index
    %c0_183 = arith.constant 0 : index
    %c0_184 = arith.constant 0 : index
    %307 = vector.load %arg5[%c13_182, %c0_183, %c0_184] : memref<24x1x4xf32, #tpu.memory_space<vmem>>, vector<1x1x4xf32>
    %308 = vector.shape_cast %307 : vector<1x1x4xf32> to vector<1x4xf32>
    %309 = vector.broadcast %308 : vector<1x4xf32> to vector<8x4xf32>
    %310 = arith.addf %306, %309 : vector<8x4xf32>
    %c17 = arith.constant 17 : index
    %c0_185 = arith.constant 0 : index
    %c0_186 = arith.constant 0 : index
    %311 = vector.load %arg4[%c17, %c0_185, %c0_186] : memref<24x16x4xbf16, #tpu.memory_space<vmem>>, vector<1x16x4xbf16>
    %312 = vector.shape_cast %311 : vector<1x16x4xbf16> to vector<16x4xbf16>
    %cst_187 = arith.constant dense<0.000000e+00> : vector<8x4xf32>
    %313 = tpu.matmul %262, %312, %cst_187 {dimension_numbers = #tpu.dot_dimension_numbers<[1], [0], [0], [1], [0, 0, 1, 1], [], []>} : vector<8x16xbf16>, vector<16x4xbf16>, vector<8x4xf32> -> vector<8x4xf32>
    %c17_188 = arith.constant 17 : index
    %c0_189 = arith.constant 0 : index
    %c0_190 = arith.constant 0 : index
    %314 = vector.load %arg5[%c17_188, %c0_189, %c0_190] : memref<24x1x4xf32, #tpu.memory_space<vmem>>, vector<1x1x4xf32>
    %315 = vector.shape_cast %314 : vector<1x1x4xf32> to vector<1x4xf32>
    %316 = vector.broadcast %315 : vector<1x4xf32> to vector<8x4xf32>
    %317 = arith.addf %313, %316 : vector<8x4xf32>
    %c21 = arith.constant 21 : index
    %c0_191 = arith.constant 0 : index
    %c0_192 = arith.constant 0 : index
    %318 = vector.load %arg4[%c21, %c0_191, %c0_192] : memref<24x16x4xbf16, #tpu.memory_space<vmem>>, vector<1x16x4xbf16>
    %319 = vector.shape_cast %318 : vector<1x16x4xbf16> to vector<16x4xbf16>
    %cst_193 = arith.constant dense<0.000000e+00> : vector<8x4xf32>
    %320 = tpu.matmul %262, %319, %cst_193 {dimension_numbers = #tpu.dot_dimension_numbers<[1], [0], [0], [1], [0, 0, 1, 1], [], []>} : vector<8x16xbf16>, vector<16x4xbf16>, vector<8x4xf32> -> vector<8x4xf32>
    %c21_194 = arith.constant 21 : index
    %c0_195 = arith.constant 0 : index
    %c0_196 = arith.constant 0 : index
    %321 = vector.load %arg5[%c21_194, %c0_195, %c0_196] : memref<24x1x4xf32, #tpu.memory_space<vmem>>, vector<1x1x4xf32>
    %322 = vector.shape_cast %321 : vector<1x1x4xf32> to vector<1x4xf32>
    %323 = vector.broadcast %322 : vector<1x4xf32> to vector<8x4xf32>
    %324 = arith.addf %320, %323 : vector<8x4xf32>
    %325 = arith.truncf %310 : vector<8x4xf32> to vector<8x4xbf16>
    %326 = arith.truncf %317 : vector<8x4xf32> to vector<8x4xbf16>
    %cst_197 = arith.constant dense<0.000000e+00> : vector<8x8xf32>
    %327 = tpu.matmul %325, %326, %cst_197 {dimension_numbers = #tpu.dot_dimension_numbers<[1], [1], [0], [0], [0, 0, 1, 0], [], []>} : vector<8x4xbf16>, vector<8x4xbf16>, vector<8x8xf32> -> vector<8x8xf32>
    %cst_198 = arith.constant dense<0xFF800000> : vector<8xf32>
    %328 = vector.multi_reduction <maximumf>, %327, %cst_198 [1] : vector<8x8xf32> to vector<8xf32>
    %329 = vector.shape_cast %328 : vector<8xf32> to vector<8x1xf32>
    %330 = vector.broadcast %329 : vector<8x1xf32> to vector<8x8xf32>
    %331 = arith.subf %327, %330 : vector<8x8xf32>
    %332 = math.exp %331 : vector<8x8xf32>
    %cst_199 = arith.constant dense<0.000000e+00> : vector<8xf32>
    %333 = vector.multi_reduction <add>, %332, %cst_199 [1] : vector<8x8xf32> to vector<8xf32>
    %334 = vector.shape_cast %333 : vector<8xf32> to vector<8x1xf32>
    %335 = tpu.reciprocal %334 {approx = true} : vector<8x1xf32> -> vector<8x1xf32>
    %336 = vector.broadcast %335 : vector<8x1xf32> to vector<8x8xf32>
    %337 = arith.mulf %332, %336 : vector<8x8xf32>
    %338 = arith.truncf %337 : vector<8x8xf32> to vector<8x8xbf16>
    %339 = arith.truncf %324 : vector<8x4xf32> to vector<8x4xbf16>
    %cst_200 = arith.constant dense<0.000000e+00> : vector<8x4xf32>
    %340 = tpu.matmul %338, %339, %cst_200 {dimension_numbers = #tpu.dot_dimension_numbers<[1], [0], [0], [1], [0, 0, 1, 1], [], []>} : vector<8x8xbf16>, vector<8x4xbf16>, vector<8x4xf32> -> vector<8x4xf32>
    %341 = arith.truncf %340 : vector<8x4xf32> to vector<8x4xbf16>
    %c5_201 = arith.constant 5 : index
    %c0_202 = arith.constant 0 : index
    %c0_203 = arith.constant 0 : index
    %342 = vector.load %arg6[%c5_201, %c0_202, %c0_203] : memref<8x4x16xbf16, #tpu.memory_space<vmem>>, vector<1x4x16xbf16>
    %343 = vector.shape_cast %342 : vector<1x4x16xbf16> to vector<4x16xbf16>
    %cst_204 = arith.constant dense<0.000000e+00> : vector<8x16xf32>
    %344 = tpu.matmul %341, %343, %cst_204 {dimension_numbers = #tpu.dot_dimension_numbers<[1], [0], [0], [1], [0, 0, 1, 1], [], []>} : vector<8x4xbf16>, vector<4x16xbf16>, vector<8x16xf32> -> vector<8x16xf32>
    %345 = arith.addf %303, %344 : vector<8x16xf32>
    %c14 = arith.constant 14 : index
    %c0_205 = arith.constant 0 : index
    %c0_206 = arith.constant 0 : index
    %346 = vector.load %arg4[%c14, %c0_205, %c0_206] : memref<24x16x4xbf16, #tpu.memory_space<vmem>>, vector<1x16x4xbf16>
    %347 = vector.shape_cast %346 : vector<1x16x4xbf16> to vector<16x4xbf16>
    %cst_207 = arith.constant dense<0.000000e+00> : vector<8x4xf32>
    %348 = tpu.matmul %262, %347, %cst_207 {dimension_numbers = #tpu.dot_dimension_numbers<[1], [0], [0], [1], [0, 0, 1, 1], [], []>} : vector<8x16xbf16>, vector<16x4xbf16>, vector<8x4xf32> -> vector<8x4xf32>
    %c14_208 = arith.constant 14 : index
    %c0_209 = arith.constant 0 : index
    %c0_210 = arith.constant 0 : index
    %349 = vector.load %arg5[%c14_208, %c0_209, %c0_210] : memref<24x1x4xf32, #tpu.memory_space<vmem>>, vector<1x1x4xf32>
    %350 = vector.shape_cast %349 : vector<1x1x4xf32> to vector<1x4xf32>
    %351 = vector.broadcast %350 : vector<1x4xf32> to vector<8x4xf32>
    %352 = arith.addf %348, %351 : vector<8x4xf32>
    %c18 = arith.constant 18 : index
    %c0_211 = arith.constant 0 : index
    %c0_212 = arith.constant 0 : index
    %353 = vector.load %arg4[%c18, %c0_211, %c0_212] : memref<24x16x4xbf16, #tpu.memory_space<vmem>>, vector<1x16x4xbf16>
    %354 = vector.shape_cast %353 : vector<1x16x4xbf16> to vector<16x4xbf16>
    %cst_213 = arith.constant dense<0.000000e+00> : vector<8x4xf32>
    %355 = tpu.matmul %262, %354, %cst_213 {dimension_numbers = #tpu.dot_dimension_numbers<[1], [0], [0], [1], [0, 0, 1, 1], [], []>} : vector<8x16xbf16>, vector<16x4xbf16>, vector<8x4xf32> -> vector<8x4xf32>
    %c18_214 = arith.constant 18 : index
    %c0_215 = arith.constant 0 : index
    %c0_216 = arith.constant 0 : index
    %356 = vector.load %arg5[%c18_214, %c0_215, %c0_216] : memref<24x1x4xf32, #tpu.memory_space<vmem>>, vector<1x1x4xf32>
    %357 = vector.shape_cast %356 : vector<1x1x4xf32> to vector<1x4xf32>
    %358 = vector.broadcast %357 : vector<1x4xf32> to vector<8x4xf32>
    %359 = arith.addf %355, %358 : vector<8x4xf32>
    %c22 = arith.constant 22 : index
    %c0_217 = arith.constant 0 : index
    %c0_218 = arith.constant 0 : index
    %360 = vector.load %arg4[%c22, %c0_217, %c0_218] : memref<24x16x4xbf16, #tpu.memory_space<vmem>>, vector<1x16x4xbf16>
    %361 = vector.shape_cast %360 : vector<1x16x4xbf16> to vector<16x4xbf16>
    %cst_219 = arith.constant dense<0.000000e+00> : vector<8x4xf32>
    %362 = tpu.matmul %262, %361, %cst_219 {dimension_numbers = #tpu.dot_dimension_numbers<[1], [0], [0], [1], [0, 0, 1, 1], [], []>} : vector<8x16xbf16>, vector<16x4xbf16>, vector<8x4xf32> -> vector<8x4xf32>
    %c22_220 = arith.constant 22 : index
    %c0_221 = arith.constant 0 : index
    %c0_222 = arith.constant 0 : index
    %363 = vector.load %arg5[%c22_220, %c0_221, %c0_222] : memref<24x1x4xf32, #tpu.memory_space<vmem>>, vector<1x1x4xf32>
    %364 = vector.shape_cast %363 : vector<1x1x4xf32> to vector<1x4xf32>
    %365 = vector.broadcast %364 : vector<1x4xf32> to vector<8x4xf32>
    %366 = arith.addf %362, %365 : vector<8x4xf32>
    %367 = arith.truncf %352 : vector<8x4xf32> to vector<8x4xbf16>
    %368 = arith.truncf %359 : vector<8x4xf32> to vector<8x4xbf16>
    %cst_223 = arith.constant dense<0.000000e+00> : vector<8x8xf32>
    %369 = tpu.matmul %367, %368, %cst_223 {dimension_numbers = #tpu.dot_dimension_numbers<[1], [1], [0], [0], [0, 0, 1, 0], [], []>} : vector<8x4xbf16>, vector<8x4xbf16>, vector<8x8xf32> -> vector<8x8xf32>
    %cst_224 = arith.constant dense<0xFF800000> : vector<8xf32>
    %370 = vector.multi_reduction <maximumf>, %369, %cst_224 [1] : vector<8x8xf32> to vector<8xf32>
    %371 = vector.shape_cast %370 : vector<8xf32> to vector<8x1xf32>
    %372 = vector.broadcast %371 : vector<8x1xf32> to vector<8x8xf32>
    %373 = arith.subf %369, %372 : vector<8x8xf32>
    %374 = math.exp %373 : vector<8x8xf32>
    %cst_225 = arith.constant dense<0.000000e+00> : vector<8xf32>
    %375 = vector.multi_reduction <add>, %374, %cst_225 [1] : vector<8x8xf32> to vector<8xf32>
    %376 = vector.shape_cast %375 : vector<8xf32> to vector<8x1xf32>
    %377 = tpu.reciprocal %376 {approx = true} : vector<8x1xf32> -> vector<8x1xf32>
    %378 = vector.broadcast %377 : vector<8x1xf32> to vector<8x8xf32>
    %379 = arith.mulf %374, %378 : vector<8x8xf32>
    %380 = arith.truncf %379 : vector<8x8xf32> to vector<8x8xbf16>
    %381 = arith.truncf %366 : vector<8x4xf32> to vector<8x4xbf16>
    %cst_226 = arith.constant dense<0.000000e+00> : vector<8x4xf32>
    %382 = tpu.matmul %380, %381, %cst_226 {dimension_numbers = #tpu.dot_dimension_numbers<[1], [0], [0], [1], [0, 0, 1, 1], [], []>} : vector<8x8xbf16>, vector<8x4xbf16>, vector<8x4xf32> -> vector<8x4xf32>
    %383 = arith.truncf %382 : vector<8x4xf32> to vector<8x4xbf16>
    %c6_227 = arith.constant 6 : index
    %c0_228 = arith.constant 0 : index
    %c0_229 = arith.constant 0 : index
    %384 = vector.load %arg6[%c6_227, %c0_228, %c0_229] : memref<8x4x16xbf16, #tpu.memory_space<vmem>>, vector<1x4x16xbf16>
    %385 = vector.shape_cast %384 : vector<1x4x16xbf16> to vector<4x16xbf16>
    %cst_230 = arith.constant dense<0.000000e+00> : vector<8x16xf32>
    %386 = tpu.matmul %383, %385, %cst_230 {dimension_numbers = #tpu.dot_dimension_numbers<[1], [0], [0], [1], [0, 0, 1, 1], [], []>} : vector<8x4xbf16>, vector<4x16xbf16>, vector<8x16xf32> -> vector<8x16xf32>
    %387 = arith.addf %345, %386 : vector<8x16xf32>
    %c15 = arith.constant 15 : index
    %c0_231 = arith.constant 0 : index
    %c0_232 = arith.constant 0 : index
    %388 = vector.load %arg4[%c15, %c0_231, %c0_232] : memref<24x16x4xbf16, #tpu.memory_space<vmem>>, vector<1x16x4xbf16>
    %389 = vector.shape_cast %388 : vector<1x16x4xbf16> to vector<16x4xbf16>
    %cst_233 = arith.constant dense<0.000000e+00> : vector<8x4xf32>
    %390 = tpu.matmul %262, %389, %cst_233 {dimension_numbers = #tpu.dot_dimension_numbers<[1], [0], [0], [1], [0, 0, 1, 1], [], []>} : vector<8x16xbf16>, vector<16x4xbf16>, vector<8x4xf32> -> vector<8x4xf32>
    %c15_234 = arith.constant 15 : index
    %c0_235 = arith.constant 0 : index
    %c0_236 = arith.constant 0 : index
    %391 = vector.load %arg5[%c15_234, %c0_235, %c0_236] : memref<24x1x4xf32, #tpu.memory_space<vmem>>, vector<1x1x4xf32>
    %392 = vector.shape_cast %391 : vector<1x1x4xf32> to vector<1x4xf32>
    %393 = vector.broadcast %392 : vector<1x4xf32> to vector<8x4xf32>
    %394 = arith.addf %390, %393 : vector<8x4xf32>
    %c19 = arith.constant 19 : index
    %c0_237 = arith.constant 0 : index
    %c0_238 = arith.constant 0 : index
    %395 = vector.load %arg4[%c19, %c0_237, %c0_238] : memref<24x16x4xbf16, #tpu.memory_space<vmem>>, vector<1x16x4xbf16>
    %396 = vector.shape_cast %395 : vector<1x16x4xbf16> to vector<16x4xbf16>
    %cst_239 = arith.constant dense<0.000000e+00> : vector<8x4xf32>
    %397 = tpu.matmul %262, %396, %cst_239 {dimension_numbers = #tpu.dot_dimension_numbers<[1], [0], [0], [1], [0, 0, 1, 1], [], []>} : vector<8x16xbf16>, vector<16x4xbf16>, vector<8x4xf32> -> vector<8x4xf32>
    %c19_240 = arith.constant 19 : index
    %c0_241 = arith.constant 0 : index
    %c0_242 = arith.constant 0 : index
    %398 = vector.load %arg5[%c19_240, %c0_241, %c0_242] : memref<24x1x4xf32, #tpu.memory_space<vmem>>, vector<1x1x4xf32>
    %399 = vector.shape_cast %398 : vector<1x1x4xf32> to vector<1x4xf32>
    %400 = vector.broadcast %399 : vector<1x4xf32> to vector<8x4xf32>
    %401 = arith.addf %397, %400 : vector<8x4xf32>
    %c23 = arith.constant 23 : index
    %c0_243 = arith.constant 0 : index
    %c0_244 = arith.constant 0 : index
    %402 = vector.load %arg4[%c23, %c0_243, %c0_244] : memref<24x16x4xbf16, #tpu.memory_space<vmem>>, vector<1x16x4xbf16>
    %403 = vector.shape_cast %402 : vector<1x16x4xbf16> to vector<16x4xbf16>
    %cst_245 = arith.constant dense<0.000000e+00> : vector<8x4xf32>
    %404 = tpu.matmul %262, %403, %cst_245 {dimension_numbers = #tpu.dot_dimension_numbers<[1], [0], [0], [1], [0, 0, 1, 1], [], []>} : vector<8x16xbf16>, vector<16x4xbf16>, vector<8x4xf32> -> vector<8x4xf32>
    %c23_246 = arith.constant 23 : index
    %c0_247 = arith.constant 0 : index
    %c0_248 = arith.constant 0 : index
    %405 = vector.load %arg5[%c23_246, %c0_247, %c0_248] : memref<24x1x4xf32, #tpu.memory_space<vmem>>, vector<1x1x4xf32>
    %406 = vector.shape_cast %405 : vector<1x1x4xf32> to vector<1x4xf32>
    %407 = vector.broadcast %406 : vector<1x4xf32> to vector<8x4xf32>
    %408 = arith.addf %404, %407 : vector<8x4xf32>
    %409 = arith.truncf %394 : vector<8x4xf32> to vector<8x4xbf16>
    %410 = arith.truncf %401 : vector<8x4xf32> to vector<8x4xbf16>
    %cst_249 = arith.constant dense<0.000000e+00> : vector<8x8xf32>
    %411 = tpu.matmul %409, %410, %cst_249 {dimension_numbers = #tpu.dot_dimension_numbers<[1], [1], [0], [0], [0, 0, 1, 0], [], []>} : vector<8x4xbf16>, vector<8x4xbf16>, vector<8x8xf32> -> vector<8x8xf32>
    %cst_250 = arith.constant dense<0xFF800000> : vector<8xf32>
    %412 = vector.multi_reduction <maximumf>, %411, %cst_250 [1] : vector<8x8xf32> to vector<8xf32>
    %413 = vector.shape_cast %412 : vector<8xf32> to vector<8x1xf32>
    %414 = vector.broadcast %413 : vector<8x1xf32> to vector<8x8xf32>
    %415 = arith.subf %411, %414 : vector<8x8xf32>
    %416 = math.exp %415 : vector<8x8xf32>
    %cst_251 = arith.constant dense<0.000000e+00> : vector<8xf32>
    %417 = vector.multi_reduction <add>, %416, %cst_251 [1] : vector<8x8xf32> to vector<8xf32>
    %418 = vector.shape_cast %417 : vector<8xf32> to vector<8x1xf32>
    %419 = tpu.reciprocal %418 {approx = true} : vector<8x1xf32> -> vector<8x1xf32>
    %420 = vector.broadcast %419 : vector<8x1xf32> to vector<8x8xf32>
    %421 = arith.mulf %416, %420 : vector<8x8xf32>
    %422 = arith.truncf %421 : vector<8x8xf32> to vector<8x8xbf16>
    %423 = arith.truncf %408 : vector<8x4xf32> to vector<8x4xbf16>
    %cst_252 = arith.constant dense<0.000000e+00> : vector<8x4xf32>
    %424 = tpu.matmul %422, %423, %cst_252 {dimension_numbers = #tpu.dot_dimension_numbers<[1], [0], [0], [1], [0, 0, 1, 1], [], []>} : vector<8x8xbf16>, vector<8x4xbf16>, vector<8x4xf32> -> vector<8x4xf32>
    %425 = arith.truncf %424 : vector<8x4xf32> to vector<8x4xbf16>
    %c7_253 = arith.constant 7 : index
    %c0_254 = arith.constant 0 : index
    %c0_255 = arith.constant 0 : index
    %426 = vector.load %arg6[%c7_253, %c0_254, %c0_255] : memref<8x4x16xbf16, #tpu.memory_space<vmem>>, vector<1x4x16xbf16>
    %427 = vector.shape_cast %426 : vector<1x4x16xbf16> to vector<4x16xbf16>
    %cst_256 = arith.constant dense<0.000000e+00> : vector<8x16xf32>
    %428 = tpu.matmul %425, %427, %cst_256 {dimension_numbers = #tpu.dot_dimension_numbers<[1], [0], [0], [1], [0, 0, 1, 1], [], []>} : vector<8x4xbf16>, vector<4x16xbf16>, vector<8x16xf32> -> vector<8x16xf32>
    %429 = arith.addf %387, %428 : vector<8x16xf32>
    %c6_257 = arith.constant 6 : index
    %c0_258 = arith.constant 0 : index
    %c0_259 = arith.constant 0 : index
    %430 = vector.load %arg10[%c6_257, %c0_258, %c0_259] : memref<12x1x16xf32, #tpu.memory_space<vmem>>, vector<1x1x16xf32>
    %431 = vector.shape_cast %430 : vector<1x1x16xf32> to vector<1x16xf32>
    %432 = vector.broadcast %431 : vector<1x16xf32> to vector<8x16xf32>
    %433 = arith.addf %429, %432 : vector<8x16xf32>
    %434 = arith.addf %433, %261 : vector<8x16xf32>
    %c7_260 = arith.constant 7 : index
    %c0_261 = arith.constant 0 : index
    %c0_262 = arith.constant 0 : index
    %435 = vector.load %arg10[%c7_260, %c0_261, %c0_262] : memref<12x1x16xf32, #tpu.memory_space<vmem>>, vector<1x1x16xf32>
    %436 = vector.shape_cast %435 : vector<1x1x16xf32> to vector<1x16xf32>
    %c8_263 = arith.constant 8 : index
    %c0_264 = arith.constant 0 : index
    %c0_265 = arith.constant 0 : index
    %437 = vector.load %arg10[%c8_263, %c0_264, %c0_265] : memref<12x1x16xf32, #tpu.memory_space<vmem>>, vector<1x1x16xf32>
    %438 = vector.shape_cast %437 : vector<1x1x16xf32> to vector<1x16xf32>
    %cst_266 = arith.constant dense<0.000000e+00> : vector<8xf32>
    %439 = vector.multi_reduction <add>, %434, %cst_266 [1] : vector<8x16xf32> to vector<8xf32>
    %440 = vector.shape_cast %439 : vector<8xf32> to vector<8x1xf32>
    %cst_267 = arith.constant 1.600000e+01 : f32
    %441 = vector.broadcast %cst_267 : f32 to vector<8x1xf32>
    %442 = arith.divf %440, %441 : vector<8x1xf32>
    %443 = vector.broadcast %442 : vector<8x1xf32> to vector<8x16xf32>
    %444 = arith.subf %434, %443 : vector<8x16xf32>
    %445 = arith.mulf %444, %444 : vector<8x16xf32>
    %cst_268 = arith.constant dense<0.000000e+00> : vector<8xf32>
    %446 = vector.multi_reduction <add>, %445, %cst_268 [1] : vector<8x16xf32> to vector<8xf32>
    %447 = vector.shape_cast %446 : vector<8xf32> to vector<8x1xf32>
    %cst_269 = arith.constant 1.600000e+01 : f32
    %448 = vector.broadcast %cst_269 : f32 to vector<8x1xf32>
    %449 = arith.divf %447, %448 : vector<8x1xf32>
    %450 = vector.broadcast %442 : vector<8x1xf32> to vector<8x16xf32>
    %451 = arith.subf %434, %450 : vector<8x16xf32>
    %cst_270 = arith.constant 9.99999996E-13 : f32
    %452 = vector.broadcast %cst_270 : f32 to vector<8x1xf32>
    %453 = arith.addf %449, %452 : vector<8x1xf32>
    %454 = math.rsqrt %453 : vector<8x1xf32>
    %455 = vector.broadcast %454 : vector<8x1xf32> to vector<8x16xf32>
    %456 = arith.mulf %451, %455 : vector<8x16xf32>
    %457 = vector.broadcast %436 : vector<1x16xf32> to vector<8x16xf32>
    %458 = arith.mulf %456, %457 : vector<8x16xf32>
    %459 = vector.broadcast %438 : vector<1x16xf32> to vector<8x16xf32>
    %460 = arith.addf %458, %459 : vector<8x16xf32>
    %461 = arith.truncf %460 : vector<8x16xf32> to vector<8x16xbf16>
    %c1_271 = arith.constant 1 : index
    %c0_272 = arith.constant 0 : index
    %c0_273 = arith.constant 0 : index
    %462 = vector.load %arg7[%c1_271, %c0_272, %c0_273] : memref<2x16x64xbf16, #tpu.memory_space<vmem>>, vector<1x16x64xbf16>
    %463 = vector.shape_cast %462 : vector<1x16x64xbf16> to vector<16x64xbf16>
    %cst_274 = arith.constant dense<0.000000e+00> : vector<8x64xf32>
    %464 = tpu.matmul %461, %463, %cst_274 {dimension_numbers = #tpu.dot_dimension_numbers<[1], [0], [0], [1], [0, 0, 1, 1], [], []>} : vector<8x16xbf16>, vector<16x64xbf16>, vector<8x64xf32> -> vector<8x64xf32>
    %c1_275 = arith.constant 1 : index
    %c0_276 = arith.constant 0 : index
    %c0_277 = arith.constant 0 : index
    %465 = vector.load %arg8[%c1_275, %c0_276, %c0_277] : memref<2x1x64xf32, #tpu.memory_space<vmem>>, vector<1x1x64xf32>
    %466 = vector.shape_cast %465 : vector<1x1x64xf32> to vector<1x64xf32>
    %467 = vector.broadcast %466 : vector<1x64xf32> to vector<8x64xf32>
    %468 = arith.addf %464, %467 : vector<8x64xf32>
    %cst_278 = arith.constant 5.000000e-01 : f32
    %469 = vector.broadcast %cst_278 : f32 to vector<8x64xf32>
    %470 = arith.mulf %469, %468 : vector<8x64xf32>
    %cst_279 = arith.constant 4.471500e-02 : f32
    %471 = vector.broadcast %cst_279 : f32 to vector<8x64xf32>
    %472 = arith.mulf %471, %468 : vector<8x64xf32>
    %473 = arith.mulf %472, %468 : vector<8x64xf32>
    %474 = arith.mulf %473, %468 : vector<8x64xf32>
    %475 = arith.addf %468, %474 : vector<8x64xf32>
    %cst_280 = arith.constant 0.797884583 : f32
    %476 = vector.broadcast %cst_280 : f32 to vector<8x64xf32>
    %477 = arith.mulf %476, %475 : vector<8x64xf32>
    %478 = math.tanh %477 : vector<8x64xf32>
    %cst_281 = arith.constant 1.000000e+00 : f32
    %479 = vector.broadcast %cst_281 : f32 to vector<8x64xf32>
    %480 = arith.addf %479, %478 : vector<8x64xf32>
    %481 = arith.mulf %470, %480 : vector<8x64xf32>
    %482 = arith.truncf %481 : vector<8x64xf32> to vector<8x64xbf16>
    %c1_282 = arith.constant 1 : index
    %c0_283 = arith.constant 0 : index
    %c0_284 = arith.constant 0 : index
    %483 = vector.load %arg9[%c1_282, %c0_283, %c0_284] : memref<2x64x16xbf16, #tpu.memory_space<vmem>>, vector<1x64x16xbf16>
    %484 = vector.shape_cast %483 : vector<1x64x16xbf16> to vector<64x16xbf16>
    %cst_285 = arith.constant dense<0.000000e+00> : vector<8x16xf32>
    %485 = tpu.matmul %482, %484, %cst_285 {dimension_numbers = #tpu.dot_dimension_numbers<[1], [0], [0], [1], [0, 0, 1, 1], [], []>} : vector<8x64xbf16>, vector<64x16xbf16>, vector<8x16xf32> -> vector<8x16xf32>
    %c9_286 = arith.constant 9 : index
    %c0_287 = arith.constant 0 : index
    %c0_288 = arith.constant 0 : index
    %486 = vector.load %arg10[%c9_286, %c0_287, %c0_288] : memref<12x1x16xf32, #tpu.memory_space<vmem>>, vector<1x1x16xf32>
    %487 = vector.shape_cast %486 : vector<1x1x16xf32> to vector<1x16xf32>
    %488 = vector.broadcast %487 : vector<1x16xf32> to vector<8x16xf32>
    %489 = arith.addf %485, %488 : vector<8x16xf32>
    %490 = arith.addf %489, %460 : vector<8x16xf32>
    %c10_289 = arith.constant 10 : index
    %c0_290 = arith.constant 0 : index
    %c0_291 = arith.constant 0 : index
    %491 = vector.load %arg10[%c10_289, %c0_290, %c0_291] : memref<12x1x16xf32, #tpu.memory_space<vmem>>, vector<1x1x16xf32>
    %492 = vector.shape_cast %491 : vector<1x1x16xf32> to vector<1x16xf32>
    %c11_292 = arith.constant 11 : index
    %c0_293 = arith.constant 0 : index
    %c0_294 = arith.constant 0 : index
    %493 = vector.load %arg10[%c11_292, %c0_293, %c0_294] : memref<12x1x16xf32, #tpu.memory_space<vmem>>, vector<1x1x16xf32>
    %494 = vector.shape_cast %493 : vector<1x1x16xf32> to vector<1x16xf32>
    %cst_295 = arith.constant dense<0.000000e+00> : vector<8xf32>
    %495 = vector.multi_reduction <add>, %490, %cst_295 [1] : vector<8x16xf32> to vector<8xf32>
    %496 = vector.shape_cast %495 : vector<8xf32> to vector<8x1xf32>
    %cst_296 = arith.constant 1.600000e+01 : f32
    %497 = vector.broadcast %cst_296 : f32 to vector<8x1xf32>
    %498 = arith.divf %496, %497 : vector<8x1xf32>
    %499 = vector.broadcast %498 : vector<8x1xf32> to vector<8x16xf32>
    %500 = arith.subf %490, %499 : vector<8x16xf32>
    %501 = arith.mulf %500, %500 : vector<8x16xf32>
    %cst_297 = arith.constant dense<0.000000e+00> : vector<8xf32>
    %502 = vector.multi_reduction <add>, %501, %cst_297 [1] : vector<8x16xf32> to vector<8xf32>
    %503 = vector.shape_cast %502 : vector<8xf32> to vector<8x1xf32>
    %cst_298 = arith.constant 1.600000e+01 : f32
    %504 = vector.broadcast %cst_298 : f32 to vector<8x1xf32>
    %505 = arith.divf %503, %504 : vector<8x1xf32>
    %506 = vector.broadcast %498 : vector<8x1xf32> to vector<8x16xf32>
    %507 = arith.subf %490, %506 : vector<8x16xf32>
    %cst_299 = arith.constant 9.99999996E-13 : f32
    %508 = vector.broadcast %cst_299 : f32 to vector<8x1xf32>
    %509 = arith.addf %505, %508 : vector<8x1xf32>
    %510 = math.rsqrt %509 : vector<8x1xf32>
    %511 = vector.broadcast %510 : vector<8x1xf32> to vector<8x16xf32>
    %512 = arith.mulf %507, %511 : vector<8x16xf32>
    %513 = vector.broadcast %492 : vector<1x16xf32> to vector<8x16xf32>
    %514 = arith.mulf %512, %513 : vector<8x16xf32>
    %515 = vector.broadcast %494 : vector<1x16xf32> to vector<8x16xf32>
    %516 = arith.addf %514, %515 : vector<8x16xf32>
    %517 = arith.truncf %516 : vector<8x16xf32> to vector<8x16xbf16>
    %c0_300 = arith.constant 0 : index
    %c0_301 = arith.constant 0 : index
    %518 = vector.load %arg11[%c0_300, %c0_301] : memref<16x32xbf16, #tpu.memory_space<vmem>>, vector<16x32xbf16>
    %cst_302 = arith.constant dense<0.000000e+00> : vector<8x32xf32>
    %519 = tpu.matmul %517, %518, %cst_302 {dimension_numbers = #tpu.dot_dimension_numbers<[1], [0], [0], [1], [0, 0, 1, 1], [], []>} : vector<8x16xbf16>, vector<16x32xbf16>, vector<8x32xf32> -> vector<8x32xf32>
    %c0_303 = arith.constant 0 : index
    %c0_304 = arith.constant 0 : index
    %520 = vector.load %arg12[%c0_303, %c0_304] : memref<1x32xf32, #tpu.memory_space<vmem>>, vector<1x32xf32>
    %521 = vector.broadcast %520 : vector<1x32xf32> to vector<8x32xf32>
    %522 = arith.addf %519, %521 : vector<8x32xf32>
    %c0_305 = arith.constant 0 : index
    %c0_306 = arith.constant 0 : index
    %523 = vector.load %arg1[%c0_305, %c0_306] : memref<8x32xf32, #tpu.memory_space<vmem>>, vector<8x32xf32>
    %524 = arith.addf %523, %522 : vector<8x32xf32>
    %c0_307 = arith.constant 0 : index
    %c0_308 = arith.constant 0 : index
    %525 = vector.load %arg13[%c0_307, %c0_308] : memref<8x32xf32, #tpu.memory_space<vmem>>, vector<8x32xf32>
    tpu.vector_store %arg13[%c0_307, %c0_308], %524 {strides = array<i32>} : memref<8x32xf32, #tpu.memory_space<vmem>>, vector<8x32xf32>,
    return
  }
  func.func @transform_0(%arg0: i32) -> (i32, i32) {
    %c0_i32 = arith.constant 0 : i32
    %c0_i32_0 = arith.constant 0 : i32
    return %arg0, %c0_i32 : i32, i32
  }
  func.func @transform_1(%arg0: i32) -> (i32, i32) {
    %c0_i32 = arith.constant 0 : i32
    %c0_i32_0 = arith.constant 0 : i32
    %c0_i32_1 = arith.constant 0 : i32
    return %c0_i32, %c0_i32_0 : i32, i32
  }
  func.func @transform_2(%arg0: i32) -> (i32, i32) {
    %c0_i32 = arith.constant 0 : i32
    %c0_i32_0 = arith.constant 0 : i32
    %c0_i32_1 = arith.constant 0 : i32
    return %c0_i32, %c0_i32_0 : i32, i32
  }
  func.func @transform_3(%arg0: i32) -> (i32, i32, i32) {
    %c0_i32 = arith.constant 0 : i32
    %c0_i32_0 = arith.constant 0 : i32
    %c0_i32_1 = arith.constant 0 : i32
    %c0_i32_2 = arith.constant 0 : i32
    return %c0_i32, %c0_i32_0, %c0_i32_1 : i32, i32, i32
  }
  func.func @transform_4(%arg0: i32) -> (i32, i32, i32) {
    %c0_i32 = arith.constant 0 : i32
    %c0_i32_0 = arith.constant 0 : i32
    %c0_i32_1 = arith.constant 0 : i32
    %c0_i32_2 = arith.constant 0 : i32
    return %c0_i32, %c0_i32_0, %c0_i32_1 : i32, i32, i32
  }
  func.func @transform_5(%arg0: i32) -> (i32, i32, i32) {
    %c0_i32 = arith.constant 0 : i32
    %c0_i32_0 = arith.constant 0 : i32
    %c0_i32_1 = arith.constant 0 : i32
    %c0_i32_2 = arith.constant 0 : i32
    return %c0_i32, %c0_i32_0, %c0_i32_1 : i32, i32, i32
  }
  func.func @transform_6(%arg0: i32) -> (i32, i32, i32) {
    %c0_i32 = arith.constant 0 : i32
    %c0_i32_0 = arith.constant 0 : i32
    %c0_i32_1 = arith.constant 0 : i32
    %c0_i32_2 = arith.constant 0 : i32
    return %c0_i32, %c0_i32_0, %c0_i32_1 : i32, i32, i32
  }
  func.func @transform_7(%arg0: i32) -> (i32, i32, i32) {
    %c0_i32 = arith.constant 0 : i32
    %c0_i32_0 = arith.constant 0 : i32
    %c0_i32_1 = arith.constant 0 : i32
    %c0_i32_2 = arith.constant 0 : i32
    return %c0_i32, %c0_i32_0, %c0_i32_1 : i32, i32, i32
  }
  func.func @transform_8(%arg0: i32) -> (i32, i32, i32) {
    %c0_i32 = arith.constant 0 : i32
    %c0_i32_0 = arith.constant 0 : i32
    %c0_i32_1 = arith.constant 0 : i32
    %c0_i32_2 = arith.constant 0 : i32
    return %c0_i32, %c0_i32_0, %c0_i32_1 : i32, i32, i32
  }
  func.func @transform_9(%arg0: i32) -> (i32, i32, i32) {
    %c0_i32 = arith.constant 0 : i32
    %c0_i32_0 = arith.constant 0 : i32
    %c0_i32_1 = arith.constant 0 : i32
    %c0_i32_2 = arith.constant 0 : i32
    return %c0_i32, %c0_i32_0, %c0_i32_1 : i32, i32, i32
  }
  func.func @transform_10(%arg0: i32) -> (i32, i32) {
    %c0_i32 = arith.constant 0 : i32
    %c0_i32_0 = arith.constant 0 : i32
    %c0_i32_1 = arith.constant 0 : i32
    return %c0_i32, %c0_i32_0 : i32, i32
  }
  func.func @transform_11(%arg0: i32) -> (i32, i32) {
    %c0_i32 = arith.constant 0 : i32
    %c0_i32_0 = arith.constant 0 : i32
    %c0_i32_1 = arith.constant 0 : i32
    return %c0_i32, %c0_i32_0 : i32, i32
  }
  func.func @transform_12(%arg0: i32) -> (i32, i32) {
    %c0_i32 = arith.constant 0 : i32
    %c0_i32_0 = arith.constant 0 : i32
    return %arg0, %c0_i32 : i32, i32
  }
}

</mosaic_0001>

<llo_original>
// kernel: tpu_custom_call.1
$region0: #{tpu_custom_call.1}
  #allocation0 [shape = 'u32[]', space=smem, size = 0x4, offset = 0x4, fixed_abs, tag = 'smem constant byte address 0x4 - core index']
  #allocation1 [shape = 'u32[144,128]{1,0:T(1,128)}', space=vmem, size = 0x12000, scoped, tag = 'internal scratch']
  %s0 = inlined_call_operand.vmem [shape: f32[16,32], index: 0, kind: input, shape index: {}]
  %s1 = inlined_call_operand.vmem [shape: bf16[32,16], index: 1, kind: input, shape index: {}]
  %s2 = inlined_call_operand.vmem [shape: f32[1,16], index: 2, kind: input, shape index: {}]
  %s3 = inlined_call_operand.vmem [shape: bf16[24,16,4], index: 3, kind: input, shape index: {}]
  %s4 = inlined_call_operand.vmem [shape: f32[24,1,4], index: 4, kind: input, shape index: {}]
  %s5 = inlined_call_operand.vmem [shape: bf16[8,4,16], index: 5, kind: input, shape index: {}]
  %s6 = inlined_call_operand.vmem [shape: bf16[2,16,64], index: 6, kind: input, shape index: {}]
  %s7 = inlined_call_operand.vmem [shape: f32[2,1,64], index: 7, kind: input, shape index: {}]
  %s8 = inlined_call_operand.vmem [shape: bf16[2,64,16], index: 8, kind: input, shape index: {}]
  %s9 = inlined_call_operand.vmem [shape: f32[12,1,16], index: 9, kind: input, shape index: {}]
  %s10 = inlined_call_operand.vmem [shape: bf16[16,32], index: 10, kind: input, shape index: {}]
  %s11 = inlined_call_operand.vmem [shape: f32[1,32], index: 11, kind: input, shape index: {}]
  %s12 = inlined_call_operand.hbm [shape: f32[16,32], index: 12, kind: output, shape index: {}]
  %s13 = sld [smem:[#allocation0]]
  $region81: #{tpu_custom_call.1} parent=0
    _
  %s15 = ssub.s32 1, %s13
  %s16 = scalar_select 0, %s15, %s13
  $region1: #{tpu_custom_call.1} parent=0
    #allocation2 [shape = 'u8[8192]{0}', space=vmem, size = 0x2000, scoped, tag = 'output window, operand 0']
    #allocation3 [shape = 's32[2]{0}', space=sflag, size = 0x8, scoped, tag = 'scoped memory for tpu_custom_call.1']
    %17 = vsyncpa [#allocation3], 0
    %s18 = scalar_lea.sflag [#allocation3], 1
    %19 = vsyncpa %s18, 0
    loop: start=0, step=1, limit=4
    $region2: #{tpu_custom_call.1} parent=1 // loop_pre_header
      _
    $region3: #{tpu_custom_call.1} parent=1 // loop_header
      %s21 = sphi 0, %s25
      %p22 = scmp.ge.s32.totalorder %s21, 4
      %s31 = sphi 0, %s33
      %s34 = sphi 0, %s31
      %s35 = sphi 0, %s34
      %s51 = sphi 0, %s35
      %s55 = sphi 0, %s55
      %s57 = sphi 0, %s55
      %s58 = sphi 0, %s57
      %s72 = sphi 0, %s58
      %s76 = sphi 0, %s76
      %s78 = sphi 0, %s76
      %s79 = sphi 0, %s78
      %s93 = sphi 0, %s79
      %s97 = sphi 0, %s97
      %s99 = sphi 0, %s97
      %s100 = sphi 0, %s99
      %s114 = sphi 0, %s100
      %s118 = sphi 0, %s118
      %s120 = sphi 0, %s118
      %s121 = sphi 0, %s120
      %s135 = sphi 0, %s121
      %s139 = sphi 0, %s139
      %s141 = sphi 0, %s139
      %s142 = sphi 0, %s141
      %s156 = sphi 0, %s142
      %s160 = sphi 0, %s160
      %s162 = sphi 0, %s160
      %s163 = sphi 0, %s162
      %s177 = sphi 0, %s163
      %s181 = sphi 0, %s181
      %s183 = sphi 0, %s181
      %s184 = sphi 0, %s183
      %s198 = sphi 0, %s184
      %s202 = sphi 0, %s202
      %s204 = sphi 0, %s202
      %s205 = sphi 0, %s204
      %s219 = sphi 0, %s205
      %s223 = sphi 0, %s223
      %s225 = sphi 0, %s223
      %s226 = sphi 0, %s225
      %s240 = sphi 0, %s226
      %s244 = sphi 0, %s244
      %s246 = sphi 0, %s244
      %s247 = sphi 0, %s246
      %s261 = sphi 0, %s247
      %s265 = sphi 0, %s265
      %s267 = sphi 0, %s265
      %s268 = sphi 0, %s267
      %s282 = sphi 0, %s268
      %s288 = sphi 0, %s290
      %s291 = sphi 0, %s288
      %s292 = sphi 0, %s291
      %s308 = sphi 0, %s292
    $region4: #{tpu_custom_call.1} parent=1 // loop_header_branch
      %24 = sbr.rel (%p22) target = $region8
    $region5: #{tpu_custom_call.1} parent=1 // loop_body
      %s26 = ssub.s32 %s21, 1
      %s27 = ssub.s32 %s21, 2
      %s28 = sadd.s32 %s21, 1
      %s29 = ssub.s32 %s21, %s28
      %p30 = scmp.eq.s32.totalorder %s29, 0
      %s32 = sadd.s32 %s31, 1
      %s33 = scalar_select %p30, %s31, %s32
      %p36 = pneg %p30
      %p37 = scmp.eq.s32.totalorder %s21, 1
      %p38 = por %p36, %p37
      %p39 = scmp.ne.s32.totalorder %s31, %s34
      %p40 = scmp.eq.s32.totalorder %s21, 0
      %p41 = por %p39, %p40
      %p42 = scmp.ne.s32.totalorder %s31, %s34
      %p43 = scmp.eq.s32.totalorder %s26, 1
      %p44 = por %p42, %p43
      %p45 = scmp.ne.s32.totalorder %s34, %s35
      %p46 = scmp.eq.s32.totalorder %s26, 0
      %p47 = por %p45, %p46
      %p48 = scmp.ne.s32.totalorder %s34, %s35
      %p49 = scmp.eq.s32.totalorder %s27, 1
      %p50 = por %p48, %p49
      %p52 = scmp.ne.s32.totalorder %s35, %s51
      %p53 = scmp.eq.s32.totalorder %s27, 0
      %p54 = por %p52, %p53
      %s56 = sadd.s32 %s55, 1
      %p59 = scmp.eq.s32.totalorder %s21, 1
      %p60 = scmp.ne.s32.totalorder %s55, %s57
      %p61 = scmp.eq.s32.totalorder %s21, 0
      %p62 = por %p60, %p61
      %p63 = scmp.ne.s32.totalorder %s55, %s57
      %p64 = scmp.eq.s32.totalorder %s26, 1
      %p65 = por %p63, %p64
      %p66 = scmp.ne.s32.totalorder %s57, %s58
      %p67 = scmp.eq.s32.totalorder %s26, 0
      %p68 = por %p66, %p67
      %p69 = scmp.ne.s32.totalorder %s57, %s58
      %p70 = scmp.eq.s32.totalorder %s27, 1
      %p71 = por %p69, %p70
      %p73 = scmp.ne.s32.totalorder %s58, %s72
      %p74 = scmp.eq.s32.totalorder %s27, 0
      %p75 = por %p73, %p74
      %s77 = sadd.s32 %s76, 1
      %p80 = scmp.eq.s32.totalorder %s21, 1
      %p81 = scmp.ne.s32.totalorder %s76, %s78
      %p82 = scmp.eq.s32.totalorder %s21, 0
      %p83 = por %p81, %p82
      %p84 = scmp.ne.s32.totalorder %s76, %s78
      %p85 = scmp.eq.s32.totalorder %s26, 1
      %p86 = por %p84, %p85
      %p87 = scmp.ne.s32.totalorder %s78, %s79
      %p88 = scmp.eq.s32.totalorder %s26, 0
      %p89 = por %p87, %p88
      %p90 = scmp.ne.s32.totalorder %s78, %s79
      %p91 = scmp.eq.s32.totalorder %s27, 1
      %p92 = por %p90, %p91
      %p94 = scmp.ne.s32.totalorder %s79, %s93
      %p95 = scmp.eq.s32.totalorder %s27, 0
      %p96 = por %p94, %p95
      %s98 = sadd.s32 %s97, 1
      %p101 = scmp.eq.s32.totalorder %s21, 1
      %p102 = scmp.ne.s32.totalorder %s97, %s99
      %p103 = scmp.eq.s32.totalorder %s21, 0
      %p104 = por %p102, %p103
      %p105 = scmp.ne.s32.totalorder %s97, %s99
      %p106 = scmp.eq.s32.totalorder %s26, 1
      %p107 = por %p105, %p106
      %p108 = scmp.ne.s32.totalorder %s99, %s100
      %p109 = scmp.eq.s32.totalorder %s26, 0
      %p110 = por %p108, %p109
      %p111 = scmp.ne.s32.totalorder %s99, %s100
      %p112 = scmp.eq.s32.totalorder %s27, 1
      %p113 = por %p111, %p112
      %p115 = scmp.ne.s32.totalorder %s100, %s114
      %p116 = scmp.eq.s32.totalorder %s27, 0
      %p117 = por %p115, %p116
      %s119 = sadd.s32 %s118, 1
      %p122 = scmp.eq.s32.totalorder %s21, 1
      %p123 = scmp.ne.s32.totalorder %s118, %s120
      %p124 = scmp.eq.s32.totalorder %s21, 0
      %p125 = por %p123, %p124
      %p126 = scmp.ne.s32.totalorder %s118, %s120
      %p127 = scmp.eq.s32.totalorder %s26, 1
      %p128 = por %p126, %p127
      %p129 = scmp.ne.s32.totalorder %s120, %s121
      %p130 = scmp.eq.s32.totalorder %s26, 0
      %p131 = por %p129, %p130
      %p132 = scmp.ne.s32.totalorder %s120, %s121
      %p133 = scmp.eq.s32.totalorder %s27, 1
      %p134 = por %p132, %p133
      %p136 = scmp.ne.s32.totalorder %s121, %s135
      %p137 = scmp.eq.s32.totalorder %s27, 0
      %p138 = por %p136, %p137
      %s140 = sadd.s32 %s139, 1
      %p143 = scmp.eq.s32.totalorder %s21, 1
      %p144 = scmp.ne.s32.totalorder %s139, %s141
      %p145 = scmp.eq.s32.totalorder %s21, 0
      %p146 = por %p144, %p145
      %p147 = scmp.ne.s32.totalorder %s139, %s141
      %p148 = scmp.eq.s32.totalorder %s26, 1
      %p149 = por %p147, %p148
      %p150 = scmp.ne.s32.totalorder %s141, %s142
      %p151 = scmp.eq.s32.totalorder %s26, 0
      %p152 = por %p150, %p151
      %p153 = scmp.ne.s32.totalorder %s141, %s142
      %p154 = scmp.eq.s32.totalorder %s27, 1
      %p155 = por %p153, %p154
      %p157 = scmp.ne.s32.totalorder %s142, %s156
      %p158 = scmp.eq.s32.totalorder %s27, 0
      %p159 = por %p157, %p158
      %s161 = sadd.s32 %s160, 1
      %p164 = scmp.eq.s32.totalorder %s21, 1
      %p165 = scmp.ne.s32.totalorder %s160, %s162
      %p166 = scmp.eq.s32.totalorder %s21, 0
      %p167 = por %p165, %p166
      %p168 = scmp.ne.s32.totalorder %s160, %s162
      %p169 = scmp.eq.s32.totalorder %s26, 1
      %p170 = por %p168, %p169
      %p171 = scmp.ne.s32.totalorder %s162, %s163
      %p172 = scmp.eq.s32.totalorder %s26, 0
      %p173 = por %p171, %p172
      %p174 = scmp.ne.s32.totalorder %s162, %s163
      %p175 = scmp.eq.s32.totalorder %s27, 1
      %p176 = por %p174, %p175
      %p178 = scmp.ne.s32.totalorder %s163, %s177
      %p179 = scmp.eq.s32.totalorder %s27, 0
      %p180 = por %p178, %p179
      %s182 = sadd.s32 %s181, 1
      %p185 = scmp.eq.s32.totalorder %s21, 1
      %p186 = scmp.ne.s32.totalorder %s181, %s183
      %p187 = scmp.eq.s32.totalorder %s21, 0
      %p188 = por %p186, %p187
      %p189 = scmp.ne.s32.totalorder %s181, %s183
      %p190 = scmp.eq.s32.totalorder %s26, 1
      %p191 = por %p189, %p190
      %p192 = scmp.ne.s32.totalorder %s183, %s184
      %p193 = scmp.eq.s32.totalorder %s26, 0
      %p194 = por %p192, %p193
      %p195 = scmp.ne.s32.totalorder %s183, %s184
      %p196 = scmp.eq.s32.totalorder %s27, 1
      %p197 = por %p195, %p196
      %p199 = scmp.ne.s32.totalorder %s184, %s198
      %p200 = scmp.eq.s32.totalorder %s27, 0
      %p201 = por %p199, %p200
      %s203 = sadd.s32 %s202, 1
      %p206 = scmp.eq.s32.totalorder %s21, 1
      %p207 = scmp.ne.s32.totalorder %s202, %s204
      %p208 = scmp.eq.s32.totalorder %s21, 0
      %p209 = por %p207, %p208
      %p210 = scmp.ne.s32.totalorder %s202, %s204
      %p211 = scmp.eq.s32.totalorder %s26, 1
      %p212 = por %p210, %p211
      %p213 = scmp.ne.s32.totalorder %s204, %s205
      %p214 = scmp.eq.s32.totalorder %s26, 0
      %p215 = por %p213, %p214
      %p216 = scmp.ne.s32.totalorder %s204, %s205
      %p217 = scmp.eq.s32.totalorder %s27, 1
      %p218 = por %p216, %p217
      %p220 = scmp.ne.s32.totalorder %s205, %s219
      %p221 = scmp.eq.s32.totalorder %s27, 0
      %p222 = por %p220, %p221
      %s224 = sadd.s32 %s223, 1
      %p227 = scmp.eq.s32.totalorder %s21, 1
      %p228 = scmp.ne.s32.totalorder %s223, %s225
      %p229 = scmp.eq.s32.totalorder %s21, 0
      %p230 = por %p228, %p229
      %p231 = scmp.ne.s32.totalorder %s223, %s225
      %p232 = scmp.eq.s32.totalorder %s26, 1
      %p233 = por %p231, %p232
      %p234 = scmp.ne.s32.totalorder %s225, %s226
      %p235 = scmp.eq.s32.totalorder %s26, 0
      %p236 = por %p234, %p235
      %p237 = scmp.ne.s32.totalorder %s225, %s226
      %p238 = scmp.eq.s32.totalorder %s27, 1
      %p239 = por %p237, %p238
      %p241 = scmp.ne.s32.totalorder %s226, %s240
      %p242 = scmp.eq.s32.totalorder %s27, 0
      %p243 = por %p241, %p242
      %s245 = sadd.s32 %s244, 1
      %p248 = scmp.eq.s32.totalorder %s21, 1
      %p249 = scmp.ne.s32.totalorder %s244, %s246
      %p250 = scmp.eq.s32.totalorder %s21, 0
      %p251 = por %p249, %p250
      %p252 = scmp.ne.s32.totalorder %s244, %s246
      %p253 = scmp.eq.s32.totalorder %s26, 1
      %p254 = por %p252, %p253
      %p255 = scmp.ne.s32.totalorder %s246, %s247
      %p256 = scmp.eq.s32.totalorder %s26, 0
      %p257 = por %p255, %p256
      %p258 = scmp.ne.s32.totalorder %s246, %s247
      %p259 = scmp.eq.s32.totalorder %s27, 1
      %p260 = por %p258, %p259
      %p262 = scmp.ne.s32.totalorder %s247, %s261
      %p263 = scmp.eq.s32.totalorder %s27, 0
      %p264 = por %p262, %p263
      %s266 = sadd.s32 %s265, 1
      %p269 = scmp.eq.s32.totalorder %s21, 1
      %p270 = scmp.ne.s32.totalorder %s265, %s267
      %p271 = scmp.eq.s32.totalorder %s21, 0
      %p272 = por %p270, %p271
      %p273 = scmp.ne.s32.totalorder %s265, %s267
      %p274 = scmp.eq.s32.totalorder %s26, 1
      %p275 = por %p273, %p274
      %p276 = scmp.ne.s32.totalorder %s267, %s268
      %p277 = scmp.eq.s32.totalorder %s26, 0
      %p278 = por %p276, %p277
      %p279 = scmp.ne.s32.totalorder %s267, %s268
      %p280 = scmp.eq.s32.totalorder %s27, 1
      %p281 = por %p279, %p280
      %p283 = scmp.ne.s32.totalorder %s268, %s282
      %p284 = scmp.eq.s32.totalorder %s27, 0
      %p285 = por %p283, %p284
      %s286 = ssub.s32 %s21, %s28
      %p287 = scmp.eq.s32.totalorder %s286, 0
      %s289 = sadd.s32 %s288, 1
      %s290 = scalar_select %p287, %s288, %s289
      %p293 = pneg %p287
      %p294 = scmp.eq.s32.totalorder %s21, 1
      %p295 = por %p293, %p294
      %p296 = scmp.ne.s32.totalorder %s288, %s291
      %p297 = scmp.eq.s32.totalorder %s21, 0
      %p298 = por %p296, %p297
      %p299 = scmp.ne.s32.totalorder %s288, %s291
      %p300 = scmp.eq.s32.totalorder %s26, 1
      %p301 = por %p299, %p300
      %p302 = scmp.ne.s32.totalorder %s291, %s292
      %p303 = scmp.eq.s32.totalorder %s26, 0
      %p304 = por %p302, %p303
      %p305 = scmp.ne.s32.totalorder %s291, %s292
      %p306 = scmp.eq.s32.totalorder %s27, 1
      %p307 = por %p305, %p306
      %p309 = scmp.ne.s32.totalorder %s292, %s308
      %p310 = scmp.eq.s32.totalorder %s27, 0
      %p311 = por %p309, %p310
      %p312 = scmp.le.s32.totalorder 1, %s21
      %p313 = scmp.lt.s32.totalorder %s21, 3
      %p314 = pnand %p312, %p313
      %p315 = pneg %p314
      // Predicated region
      $region9: #{tpu_custom_call.1} parent=5 // pred_check
        _
      $region10: #{tpu_custom_call.1} parent=5 // pred_check_branch
        %317 = sbr.rel (%p314) target = $region12
      $region11: #{tpu_custom_call.1} parent=5 // pred_region
        %s318 = ssub.s32 %s21, 1
        // Predicated region
        $region13: #{tpu_custom_call.1} parent=11 // pred_check
          %p319 = pneg %p68
        $region14: #{tpu_custom_call.1} parent=11 // pred_check_branch
          %321 = sbr.rel (%p319) target = $region16
        $region15: #{tpu_custom_call.1} parent=11 // pred_region
          _
        $region16: #{tpu_custom_call.1} parent=11 // pred_fallthru
          _
        // Predicated region
        $region17: #{tpu_custom_call.1} parent=11 // pred_check
          %p322 = pneg %p89
        $region18: #{tpu_custom_call.1} parent=11 // pred_check_branch
          %324 = sbr.rel (%p322) target = $region20
        $region19: #{tpu_custom_call.1} parent=11 // pred_region
          _
        $region20: #{tpu_custom_call.1} parent=11 // pred_fallthru
          _
        // Predicated region
        $region21: #{tpu_custom_call.1} parent=11 // pred_check
          %p325 = pneg %p110
        $region22: #{tpu_custom_call.1} parent=11 // pred_check_branch
          %327 = sbr.rel (%p325) target = $region24
        $region23: #{tpu_custom_call.1} parent=11 // pred_region
          _
        $region24: #{tpu_custom_call.1} parent=11 // pred_fallthru
          _
        // Predicated region
        $region25: #{tpu_custom_call.1} parent=11 // pred_check
          %p328 = pneg %p131
        $region26: #{tpu_custom_call.1} parent=11 // pred_check_branch
          %330 = sbr.rel (%p328) target = $region28
        $region27: #{tpu_custom_call.1} parent=11 // pred_region
          _
        $region28: #{tpu_custom_call.1} parent=11 // pred_fallthru
          _
        // Predicated region
        $region29: #{tpu_custom_call.1} parent=11 // pred_check
          %p331 = pneg %p152
        $region30: #{tpu_custom_call.1} parent=11 // pred_check_branch
          %333 = sbr.rel (%p331) target = $region32
        $region31: #{tpu_custom_call.1} parent=11 // pred_region
          _
        $region32: #{tpu_custom_call.1} parent=11 // pred_fallthru
          _
        // Predicated region
        $region33: #{tpu_custom_call.1} parent=11 // pred_check
          %p334 = pneg %p173
        $region34: #{tpu_custom_call.1} parent=11 // pred_check_branch
          %336 = sbr.rel (%p334) target = $region36
        $region35: #{tpu_custom_call.1} parent=11 // pred_region
          _
        $region36: #{tpu_custom_call.1} parent=11 // pred_fallthru
          _
        // Predicated region
        $region37: #{tpu_custom_call.1} parent=11 // pred_check
          %p337 = pneg %p194
        $region38: #{tpu_custom_call.1} parent=11 // pred_check_branch
          %339 = sbr.rel (%p337) target = $region40
        $region39: #{tpu_custom_call.1} parent=11 // pred_region
          _
        $region40: #{tpu_custom_call.1} parent=11 // pred_fallthru
          _
        // Predicated region
        $region41: #{tpu_custom_call.1} parent=11 // pred_check
          %p340 = pneg %p215
        $region42: #{tpu_custom_call.1} parent=11 // pred_check_branch
          %342 = sbr.rel (%p340) target = $region44
        $region43: #{tpu_custom_call.1} parent=11 // pred_region
          _
        $region44: #{tpu_custom_call.1} parent=11 // pred_fallthru
          _
        // Predicated region
        $region45: #{tpu_custom_call.1} parent=11 // pred_check
          %p343 = pneg %p236
        $region46: #{tpu_custom_call.1} parent=11 // pred_check_branch
          %345 = sbr.rel (%p343) target = $region48
        $region47: #{tpu_custom_call.1} parent=11 // pred_region
          _
        $region48: #{tpu_custom_call.1} parent=11 // pred_fallthru
          _
        // Predicated region
        $region49: #{tpu_custom_call.1} parent=11 // pred_check
          %p346 = pneg %p257
        $region50: #{tpu_custom_call.1} parent=11 // pred_check_branch
          %348 = sbr.rel (%p346) target = $region52
        $region51: #{tpu_custom_call.1} parent=11 // pred_region
          _
        $region52: #{tpu_custom_call.1} parent=11 // pred_fallthru
          _
        // Predicated region
        $region53: #{tpu_custom_call.1} parent=11 // pred_check
          %p349 = pneg %p278
        $region54: #{tpu_custom_call.1} parent=11 // pred_check_branch
          %351 = sbr.rel (%p349) target = $region56
        $region55: #{tpu_custom_call.1} parent=11 // pred_region
          _
        $region56: #{tpu_custom_call.1} parent=11 // pred_fallthru
          _
      $region12: #{tpu_custom_call.1} parent=5 // pred_fallthru
        _
      %p352 = scmp.lt.s32.totalorder %s21, 2
      // Predicated region
      $region57: #{tpu_custom_call.1} parent=5 // pred_check
        %p353 = pneg %p352
      $region58: #{tpu_custom_call.1} parent=5 // pred_check_branch
        %355 = sbr.rel (%p353) target = $region60
      $region59: #{tpu_custom_call.1} parent=5 // pred_region
        // Predicated region
        $region61: #{tpu_custom_call.1} parent=59 // pred_check
          %p356 = pneg %p41
        $region62: #{tpu_custom_call.1} parent=59 // pred_check_branch
          %358 = sbr.rel (%p356) target = $region64
        $region63: #{tpu_custom_call.1} parent=59 // pred_region
          %p359 = scmp.lt.s32.totalorder %s21, 1
          %s360 = scalar_select %p359, %s21, 1
          %s361 = smul.addr %s360, 8
          %s362 = scalar_lea.vmem %s0, %s361
        $region64: #{tpu_custom_call.1} parent=59 // pred_fallthru
          _
      $region60: #{tpu_custom_call.1} parent=5 // pred_fallthru
        _
      %p363 = scmp.le.s32.totalorder 1, %s21
      %p364 = scmp.lt.s32.totalorder %s21, 3
      %p365 = pnand %p363, %p364
      %p366 = pneg %p365
      // Predicated region
      $region65: #{tpu_custom_call.1} parent=5 // pred_check
        _
      $region66: #{tpu_custom_call.1} parent=5 // pred_check_branch
        %368 = sbr.rel (%p365) target = $region68
      $region67: #{tpu_custom_call.1} parent=5 // pred_region
        %s369 = ssub.s32 %s21, 1
        %p370 = scmp.lt.s32.totalorder %s26, 1
        %s371 = scalar_select %p370, %s26, 1
        %s372 = smul.addr %s371, 8
        %s373 = scalar_lea.vmem %s0, %s372
        %p374 = pneg %p47
        %p375 = pneg %p44
        %p376 = pneg %p68
        %p377 = pneg %p65
        %p378 = pneg %p89
        %p379 = pneg %p86
        %p380 = pneg %p110
        %p381 = pneg %p107
        %p382 = pneg %p131
        %p383 = pneg %p128
        %p384 = pneg %p152
        %p385 = pneg %p149
        %p386 = pneg %p173
        %p387 = pneg %p170
        %p388 = pneg %p194
        %p389 = pneg %p191
        %p390 = pneg %p215
        %p391 = pneg %p212
        %p392 = pneg %p236
        %p393 = pneg %p233
        %p394 = pneg %p257
        %p395 = pneg %p254
        %p396 = pneg %p278
        %p397 = pneg %p275
        %p398 = pneg %p304
        %p399 = pneg %p301
        %s400 = sand.u32 %s291, 1
        %s401 = scalar_lea.sflag [#allocation3], %s400
        %s402 = sand.u32 %s291, 1
        %s403 = smul.addr %s402, 8
        %s404 = scalar_lea.vmem [#allocation2], %s403
        %p405 = scmp.lt.s32.totalorder %s26, 1
        %s406 = scalar_select %p405, %s26, 1
        %s407 = smul.addr %s406, 8
        %s408 = scalar_lea.vmem %s0, %s407
        %v410 = vld [vmem:[%s408] sm:$0xff]
        %v411 = vpack.c.bf16 %v410, %v410
        %v412 = vld [vmem:[%s1] sm:$0xf]
        %v413 = vld [vmem:[%s1 + $0x4] sm:$0xf]
        %v414 = vld [vmem:[%s1 + $0x8] sm:$0xf]
        %v415 = vld [vmem:[%s1 + $0xc] sm:$0xf]
        %v416 = vld [vmem:[%s2] sm:$0x1]
        %v418 = vlaneseq
        %v419 = vshrl.u32 %v418, 7
        %v420 = vsub.s32 0, %v419
        %v421 = vrot.slane %v416, %v420
        %v427 = vunpack.c.l.b16 %v412
        %v428 = vunpack.c.l.b16 %v413
        %v429 = vunpack.c.l.b16 %v414
        %v430 = vunpack.c.l.b16 %v415
        %v431 = vpack.c.b16 %v428, %v427
        %v432 = vpack.c.b16 %v430, %v429
        %vm435 = vcmask 261120
        %v437 = vsel %vm435, %v411, 0
        %439 = vmatprep.subr.bf16.mxu0 0
        %440 = vmatpush1.bf16.msra.mxu0 %v431
        %441 = vmatprep.subr.bf16.mxu0 0
        %442 = vmatpush1.bf16.msra.mxu0 %v432
        %443 = vmatprep.subr.bf16.mxu0 0
        %444 = vmatpush1.bf16.msra.mxu0 0
        %445 = vmatprep.subr.bf16.mxu0 0
        %446 = vmatpush1.bf16.msra.mxu0 0
        %447 = vmatprep.subr.bf16.mxu0 0
        %448 = vmatpush1.bf16.msra.mxu0 0
        %449 = vmatprep.subr.bf16.mxu0 0
        %450 = vmatpush1.bf16.msra.mxu0 0
        %451 = vmatprep.subr.bf16.mxu0 0
        %452 = vmatpush1.bf16.msra.mxu0 0
        %453 = vmatprep.subr.bf16.mxu0 0
        %454 = vmatpush1.bf16.msra.mxu0 0
        %455 = vmatprep.subr.bf16.mxu0 0
        %456 = vmatpush1.bf16.msra.mxu0 0
        %457 = vmatprep.subr.bf16.mxu0 0
        %458 = vmatpush1.bf16.msra.mxu0 0
        %459 = vmatprep.subr.bf16.mxu0 0
        %460 = vmatpush1.bf16.msra.mxu0 0
        %461 = vmatprep.subr.bf16.mxu0 0
        %462 = vmatpush1.bf16.msra.mxu0 0
        %463 = vmatprep.subr.bf16.mxu0 0
        %464 = vmatpush1.bf16.msra.mxu0 0
        %465 = vmatprep.subr.bf16.mxu0 0
        %466 = vmatpush1.bf16.msra.mxu0 0
        %467 = vmatprep.subr.bf16.mxu0 0
        %468 = vmatpush1.bf16.msra.mxu0 0
        %469 = vmatprep.subr.bf16.mxu0 0
        %470 = vmatpush1.bf16.msra.mxu0 0
        %471 = vmatprep.mubr.bf16.mxu0 0
        %472 = vmatmul.mubr.bf16.gmra.mrb[0].mxu0 %v437
        %v473 = vpop.f32.mrb[0].mxu0
        %v474 = vadd.f32 %v421, %v473
        %v475 = vpop.f32.mrb[0].mxu0
        %v476 = vpop.f32.mrb[0].mxu0
        %v477 = vpop.f32.mrb[0].mxu0
        %478 = vdwg.mxu0
        %v479 = vpack.c.bf16 %v474, %v474
        %v480 = vld [vmem:[%s3] sm:$0xf]
        %v481 = vld [vmem:[%s3 + $0x4] sm:$0xf]
        %v482 = vld [vmem:[%s4] sm:$0x1]
        %v484 = vlaneseq
        %v485 = vshrl.u32 %v484, 7
        %v486 = vsub.s32 0, %v485
        %v487 = vrot.slane %v482, %v486
        %v491 = vunpack.c.l.b16 %v480
        %v492 = vunpack.c.l.b16 %v481
        %v493 = vpack.c.b16 %v492, %v491
        %vm495 = vcmask 130048
        %v497 = vsel %vm495, %v479, 0
        %499 = vmatprep.subr.bf16.mxu0 0
        %500 = vmatpush1.bf16.msra.mxu0 %v493
        %501 = vmatprep.subr.bf16.mxu0 0
        %502 = vmatpush1.bf16.msra.mxu0 0
        %503 = vmatprep.subr.bf16.mxu0 0
        %504 = vmatpush1.bf16.msra.mxu0 0
        %505 = vmatprep.subr.bf16.mxu0 0
        %506 = vmatpush1.bf16.msra.mxu0 0
        %507 = vmatprep.subr.bf16.mxu0 0
        %508 = vmatpush1.bf16.msra.mxu0 0
        %509 = vmatprep.subr.bf16.mxu0 0
        %510 = vmatpush1.bf16.msra.mxu0 0
        %511 = vmatprep.subr.bf16.mxu0 0
        %512 = vmatpush1.bf16.msra.mxu0 0
        %513 = vmatprep.subr.bf16.mxu0 0
        %514 = vmatpush1.bf16.msra.mxu0 0
        %515 = vmatprep.subr.bf16.mxu0 0
        %516 = vmatpush1.bf16.msra.mxu0 0
        %517 = vmatprep.subr.bf16.mxu0 0
        %518 = vmatpush1.bf16.msra.mxu0 0
        %519 = vmatprep.subr.bf16.mxu0 0
        %520 = vmatpush1.bf16.msra.mxu0 0
        %521 = vmatprep.subr.bf16.mxu0 0
        %522 = vmatpush1.bf16.msra.mxu0 0
        %523 = vmatprep.subr.bf16.mxu0 0
        %524 = vmatpush1.bf16.msra.mxu0 0
        %525 = vmatprep.subr.bf16.mxu0 0
        %526 = vmatpush1.bf16.msra.mxu0 0
        %527 = vmatprep.subr.bf16.mxu0 0
        %528 = vmatpush1.bf16.msra.mxu0 0
        %529 = vmatprep.subr.bf16.mxu0 0
        %530 = vmatpush1.bf16.msra.mxu0 0
        %531 = vmatprep.mubr.bf16.mxu0 0
        %532 = vmatmul.mubr.bf16.gmra.mrb[0].mxu0 %v497
        %v533 = vpop.f32.mrb[0].mxu0
        %v534 = vadd.f32 %v487, %v533
        %v535 = vpop.f32.mrb[0].mxu0
        %v536 = vpop.f32.mrb[0].mxu0
        %v537 = vpop.f32.mrb[0].mxu0
        %538 = vdwg.mxu0
        %s539 = scalar_lea.vmem %s3, 32
        %v540 = vld [vmem:[%s539] sm:$0xf]
        %v541 = vld [vmem:[%s539 + $0x4] sm:$0xf]
        %s542 = scalar_lea.vmem %s4, 4
        %v543 = vld [vmem:[%s542] sm:$0x1]
        %v545 = vlaneseq
        %v546 = vshrl.u32 %v545, 7
        %v547 = vsub.s32 0, %v546
        %v548 = vrot.slane %v543, %v547
        %v552 = vunpack.c.l.b16 %v540
        %v553 = vunpack.c.l.b16 %v541
        %v554 = vpack.c.b16 %v553, %v552
        %556 = vmatprep.subr.bf16.mxu0 0
        %557 = vmatpush1.bf16.msra.mxu0 %v554
        %558 = vmatprep.subr.bf16.mxu0 0
        %559 = vmatpush1.bf16.msra.mxu0 0
        %560 = vmatprep.subr.bf16.mxu0 0
        %561 = vmatpush1.bf16.msra.mxu0 0
        %562 = vmatprep.subr.bf16.mxu0 0
        %563 = vmatpush1.bf16.msra.mxu0 0
        %564 = vmatprep.subr.bf16.mxu0 0
        %565 = vmatpush1.bf16.msra.mxu0 0
        %566 = vmatprep.subr.bf16.mxu0 0
        %567 = vmatpush1.bf16.msra.mxu0 0
        %568 = vmatprep.subr.bf16.mxu0 0
        %569 = vmatpush1.bf16.msra.mxu0 0
        %570 = vmatprep.subr.bf16.mxu0 0
        %571 = vmatpush1.bf16.msra.mxu0 0
        %572 = vmatprep.subr.bf16.mxu0 0
        %573 = vmatpush1.bf16.msra.mxu0 0
        %574 = vmatprep.subr.bf16.mxu0 0
        %575 = vmatpush1.bf16.msra.mxu0 0
        %576 = vmatprep.subr.bf16.mxu0 0
        %577 = vmatpush1.bf16.msra.mxu0 0
        %578 = vmatprep.subr.bf16.mxu0 0
        %579 = vmatpush1.bf16.msra.mxu0 0
        %580 = vmatprep.subr.bf16.mxu0 0
        %581 = vmatpush1.bf16.msra.mxu0 0
        %582 = vmatprep.subr.bf16.mxu0 0
        %583 = vmatpush1.bf16.msra.mxu0 0
        %584 = vmatprep.subr.bf16.mxu0 0
        %585 = vmatpush1.bf16.msra.mxu0 0
        %586 = vmatprep.subr.bf16.mxu0 0
        %587 = vmatpush1.bf16.msra.mxu0 0
        %588 = vmatprep.mubr.bf16.mxu0 0
        %589 = vmatmul.mubr.bf16.gmra.mrb[0].mxu0 %v497
        %v590 = vpop.f32.mrb[0].mxu0
        %v591 = vadd.f32 %v548, %v590
        %v592 = vpop.f32.mrb[0].mxu0
        %v593 = vpop.f32.mrb[0].mxu0
        %v594 = vpop.f32.mrb[0].mxu0
        %595 = vdwg.mxu0
        %s596 = scalar_lea.vmem %s3, 64
        %v597 = vld [vmem:[%s596] sm:$0xf]
        %v598 = vld [vmem:[%s596 + $0x4] sm:$0xf]
        %s599 = scalar_lea.vmem %s4, 8
        %v600 = vld [vmem:[%s599] sm:$0x1]
        %v602 = vlaneseq
        %v603 = vshrl.u32 %v602, 7
        %v604 = vsub.s32 0, %v603
        %v605 = vrot.slane %v600, %v604
        %v609 = vunpack.c.l.b16 %v597
        %v610 = vunpack.c.l.b16 %v598
        %v611 = vpack.c.b16 %v610, %v609
        %613 = vmatprep.subr.bf16.mxu0 0
        %614 = vmatpush1.bf16.msra.mxu0 %v611
        %615 = vmatprep.subr.bf16.mxu0 0
        %616 = vmatpush1.bf16.msra.mxu0 0
        %617 = vmatprep.subr.bf16.mxu0 0
        %618 = vmatpush1.bf16.msra.mxu0 0
        %619 = vmatprep.subr.bf16.mxu0 0
        %620 = vmatpush1.bf16.msra.mxu0 0
        %621 = vmatprep.subr.bf16.mxu0 0
        %622 = vmatpush1.bf16.msra.mxu0 0
        %623 = vmatprep.subr.bf16.mxu0 0
        %624 = vmatpush1.bf16.msra.mxu0 0
        %625 = vmatprep.subr.bf16.mxu0 0
        %626 = vmatpush1.bf16.msra.mxu0 0
        %627 = vmatprep.subr.bf16.mxu0 0
        %628 = vmatpush1.bf16.msra.mxu0 0
        %629 = vmatprep.subr.bf16.mxu0 0
        %630 = vmatpush1.bf16.msra.mxu0 0
        %631 = vmatprep.subr.bf16.mxu0 0
        %632 = vmatpush1.bf16.msra.mxu0 0
        %633 = vmatprep.subr.bf16.mxu0 0
        %634 = vmatpush1.bf16.msra.mxu0 0
        %635 = vmatprep.subr.bf16.mxu0 0
        %636 = vmatpush1.bf16.msra.mxu0 0
        %637 = vmatprep.subr.bf16.mxu0 0
        %638 = vmatpush1.bf16.msra.mxu0 0
        %639 = vmatprep.subr.bf16.mxu0 0
        %640 = vmatpush1.bf16.msra.mxu0 0
        %641 = vmatprep.subr.bf16.mxu0 0
        %642 = vmatpush1.bf16.msra.mxu0 0
        %643 = vmatprep.subr.bf16.mxu0 0
        %644 = vmatpush1.bf16.msra.mxu0 0
        %645 = vmatprep.mubr.bf16.mxu0 0
        %646 = vmatmul.mubr.bf16.gmra.mrb[0].mxu0 %v497
        %v647 = vpop.f32.mrb[0].mxu0
        %v648 = vadd.f32 %v605, %v647
        %v649 = vpop.f32.mrb[0].mxu0
        %v650 = vpop.f32.mrb[0].mxu0
        %v651 = vpop.f32.mrb[0].mxu0
        %652 = vdwg.mxu0
        %v653 = vpack.c.bf16 %v534, %v534
        %v654 = vpack.c.bf16 %v591, %v591
        %vm655 = vcmask 31744
        %v657 = vsel %vm655, %v653, 0
        %v660 = vsel %vm655, %v654, 0
        %662 = vmatprep.subr.bf16.mxu0 0
        %663 = vmatpush1.bf16.xpose.msra.mxu0 %v660
        %664 = vmatprep.subr.bf16.mxu0 0
        %665 = vmatpush1.bf16.xpose.msra.mxu0 0
        %666 = vmatprep.subr.bf16.mxu0 0
        %667 = vmatpush1.bf16.xpose.msra.mxu0 0
        %668 = vmatprep.subr.bf16.mxu0 0
        %669 = vmatpush1.bf16.xpose.msra.mxu0 0
        %670 = vmatprep.subr.bf16.mxu0 0
        %671 = vmatpush1.bf16.xpose.msra.mxu0 0
        %672 = vmatprep.subr.bf16.mxu0 0
        %673 = vmatpush1.bf16.xpose.msra.mxu0 0
        %674 = vmatprep.subr.bf16.mxu0 0
        %675 = vmatpush1.bf16.xpose.msra.mxu0 0
        %676 = vmatprep.subr.bf16.mxu0 0
        %677 = vmatpush1.bf16.xpose.msra.mxu0 0
        %678 = vmatprep.subr.bf16.mxu0 0
        %679 = vmatpush1.bf16.xpose.msra.mxu0 0
        %680 = vmatprep.subr.bf16.mxu0 0
        %681 = vmatpush1.bf16.xpose.msra.mxu0 0
        %682 = vmatprep.subr.bf16.mxu0 0
        %683 = vmatpush1.bf16.xpose.msra.mxu0 0
        %684 = vmatprep.subr.bf16.mxu0 0
        %685 = vmatpush1.bf16.xpose.msra.mxu0 0
        %686 = vmatprep.subr.bf16.mxu0 0
        %687 = vmatpush1.bf16.xpose.msra.mxu0 0
        %688 = vmatprep.subr.bf16.mxu0 0
        %689 = vmatpush1.bf16.xpose.msra.mxu0 0
        %690 = vmatprep.subr.bf16.mxu0 0
        %691 = vmatpush1.bf16.xpose.msra.mxu0 0
        %692 = vmatprep.subr.bf16.mxu0 0
        %693 = vmatpush1.bf16.xpose.msra.mxu0 0
        %694 = vmatprep.mubr.bf16.mxu0 0
        %695 = vmatmul.mubr.bf16.gmra.mrb[0].mxu0 %v657
        %v696 = vpop.f32.mrb[0].mxu0
        %v697 = vadd.f32 0.0, %v696
        %v698 = vpop.f32.mrb[0].mxu0
        %v699 = vpop.f32.mrb[0].mxu0
        %v700 = vpop.f32.mrb[0].mxu0
        %701 = vdwg.mxu0
        %vm702 = vcmask 64512
        %v703 = vsel %vm702, %v697, -inf
        %704 = vmax.xlane.f32.xlu0 %v703
        %v705 = vpop.xlane.xlu0 %704
        %v706 = vsub.f32 %v697, %v705
        %v707 = vmul.f32 %v706, 1.442695
        %v708 = vpow.pop %v707
        %v709 = vsel %vm702, %v708, 0.0
        %710 = vadd.xlane.f32.xlu0 %v709
        %v711 = vpop.xlane.xlu0 %710
        %v712 = vrcp.pop %v711
        %v713 = vmul.f32 %v708, %v712
        %v714 = vpack.c.bf16 %v713, %v713
        %v715 = vpack.c.bf16 %v648, %v648
        %v717 = vsel %vm702, %v714, 0
        %vm719 = vcmask 1043456
        %v721 = vsel %vm719, %v715, 0
        %723 = vmatprep.subr.bf16.mxu0 0
        %724 = vmatpush1.bf16.msra.mxu0 %v721
        %725 = vmatprep.subr.bf16.mxu0 0
        %726 = vmatpush1.bf16.msra.mxu0 0
        %727 = vmatprep.subr.bf16.mxu0 0
        %728 = vmatpush1.bf16.msra.mxu0 0
        %729 = vmatprep.subr.bf16.mxu0 0
        %730 = vmatpush1.bf16.msra.mxu0 0
        %731 = vmatprep.subr.bf16.mxu0 0
        %732 = vmatpush1.bf16.msra.mxu0 0
        %733 = vmatprep.subr.bf16.mxu0 0
        %734 = vmatpush1.bf16.msra.mxu0 0
        %735 = vmatprep.subr.bf16.mxu0 0
        %736 = vmatpush1.bf16.msra.mxu0 0
        %737 = vmatprep.subr.bf16.mxu0 0
        %738 = vmatpush1.bf16.msra.mxu0 0
        %739 = vmatprep.subr.bf16.mxu0 0
        %740 = vmatpush1.bf16.msra.mxu0 0
        %741 = vmatprep.subr.bf16.mxu0 0
        %742 = vmatpush1.bf16.msra.mxu0 0
        %743 = vmatprep.subr.bf16.mxu0 0
        %744 = vmatpush1.bf16.msra.mxu0 0
        %745 = vmatprep.subr.bf16.mxu0 0
        %746 = vmatpush1.bf16.msra.mxu0 0
        %747 = vmatprep.subr.bf16.mxu0 0
        %748 = vmatpush1.bf16.msra.mxu0 0
        %749 = vmatprep.subr.bf16.mxu0 0
        %750 = vmatpush1.bf16.msra.mxu0 0
        %751 = vmatprep.subr.bf16.mxu0 0
        %752 = vmatpush1.bf16.msra.mxu0 0
        %753 = vmatprep.subr.bf16.mxu0 0
        %754 = vmatpush1.bf16.msra.mxu0 0
        %755 = vmatprep.mubr.bf16.mxu0 0
        %756 = vmatmul.mubr.bf16.gmra.mrb[0].mxu0 %v717
        %v757 = vpop.f32.mrb[0].mxu0
        %v758 = vadd.f32 0.0, %v757
        %v759 = vpop.f32.mrb[0].mxu0
        %v760 = vpop.f32.mrb[0].mxu0
        %v761 = vpop.f32.mrb[0].mxu0
        %762 = vdwg.mxu0
        %v763 = vpack.c.bf16 %v758, %v758
        %v764 = vld [vmem:[%s5] sm:$0x3]
        %s765 = scalar_lea.vmem %s3, 8
        %v766 = vld [vmem:[%s765] sm:$0xf]
        %v767 = vld [vmem:[%s765 + $0x4] sm:$0xf]
        %s768 = scalar_lea.vmem %s4, 1
        %v769 = vld [vmem:[%s768] sm:$0x1]
        %v771 = vlaneseq
        %v772 = vshrl.u32 %v771, 7
        %v773 = vsub.s32 0, %v772
        %v774 = vrot.slane %v769, %v773
        %v778 = vunpack.c.l.b16 %v766
        %v779 = vunpack.c.l.b16 %v767
        %v780 = vpack.c.b16 %v779, %v778
        %782 = vmatprep.subr.bf16.mxu0 0
        %783 = vmatpush1.bf16.msra.mxu0 %v780
        %784 = vmatprep.subr.bf16.mxu0 0
        %785 = vmatpush1.bf16.msra.mxu0 0
        %786 = vmatprep.subr.bf16.mxu0 0
        %787 = vmatpush1.bf16.msra.mxu0 0
        %788 = vmatprep.subr.bf16.mxu0 0
        %789 = vmatpush1.bf16.msra.mxu0 0
        %790 = vmatprep.subr.bf16.mxu0 0
        %791 = vmatpush1.bf16.msra.mxu0 0
        %792 = vmatprep.subr.bf16.mxu0 0
        %793 = vmatpush1.bf16.msra.mxu0 0
        %794 = vmatprep.subr.bf16.mxu0 0
        %795 = vmatpush1.bf16.msra.mxu0 0
        %796 = vmatprep.subr.bf16.mxu0 0
        %797 = vmatpush1.bf16.msra.mxu0 0
        %798 = vmatprep.subr.bf16.mxu0 0
        %799 = vmatpush1.bf16.msra.mxu0 0
        %800 = vmatprep.subr.bf16.mxu0 0
        %801 = vmatpush1.bf16.msra.mxu0 0
        %802 = vmatprep.subr.bf16.mxu0 0
        %803 = vmatpush1.bf16.msra.mxu0 0
        %804 = vmatprep.subr.bf16.mxu0 0
        %805 = vmatpush1.bf16.msra.mxu0 0
        %806 = vmatprep.subr.bf16.mxu0 0
        %807 = vmatpush1.bf16.msra.mxu0 0
        %808 = vmatprep.subr.bf16.mxu0 0
        %809 = vmatpush1.bf16.msra.mxu0 0
        %810 = vmatprep.subr.bf16.mxu0 0
        %811 = vmatpush1.bf16.msra.mxu0 0
        %812 = vmatprep.subr.bf16.mxu0 0
        %813 = vmatpush1.bf16.msra.mxu0 0
        %814 = vmatprep.mubr.bf16.mxu0 0
        %815 = vmatmul.mubr.bf16.gmra.mrb[0].mxu0 %v497
        %v816 = vpop.f32.mrb[0].mxu0
        %v817 = vadd.f32 %v774, %v816
        %v818 = vpop.f32.mrb[0].mxu0
        %v819 = vpop.f32.mrb[0].mxu0
        %v820 = vpop.f32.mrb[0].mxu0
        %821 = vdwg.mxu0
        %s822 = scalar_lea.vmem %s3, 40
        %v823 = vld [vmem:[%s822] sm:$0xf]
        %v824 = vld [vmem:[%s822 + $0x4] sm:$0xf]
        %s825 = scalar_lea.vmem %s4, 5
        %v826 = vld [vmem:[%s825] sm:$0x1]
        %v828 = vlaneseq
        %v829 = vshrl.u32 %v828, 7
        %v830 = vsub.s32 0, %v829
        %v831 = vrot.slane %v826, %v830
        %v835 = vunpack.c.l.b16 %v823
        %v836 = vunpack.c.l.b16 %v824
        %v837 = vpack.c.b16 %v836, %v835
        %839 = vmatprep.subr.bf16.mxu0 0
        %840 = vmatpush1.bf16.msra.mxu0 %v837
        %841 = vmatprep.subr.bf16.mxu0 0
        %842 = vmatpush1.bf16.msra.mxu0 0
        %843 = vmatprep.subr.bf16.mxu0 0
        %844 = vmatpush1.bf16.msra.mxu0 0
        %845 = vmatprep.subr.bf16.mxu0 0
        %846 = vmatpush1.bf16.msra.mxu0 0
        %847 = vmatprep.subr.bf16.mxu0 0
        %848 = vmatpush1.bf16.msra.mxu0 0
        %849 = vmatprep.subr.bf16.mxu0 0
        %850 = vmatpush1.bf16.msra.mxu0 0
        %851 = vmatprep.subr.bf16.mxu0 0
        %852 = vmatpush1.bf16.msra.mxu0 0
        %853 = vmatprep.subr.bf16.mxu0 0
        %854 = vmatpush1.bf16.msra.mxu0 0
        %855 = vmatprep.subr.bf16.mxu0 0
        %856 = vmatpush1.bf16.msra.mxu0 0
        %857 = vmatprep.subr.bf16.mxu0 0
        %858 = vmatpush1.bf16.msra.mxu0 0
        %859 = vmatprep.subr.bf16.mxu0 0
        %860 = vmatpush1.bf16.msra.mxu0 0
        %861 = vmatprep.subr.bf16.mxu0 0
        %862 = vmatpush1.bf16.msra.mxu0 0
        %863 = vmatprep.subr.bf16.mxu0 0
        %864 = vmatpush1.bf16.msra.mxu0 0
        %865 = vmatprep.subr.bf16.mxu0 0
        %866 = vmatpush1.bf16.msra.mxu0 0
        %867 = vmatprep.subr.bf16.mxu0 0
        %868 = vmatpush1.bf16.msra.mxu0 0
        %869 = vmatprep.subr.bf16.mxu0 0
        %870 = vmatpush1.bf16.msra.mxu0 0
        %871 = vmatprep.mubr.bf16.mxu0 0
        %872 = vmatmul.mubr.bf16.gmra.mrb[0].mxu0 %v497
        %v873 = vpop.f32.mrb[0].mxu0
        %v874 = vadd.f32 %v831, %v873
        %v875 = vpop.f32.mrb[0].mxu0
        %v876 = vpop.f32.mrb[0].mxu0
        %v877 = vpop.f32.mrb[0].mxu0
        %878 = vdwg.mxu0
        %s879 = scalar_lea.vmem %s3, 72
        %v880 = vld [vmem:[%s879] sm:$0xf]
        %v881 = vld [vmem:[%s879 + $0x4] sm:$0xf]
        %s882 = scalar_lea.vmem %s4, 9
        %v883 = vld [vmem:[%s882] sm:$0x1]
        %v885 = vlaneseq
        %v886 = vshrl.u32 %v885, 7
        %v887 = vsub.s32 0, %v886
        %v888 = vrot.slane %v883, %v887
        %v892 = vunpack.c.l.b16 %v880
        %v893 = vunpack.c.l.b16 %v881
        %v894 = vpack.c.b16 %v893, %v892
        %896 = vmatprep.subr.bf16.mxu0 0
        %897 = vmatpush1.bf16.msra.mxu0 %v894
        %898 = vmatprep.subr.bf16.mxu0 0
        %899 = vmatpush1.bf16.msra.mxu0 0
        %900 = vmatprep.subr.bf16.mxu0 0
        %901 = vmatpush1.bf16.msra.mxu0 0
        %902 = vmatprep.subr.bf16.mxu0 0
        %903 = vmatpush1.bf16.msra.mxu0 0
        %904 = vmatprep.subr.bf16.mxu0 0
        %905 = vmatpush1.bf16.msra.mxu0 0
        %906 = vmatprep.subr.bf16.mxu0 0
        %907 = vmatpush1.bf16.msra.mxu0 0
        %908 = vmatprep.subr.bf16.mxu0 0
        %909 = vmatpush1.bf16.msra.mxu0 0
        %910 = vmatprep.subr.bf16.mxu0 0
        %911 = vmatpush1.bf16.msra.mxu0 0
        %912 = vmatprep.subr.bf16.mxu0 0
        %913 = vmatpush1.bf16.msra.mxu0 0
        %914 = vmatprep.subr.bf16.mxu0 0
        %915 = vmatpush1.bf16.msra.mxu0 0
        %916 = vmatprep.subr.bf16.mxu0 0
        %917 = vmatpush1.bf16.msra.mxu0 0
        %918 = vmatprep.subr.bf16.mxu0 0
        %919 = vmatpush1.bf16.msra.mxu0 0
        %920 = vmatprep.subr.bf16.mxu0 0
        %921 = vmatpush1.bf16.msra.mxu0 0
        %922 = vmatprep.subr.bf16.mxu0 0
        %923 = vmatpush1.bf16.msra.mxu0 0
        %924 = vmatprep.subr.bf16.mxu0 0
        %925 = vmatpush1.bf16.msra.mxu0 0
        %926 = vmatprep.subr.bf16.mxu0 0
        %927 = vmatpush1.bf16.msra.mxu0 0
        %928 = vmatprep.mubr.bf16.mxu0 0
        %929 = vmatmul.mubr.bf16.gmra.mrb[0].mxu0 %v497
        %v930 = vpop.f32.mrb[0].mxu0
        %v931 = vadd.f32 %v888, %v930
        %v932 = vpop.f32.mrb[0].mxu0
        %v933 = vpop.f32.mrb[0].mxu0
        %v934 = vpop.f32.mrb[0].mxu0
        %935 = vdwg.mxu0
        %v936 = vpack.c.bf16 %v817, %v817
        %v937 = vpack.c.bf16 %v874, %v874
        %v939 = vsel %vm655, %v936, 0
        %v942 = vsel %vm655, %v937, 0
        %944 = vmatprep.subr.bf16.mxu0 0
        %945 = vmatpush1.bf16.xpose.msra.mxu0 %v942
        %946 = vmatprep.subr.bf16.mxu0 0
        %947 = vmatpush1.bf16.xpose.msra.mxu0 0
        %948 = vmatprep.subr.bf16.mxu0 0
        %949 = vmatpush1.bf16.xpose.msra.mxu0 0
        %950 = vmatprep.subr.bf16.mxu0 0
        %951 = vmatpush1.bf16.xpose.msra.mxu0 0
        %952 = vmatprep.subr.bf16.mxu0 0
        %953 = vmatpush1.bf16.xpose.msra.mxu0 0
        %954 = vmatprep.subr.bf16.mxu0 0
        %955 = vmatpush1.bf16.xpose.msra.mxu0 0
        %956 = vmatprep.subr.bf16.mxu0 0
        %957 = vmatpush1.bf16.xpose.msra.mxu0 0
        %958 = vmatprep.subr.bf16.mxu0 0
        %959 = vmatpush1.bf16.xpose.msra.mxu0 0
        %960 = vmatprep.subr.bf16.mxu0 0
        %961 = vmatpush1.bf16.xpose.msra.mxu0 0
        %962 = vmatprep.subr.bf16.mxu0 0
        %963 = vmatpush1.bf16.xpose.msra.mxu0 0
        %964 = vmatprep.subr.bf16.mxu0 0
        %965 = vmatpush1.bf16.xpose.msra.mxu0 0
        %966 = vmatprep.subr.bf16.mxu0 0
        %967 = vmatpush1.bf16.xpose.msra.mxu0 0
        %968 = vmatprep.subr.bf16.mxu0 0
        %969 = vmatpush1.bf16.xpose.msra.mxu0 0
        %970 = vmatprep.subr.bf16.mxu0 0
        %971 = vmatpush1.bf16.xpose.msra.mxu0 0
        %972 = vmatprep.subr.bf16.mxu0 0
        %973 = vmatpush1.bf16.xpose.msra.mxu0 0
        %974 = vmatprep.subr.bf16.mxu0 0
        %975 = vmatpush1.bf16.xpose.msra.mxu0 0
        %976 = vmatprep.mubr.bf16.mxu0 0
        %977 = vmatmul.mubr.bf16.gmra.mrb[0].mxu0 %v939
        %v978 = vpop.f32.mrb[0].mxu0
        %v979 = vadd.f32 0.0, %v978
        %v980 = vpop.f32.mrb[0].mxu0
        %v981 = vpop.f32.mrb[0].mxu0
        %v982 = vpop.f32.mrb[0].mxu0
        %983 = vdwg.mxu0
        %v984 = vsel %vm702, %v979, -inf
        %985 = vmax.xlane.f32.xlu0 %v984
        %v986 = vpop.xlane.xlu0 %985
        %v987 = vsub.f32 %v979, %v986
        %v988 = vmul.f32 %v987, 1.442695
        %v989 = vpow.pop %v988
        %v990 = vsel %vm702, %v989, 0.0
        %991 = vadd.xlane.f32.xlu0 %v990
        %v992 = vpop.xlane.xlu0 %991
        %v993 = vrcp.pop %v992
        %v994 = vmul.f32 %v989, %v993
        %v995 = vpack.c.bf16 %v994, %v994
        %v996 = vpack.c.bf16 %v931, %v931
        %v998 = vsel %vm702, %v995, 0
        %v1001 = vsel %vm719, %v996, 0
        %1003 = vmatprep.subr.bf16.mxu0 0
        %1004 = vmatpush1.bf16.msra.mxu0 %v1001
        %1005 = vmatprep.subr.bf16.mxu0 0
        %1006 = vmatpush1.bf16.msra.mxu0 0
        %1007 = vmatprep.subr.bf16.mxu0 0
        %1008 = vmatpush1.bf16.msra.mxu0 0
        %1009 = vmatprep.subr.bf16.mxu0 0
        %1010 = vmatpush1.bf16.msra.mxu0 0
        %1011 = vmatprep.subr.bf16.mxu0 0
        %1012 = vmatpush1.bf16.msra.mxu0 0
        %1013 = vmatprep.subr.bf16.mxu0 0
        %1014 = vmatpush1.bf16.msra.mxu0 0
        %1015 = vmatprep.subr.bf16.mxu0 0
        %1016 = vmatpush1.bf16.msra.mxu0 0
        %1017 = vmatprep.subr.bf16.mxu0 0
        %1018 = vmatpush1.bf16.msra.mxu0 0
        %1019 = vmatprep.subr.bf16.mxu0 0
        %1020 = vmatpush1.bf16.msra.mxu0 0
        %1021 = vmatprep.subr.bf16.mxu0 0
        %1022 = vmatpush1.bf16.msra.mxu0 0
        %1023 = vmatprep.subr.bf16.mxu0 0
        %1024 = vmatpush1.bf16.msra.mxu0 0
        %1025 = vmatprep.subr.bf16.mxu0 0
        %1026 = vmatpush1.bf16.msra.mxu0 0
        %1027 = vmatprep.subr.bf16.mxu0 0
        %1028 = vmatpush1.bf16.msra.mxu0 0
        %1029 = vmatprep.subr.bf16.mxu0 0
        %1030 = vmatpush1.bf16.msra.mxu0 0
        %1031 = vmatprep.subr.bf16.mxu0 0
        %1032 = vmatpush1.bf16.msra.mxu0 0
        %1033 = vmatprep.subr.bf16.mxu0 0
        %1034 = vmatpush1.bf16.msra.mxu0 0
        %1035 = vmatprep.mubr.bf16.mxu0 0
        %1036 = vmatmul.mubr.bf16.gmra.mrb[0].mxu0 %v998
        %v1037 = vpop.f32.mrb[0].mxu0
        %v1038 = vadd.f32 0.0, %v1037
        %v1039 = vpop.f32.mrb[0].mxu0
        %v1040 = vpop.f32.mrb[0].mxu0
        %v1041 = vpop.f32.mrb[0].mxu0
        %1042 = vdwg.mxu0
        %v1043 = vpack.c.bf16 %v1038, %v1038
        %s1044 = scalar_lea.vmem %s5, 2
        %v1045 = vld [vmem:[%s1044] sm:$0x3]
        %v1047 = vsel %vm655, %v1043, 0
        %vm1049 = vcmask 1041408
        %v1051 = vsel %vm1049, %v1045, 0
        %1053 = vmatprep.subr.bf16.mxu0 0
        %1054 = vmatpush1.bf16.msra.mxu0 %v1051
        %1055 = vmatprep.subr.bf16.mxu0 0
        %1056 = vmatpush1.bf16.msra.mxu0 0
        %1057 = vmatprep.subr.bf16.mxu0 0
        %1058 = vmatpush1.bf16.msra.mxu0 0
        %1059 = vmatprep.subr.bf16.mxu0 0
        %1060 = vmatpush1.bf16.msra.mxu0 0
        %1061 = vmatprep.subr.bf16.mxu0 0
        %1062 = vmatpush1.bf16.msra.mxu0 0
        %1063 = vmatprep.subr.bf16.mxu0 0
        %1064 = vmatpush1.bf16.msra.mxu0 0
        %1065 = vmatprep.subr.bf16.mxu0 0
        %1066 = vmatpush1.bf16.msra.mxu0 0
        %1067 = vmatprep.subr.bf16.mxu0 0
        %1068 = vmatpush1.bf16.msra.mxu0 0
        %1069 = vmatprep.subr.bf16.mxu0 0
        %1070 = vmatpush1.bf16.msra.mxu0 0
        %1071 = vmatprep.subr.bf16.mxu0 0
        %1072 = vmatpush1.bf16.msra.mxu0 0
        %1073 = vmatprep.subr.bf16.mxu0 0
        %1074 = vmatpush1.bf16.msra.mxu0 0
        %1075 = vmatprep.subr.bf16.mxu0 0
        %1076 = vmatpush1.bf16.msra.mxu0 0
        %1077 = vmatprep.subr.bf16.mxu0 0
        %1078 = vmatpush1.bf16.msra.mxu0 0
        %1079 = vmatprep.subr.bf16.mxu0 0
        %1080 = vmatpush1.bf16.msra.mxu0 0
        %1081 = vmatprep.subr.bf16.mxu0 0
        %1082 = vmatpush1.bf16.msra.mxu0 0
        %1083 = vmatprep.subr.bf16.mxu0 0
        %1084 = vmatpush1.bf16.msra.mxu0 0
        %1085 = vmatprep.mubr.bf16.mxu0 0
        %1086 = vmatmul.mubr.bf16.gmra.mrb[0].mxu0 %v1047
        %v1087 = vpop.f32.mrb[0].mxu0
        %v1088 = vadd.f32 0.0, %v1087
        %v1089 = vpop.f32.mrb[0].mxu0
        %v1090 = vpop.f32.mrb[0].mxu0
        %v1091 = vpop.f32.mrb[0].mxu0
        %1092 = vdwg.mxu0
        %v1094 = vsel %vm655, %v763, 0
        %v1097 = vsel %vm1049, %v764, 0
        %1099 = vmatprep.subr.bf16.mxu0 0
        %1100 = vmatpush1.bf16.msra.mxu0 %v1097
        %1101 = vmatprep.subr.bf16.mxu0 0
        %1102 = vmatpush1.bf16.msra.mxu0 0
        %1103 = vmatprep.subr.bf16.mxu0 0
        %1104 = vmatpush1.bf16.msra.mxu0 0
        %1105 = vmatprep.subr.bf16.mxu0 0
        %1106 = vmatpush1.bf16.msra.mxu0 0
        %1107 = vmatprep.subr.bf16.mxu0 0
        %1108 = vmatpush1.bf16.msra.mxu0 0
        %1109 = vmatprep.subr.bf16.mxu0 0
        %1110 = vmatpush1.bf16.msra.mxu0 0
        %1111 = vmatprep.subr.bf16.mxu0 0
        %1112 = vmatpush1.bf16.msra.mxu0 0
        %1113 = vmatprep.subr.bf16.mxu0 0
        %1114 = vmatpush1.bf16.msra.mxu0 0
        %1115 = vmatprep.subr.bf16.mxu0 0
        %1116 = vmatpush1.bf16.msra.mxu0 0
        %1117 = vmatprep.subr.bf16.mxu0 0
        %1118 = vmatpush1.bf16.msra.mxu0 0
        %1119 = vmatprep.subr.bf16.mxu0 0
        %1120 = vmatpush1.bf16.msra.mxu0 0
        %1121 = vmatprep.subr.bf16.mxu0 0
        %1122 = vmatpush1.bf16.msra.mxu0 0
        %1123 = vmatprep.subr.bf16.mxu0 0
        %1124 = vmatpush1.bf16.msra.mxu0 0
        %1125 = vmatprep.subr.bf16.mxu0 0
        %1126 = vmatpush1.bf16.msra.mxu0 0
        %1127 = vmatprep.subr.bf16.mxu0 0
        %1128 = vmatpush1.bf16.msra.mxu0 0
        %1129 = vmatprep.subr.bf16.mxu0 0
        %1130 = vmatpush1.bf16.msra.mxu0 0
        %1131 = vmatprep.mubr.bf16.mxu0 0
        %1132 = vmatmul.mubr.bf16.gmra.mrb[0].mxu0 %v1094
        %v1133 = vpop.f32.mrb[0].mxu0
        %v1134 = vadd.f32 %v1088, %v1133
        %v1135 = vpop.f32.mrb[0].mxu0
        %v1136 = vpop.f32.mrb[0].mxu0
        %v1137 = vpop.f32.mrb[0].mxu0
        %1138 = vdwg.mxu0
        %s1139 = scalar_lea.vmem %s3, 16
        %v1140 = vld [vmem:[%s1139] sm:$0xf]
        %v1141 = vld [vmem:[%s1139 + $0x4] sm:$0xf]
        %s1142 = scalar_lea.vmem %s4, 2
        %v1143 = vld [vmem:[%s1142] sm:$0x1]
        %v1145 = vlaneseq
        %v1146 = vshrl.u32 %v1145, 7
        %v1147 = vsub.s32 0, %v1146
        %v1148 = vrot.slane %v1143, %v1147
        %v1152 = vunpack.c.l.b16 %v1140
        %v1153 = vunpack.c.l.b16 %v1141
        %v1154 = vpack.c.b16 %v1153, %v1152
        %1156 = vmatprep.subr.bf16.mxu0 0
        %1157 = vmatpush1.bf16.msra.mxu0 %v1154
        %1158 = vmatprep.subr.bf16.mxu0 0
        %1159 = vmatpush1.bf16.msra.mxu0 0
        %1160 = vmatprep.subr.bf16.mxu0 0
        %1161 = vmatpush1.bf16.msra.mxu0 0
        %1162 = vmatprep.subr.bf16.mxu0 0
        %1163 = vmatpush1.bf16.msra.mxu0 0
        %1164 = vmatprep.subr.bf16.mxu0 0
        %1165 = vmatpush1.bf16.msra.mxu0 0
        %1166 = vmatprep.subr.bf16.mxu0 0
        %1167 = vmatpush1.bf16.msra.mxu0 0
        %1168 = vmatprep.subr.bf16.mxu0 0
        %1169 = vmatpush1.bf16.msra.mxu0 0
        %1170 = vmatprep.subr.bf16.mxu0 0
        %1171 = vmatpush1.bf16.msra.mxu0 0
        %1172 = vmatprep.subr.bf16.mxu0 0
        %1173 = vmatpush1.bf16.msra.mxu0 0
        %1174 = vmatprep.subr.bf16.mxu0 0
        %1175 = vmatpush1.bf16.msra.mxu0 0
        %1176 = vmatprep.subr.bf16.mxu0 0
        %1177 = vmatpush1.bf16.msra.mxu0 0
        %1178 = vmatprep.subr.bf16.mxu0 0
        %1179 = vmatpush1.bf16.msra.mxu0 0
        %1180 = vmatprep.subr.bf16.mxu0 0
        %1181 = vmatpush1.bf16.msra.mxu0 0
        %1182 = vmatprep.subr.bf16.mxu0 0
        %1183 = vmatpush1.bf16.msra.mxu0 0
        %1184 = vmatprep.subr.bf16.mxu0 0
        %1185 = vmatpush1.bf16.msra.mxu0 0
        %1186 = vmatprep.subr.bf16.mxu0 0
        %1187 = vmatpush1.bf16.msra.mxu0 0
        %1188 = vmatprep.mubr.bf16.mxu0 0
        %1189 = vmatmul.mubr.bf16.gmra.mrb[0].mxu0 %v497
        %v1190 = vpop.f32.mrb[0].mxu0
        %v1191 = vadd.f32 %v1148, %v1190
        %v1192 = vpop.f32.mrb[0].mxu0
        %v1193 = vpop.f32.mrb[0].mxu0
        %v1194 = vpop.f32.mrb[0].mxu0
        %1195 = vdwg.mxu0
        %s1196 = scalar_lea.vmem %s3, 48
        %v1197 = vld [vmem:[%s1196] sm:$0xf]
        %v1198 = vld [vmem:[%s1196 + $0x4] sm:$0xf]
        %s1199 = scalar_lea.vmem %s4, 6
        %v1200 = vld [vmem:[%s1199] sm:$0x1]
        %v1202 = vlaneseq
        %v1203 = vshrl.u32 %v1202, 7
        %v1204 = vsub.s32 0, %v1203
        %v1205 = vrot.slane %v1200, %v1204
        %v1209 = vunpack.c.l.b16 %v1197
        %v1210 = vunpack.c.l.b16 %v1198
        %v1211 = vpack.c.b16 %v1210, %v1209
        %1213 = vmatprep.subr.bf16.mxu0 0
        %1214 = vmatpush1.bf16.msra.mxu0 %v1211
        %1215 = vmatprep.subr.bf16.mxu0 0
        %1216 = vmatpush1.bf16.msra.mxu0 0
        %1217 = vmatprep.subr.bf16.mxu0 0
        %1218 = vmatpush1.bf16.msra.mxu0 0
        %1219 = vmatprep.subr.bf16.mxu0 0
        %1220 = vmatpush1.bf16.msra.mxu0 0
        %1221 = vmatprep.subr.bf16.mxu0 0
        %1222 = vmatpush1.bf16.msra.mxu0 0
        %1223 = vmatprep.subr.bf16.mxu0 0
        %1224 = vmatpush1.bf16.msra.mxu0 0
        %1225 = vmatprep.subr.bf16.mxu0 0
        %1226 = vmatpush1.bf16.msra.mxu0 0
        %1227 = vmatprep.subr.bf16.mxu0 0
        %1228 = vmatpush1.bf16.msra.mxu0 0
        %1229 = vmatprep.subr.bf16.mxu0 0
        %1230 = vmatpush1.bf16.msra.mxu0 0
        %1231 = vmatprep.subr.bf16.mxu0 0
        %1232 = vmatpush1.bf16.msra.mxu0 0
        %1233 = vmatprep.subr.bf16.mxu0 0
        %1234 = vmatpush1.bf16.msra.mxu0 0
        %1235 = vmatprep.subr.bf16.mxu0 0
        %1236 = vmatpush1.bf16.msra.mxu0 0
        %1237 = vmatprep.subr.bf16.mxu0 0
        %1238 = vmatpush1.bf16.msra.mxu0 0
        %1239 = vmatprep.subr.bf16.mxu0 0
        %1240 = vmatpush1.bf16.msra.mxu0 0
        %1241 = vmatprep.subr.bf16.mxu0 0
        %1242 = vmatpush1.bf16.msra.mxu0 0
        %1243 = vmatprep.subr.bf16.mxu0 0
        %1244 = vmatpush1.bf16.msra.mxu0 0
        %1245 = vmatprep.mubr.bf16.mxu0 0
        %1246 = vmatmul.mubr.bf16.gmra.mrb[0].mxu0 %v497
        %v1247 = vpop.f32.mrb[0].mxu0
        %v1248 = vadd.f32 %v1205, %v1247
        %v1249 = vpop.f32.mrb[0].mxu0
        %v1250 = vpop.f32.mrb[0].mxu0
        %v1251 = vpop.f32.mrb[0].mxu0
        %1252 = vdwg.mxu0
        %s1253 = scalar_lea.vmem %s3, 80
        %v1254 = vld [vmem:[%s1253] sm:$0xf]
        %v1255 = vld [vmem:[%s1253 + $0x4] sm:$0xf]
        %s1256 = scalar_lea.vmem %s4, 10
        %v1257 = vld [vmem:[%s1256] sm:$0x1]
        %v1259 = vlaneseq
        %v1260 = vshrl.u32 %v1259, 7
        %v1261 = vsub.s32 0, %v1260
        %v1262 = vrot.slane %v1257, %v1261
        %v1266 = vunpack.c.l.b16 %v1254
        %v1267 = vunpack.c.l.b16 %v1255
        %v1268 = vpack.c.b16 %v1267, %v1266
        %1270 = vmatprep.subr.bf16.mxu0 0
        %1271 = vmatpush1.bf16.msra.mxu0 %v1268
        %1272 = vmatprep.subr.bf16.mxu0 0
        %1273 = vmatpush1.bf16.msra.mxu0 0
        %1274 = vmatprep.subr.bf16.mxu0 0
        %1275 = vmatpush1.bf16.msra.mxu0 0
        %1276 = vmatprep.subr.bf16.mxu0 0
        %1277 = vmatpush1.bf16.msra.mxu0 0
        %1278 = vmatprep.subr.bf16.mxu0 0
        %1279 = vmatpush1.bf16.msra.mxu0 0
        %1280 = vmatprep.subr.bf16.mxu0 0
        %1281 = vmatpush1.bf16.msra.mxu0 0
        %1282 = vmatprep.subr.bf16.mxu0 0
        %1283 = vmatpush1.bf16.msra.mxu0 0
        %1284 = vmatprep.subr.bf16.mxu0 0
        %1285 = vmatpush1.bf16.msra.mxu0 0
        %1286 = vmatprep.subr.bf16.mxu0 0
        %1287 = vmatpush1.bf16.msra.mxu0 0
        %1288 = vmatprep.subr.bf16.mxu0 0
        %1289 = vmatpush1.bf16.msra.mxu0 0
        %1290 = vmatprep.subr.bf16.mxu0 0
        %1291 = vmatpush1.bf16.msra.mxu0 0
        %1292 = vmatprep.subr.bf16.mxu0 0
        %1293 = vmatpush1.bf16.msra.mxu0 0
        %1294 = vmatprep.subr.bf16.mxu0 0
        %1295 = vmatpush1.bf16.msra.mxu0 0
        %1296 = vmatprep.subr.bf16.mxu0 0
        %1297 = vmatpush1.bf16.msra.mxu0 0
        %1298 = vmatprep.subr.bf16.mxu0 0
        %1299 = vmatpush1.bf16.msra.mxu0 0
        %1300 = vmatprep.subr.bf16.mxu0 0
        %1301 = vmatpush1.bf16.msra.mxu0 0
        %1302 = vmatprep.mubr.bf16.mxu0 0
        %1303 = vmatmul.mubr.bf16.gmra.mrb[0].mxu0 %v497
        %v1304 = vpop.f32.mrb[0].mxu0
        %v1305 = vadd.f32 %v1262, %v1304
        %v1306 = vpop.f32.mrb[0].mxu0
        %v1307 = vpop.f32.mrb[0].mxu0
        %v1308 = vpop.f32.mrb[0].mxu0
        %1309 = vdwg.mxu0
        %v1310 = vpack.c.bf16 %v1191, %v1191
        %v1311 = vpack.c.bf16 %v1248, %v1248
        %v1313 = vsel %vm655, %v1310, 0
        %v1316 = vsel %vm655, %v1311, 0
        %1318 = vmatprep.subr.bf16.mxu0 0
        %1319 = vmatpush1.bf16.xpose.msra.mxu0 %v1316
        %1320 = vmatprep.subr.bf16.mxu0 0
        %1321 = vmatpush1.bf16.xpose.msra.mxu0 0
        %1322 = vmatprep.subr.bf16.mxu0 0
        %1323 = vmatpush1.bf16.xpose.msra.mxu0 0
        %1324 = vmatprep.subr.bf16.mxu0 0
        %1325 = vmatpush1.bf16.xpose.msra.mxu0 0
        %1326 = vmatprep.subr.bf16.mxu0 0
        %1327 = vmatpush1.bf16.xpose.msra.mxu0 0
        %1328 = vmatprep.subr.bf16.mxu0 0
        %1329 = vmatpush1.bf16.xpose.msra.mxu0 0
        %1330 = vmatprep.subr.bf16.mxu0 0
        %1331 = vmatpush1.bf16.xpose.msra.mxu0 0
        %1332 = vmatprep.subr.bf16.mxu0 0
        %1333 = vmatpush1.bf16.xpose.msra.mxu0 0
        %1334 = vmatprep.subr.bf16.mxu0 0
        %1335 = vmatpush1.bf16.xpose.msra.mxu0 0
        %1336 = vmatprep.subr.bf16.mxu0 0
        %1337 = vmatpush1.bf16.xpose.msra.mxu0 0
        %1338 = vmatprep.subr.bf16.mxu0 0
        %1339 = vmatpush1.bf16.xpose.msra.mxu0 0
        %1340 = vmatprep.subr.bf16.mxu0 0
        %1341 = vmatpush1.bf16.xpose.msra.mxu0 0
        %1342 = vmatprep.subr.bf16.mxu0 0
        %1343 = vmatpush1.bf16.xpose.msra.mxu0 0
        %1344 = vmatprep.subr.bf16.mxu0 0
        %1345 = vmatpush1.bf16.xpose.msra.mxu0 0
        %1346 = vmatprep.subr.bf16.mxu0 0
        %1347 = vmatpush1.bf16.xpose.msra.mxu0 0
        %1348 = vmatprep.subr.bf16.mxu0 0
        %1349 = vmatpush1.bf16.xpose.msra.mxu0 0
        %1350 = vmatprep.mubr.bf16.mxu0 0
        %1351 = vmatmul.mubr.bf16.gmra.mrb[0].mxu0 %v1313
        %v1352 = vpop.f32.mrb[0].mxu0
        %v1353 = vadd.f32 0.0, %v1352
        %v1354 = vpop.f32.mrb[0].mxu0
        %v1355 = vpop.f32.mrb[0].mxu0
        %v1356 = vpop.f32.mrb[0].mxu0
        %1357 = vdwg.mxu0
        %v1358 = vsel %vm702, %v1353, -inf
        %1359 = vmax.xlane.f32.xlu0 %v1358
        %v1360 = vpop.xlane.xlu0 %1359
        %v1361 = vsub.f32 %v1353, %v1360
        %v1362 = vmul.f32 %v1361, 1.442695
        %v1363 = vpow.pop %v1362
        %v1364 = vsel %vm702, %v1363, 0.0
        %1365 = vadd.xlane.f32.xlu0 %v1364
        %v1366 = vpop.xlane.xlu0 %1365
        %v1367 = vrcp.pop %v1366
        %v1368 = vmul.f32 %v1363, %v1367
        %v1369 = vpack.c.bf16 %v1368, %v1368
        %v1370 = vpack.c.bf16 %v1305, %v1305
        %v1372 = vsel %vm702, %v1369, 0
        %v1375 = vsel %vm719, %v1370, 0
        %1377 = vmatprep.subr.bf16.mxu0 0
        %1378 = vmatpush1.bf16.msra.mxu0 %v1375
        %1379 = vmatprep.subr.bf16.mxu0 0
        %1380 = vmatpush1.bf16.msra.mxu0 0
        %1381 = vmatprep.subr.bf16.mxu0 0
        %1382 = vmatpush1.bf16.msra.mxu0 0
        %1383 = vmatprep.subr.bf16.mxu0 0
        %1384 = vmatpush1.bf16.msra.mxu0 0
        %1385 = vmatprep.subr.bf16.mxu0 0
        %1386 = vmatpush1.bf16.msra.mxu0 0
        %1387 = vmatprep.subr.bf16.mxu0 0
        %1388 = vmatpush1.bf16.msra.mxu0 0
        %1389 = vmatprep.subr.bf16.mxu0 0
        %1390 = vmatpush1.bf16.msra.mxu0 0
        %1391 = vmatprep.subr.bf16.mxu0 0
        %1392 = vmatpush1.bf16.msra.mxu0 0
        %1393 = vmatprep.subr.bf16.mxu0 0
        %1394 = vmatpush1.bf16.msra.mxu0 0
        %1395 = vmatprep.subr.bf16.mxu0 0
        %1396 = vmatpush1.bf16.msra.mxu0 0
        %1397 = vmatprep.subr.bf16.mxu0 0
        %1398 = vmatpush1.bf16.msra.mxu0 0
        %1399 = vmatprep.subr.bf16.mxu0 0
        %1400 = vmatpush1.bf16.msra.mxu0 0
        %1401 = vmatprep.subr.bf16.mxu0 0
        %1402 = vmatpush1.bf16.msra.mxu0 0
        %1403 = vmatprep.subr.bf16.mxu0 0
        %1404 = vmatpush1.bf16.msra.mxu0 0
        %1405 = vmatprep.subr.bf16.mxu0 0
        %1406 = vmatpush1.bf16.msra.mxu0 0
        %1407 = vmatprep.subr.bf16.mxu0 0
        %1408 = vmatpush1.bf16.msra.mxu0 0
        %1409 = vmatprep.mubr.bf16.mxu0 0
        %1410 = vmatmul.mubr.bf16.gmra.mrb[0].mxu0 %v1372
        %v1411 = vpop.f32.mrb[0].mxu0
        %v1412 = vadd.f32 0.0, %v1411
        %v1413 = vpop.f32.mrb[0].mxu0
        %v1414 = vpop.f32.mrb[0].mxu0
        %v1415 = vpop.f32.mrb[0].mxu0
        %1416 = vdwg.mxu0
        %v1417 = vpack.c.bf16 %v1412, %v1412
        %s1418 = scalar_lea.vmem %s5, 4
        %v1419 = vld [vmem:[%s1418] sm:$0x3]
        %v1421 = vsel %vm655, %v1417, 0
        %v1424 = vsel %vm1049, %v1419, 0
        %1426 = vmatprep.subr.bf16.mxu0 0
        %1427 = vmatpush1.bf16.msra.mxu0 %v1424
        %1428 = vmatprep.subr.bf16.mxu0 0
        %1429 = vmatpush1.bf16.msra.mxu0 0
        %1430 = vmatprep.subr.bf16.mxu0 0
        %1431 = vmatpush1.bf16.msra.mxu0 0
        %1432 = vmatprep.subr.bf16.mxu0 0
        %1433 = vmatpush1.bf16.msra.mxu0 0
        %1434 = vmatprep.subr.bf16.mxu0 0
        %1435 = vmatpush1.bf16.msra.mxu0 0
        %1436 = vmatprep.subr.bf16.mxu0 0
        %1437 = vmatpush1.bf16.msra.mxu0 0
        %1438 = vmatprep.subr.bf16.mxu0 0
        %1439 = vmatpush1.bf16.msra.mxu0 0
        %1440 = vmatprep.subr.bf16.mxu0 0
        %1441 = vmatpush1.bf16.msra.mxu0 0
        %1442 = vmatprep.subr.bf16.mxu0 0
        %1443 = vmatpush1.bf16.msra.mxu0 0
        %1444 = vmatprep.subr.bf16.mxu0 0
        %1445 = vmatpush1.bf16.msra.mxu0 0
        %1446 = vmatprep.subr.bf16.mxu0 0
        %1447 = vmatpush1.bf16.msra.mxu0 0
        %1448 = vmatprep.subr.bf16.mxu0 0
        %1449 = vmatpush1.bf16.msra.mxu0 0
        %1450 = vmatprep.subr.bf16.mxu0 0
        %1451 = vmatpush1.bf16.msra.mxu0 0
        %1452 = vmatprep.subr.bf16.mxu0 0
        %1453 = vmatpush1.bf16.msra.mxu0 0
        %1454 = vmatprep.subr.bf16.mxu0 0
        %1455 = vmatpush1.bf16.msra.mxu0 0
        %1456 = vmatprep.subr.bf16.mxu0 0
        %1457 = vmatpush1.bf16.msra.mxu0 0
        %1458 = vmatprep.mubr.bf16.mxu0 0
        %1459 = vmatmul.mubr.bf16.gmra.mrb[0].mxu0 %v1421
        %v1460 = vpop.f32.mrb[0].mxu0
        %v1461 = vadd.f32 0.0, %v1460
        %v1462 = vpop.f32.mrb[0].mxu0
        %v1463 = vpop.f32.mrb[0].mxu0
        %v1464 = vpop.f32.mrb[0].mxu0
        %1465 = vdwg.mxu0
        %v1466 = vadd.f32 %v1134, %v1461
        %s1467 = scalar_lea.vmem %s3, 24
        %v1468 = vld [vmem:[%s1467] sm:$0xf]
        %v1469 = vld [vmem:[%s1467 + $0x4] sm:$0xf]
        %s1470 = scalar_lea.vmem %s4, 3
        %v1471 = vld [vmem:[%s1470] sm:$0x1]
        %v1473 = vlaneseq
        %v1474 = vshrl.u32 %v1473, 7
        %v1475 = vsub.s32 0, %v1474
        %v1476 = vrot.slane %v1471, %v1475
        %v1480 = vunpack.c.l.b16 %v1468
        %v1481 = vunpack.c.l.b16 %v1469
        %v1482 = vpack.c.b16 %v1481, %v1480
        %1484 = vmatprep.subr.bf16.mxu0 0
        %1485 = vmatpush1.bf16.msra.mxu0 %v1482
        %1486 = vmatprep.subr.bf16.mxu0 0
        %1487 = vmatpush1.bf16.msra.mxu0 0
        %1488 = vmatprep.subr.bf16.mxu0 0
        %1489 = vmatpush1.bf16.msra.mxu0 0
        %1490 = vmatprep.subr.bf16.mxu0 0
        %1491 = vmatpush1.bf16.msra.mxu0 0
        %1492 = vmatprep.subr.bf16.mxu0 0
        %1493 = vmatpush1.bf16.msra.mxu0 0
        %1494 = vmatprep.subr.bf16.mxu0 0
        %1495 = vmatpush1.bf16.msra.mxu0 0
        %1496 = vmatprep.subr.bf16.mxu0 0
        %1497 = vmatpush1.bf16.msra.mxu0 0
        %1498 = vmatprep.subr.bf16.mxu0 0
        %1499 = vmatpush1.bf16.msra.mxu0 0
        %1500 = vmatprep.subr.bf16.mxu0 0
        %1501 = vmatpush1.bf16.msra.mxu0 0
        %1502 = vmatprep.subr.bf16.mxu0 0
        %1503 = vmatpush1.bf16.msra.mxu0 0
        %1504 = vmatprep.subr.bf16.mxu0 0
        %1505 = vmatpush1.bf16.msra.mxu0 0
        %1506 = vmatprep.subr.bf16.mxu0 0
        %1507 = vmatpush1.bf16.msra.mxu0 0
        %1508 = vmatprep.subr.bf16.mxu0 0
        %1509 = vmatpush1.bf16.msra.mxu0 0
        %1510 = vmatprep.subr.bf16.mxu0 0
        %1511 = vmatpush1.bf16.msra.mxu0 0
        %1512 = vmatprep.subr.bf16.mxu0 0
        %1513 = vmatpush1.bf16.msra.mxu0 0
        %1514 = vmatprep.subr.bf16.mxu0 0
        %1515 = vmatpush1.bf16.msra.mxu0 0
        %1516 = vmatprep.mubr.bf16.mxu0 0
        %1517 = vmatmul.mubr.bf16.gmra.mrb[0].mxu0 %v497
        %v1518 = vpop.f32.mrb[0].mxu0
        %v1519 = vadd.f32 %v1476, %v1518
        %v1520 = vpop.f32.mrb[0].mxu0
        %v1521 = vpop.f32.mrb[0].mxu0
        %v1522 = vpop.f32.mrb[0].mxu0
        %1523 = vdwg.mxu0
        %s1524 = scalar_lea.vmem %s3, 56
        %v1525 = vld [vmem:[%s1524] sm:$0xf]
        %v1526 = vld [vmem:[%s1524 + $0x4] sm:$0xf]
        %s1527 = scalar_lea.vmem %s4, 7
        %v1528 = vld [vmem:[%s1527] sm:$0x1]
        %v1530 = vlaneseq
        %v1531 = vshrl.u32 %v1530, 7
        %v1532 = vsub.s32 0, %v1531
        %v1533 = vrot.slane %v1528, %v1532
        %v1537 = vunpack.c.l.b16 %v1525
        %v1538 = vunpack.c.l.b16 %v1526
        %v1539 = vpack.c.b16 %v1538, %v1537
        %1541 = vmatprep.subr.bf16.mxu0 0
        %1542 = vmatpush1.bf16.msra.mxu0 %v1539
        %1543 = vmatprep.subr.bf16.mxu0 0
        %1544 = vmatpush1.bf16.msra.mxu0 0
        %1545 = vmatprep.subr.bf16.mxu0 0
        %1546 = vmatpush1.bf16.msra.mxu0 0
        %1547 = vmatprep.subr.bf16.mxu0 0
        %1548 = vmatpush1.bf16.msra.mxu0 0
        %1549 = vmatprep.subr.bf16.mxu0 0
        %1550 = vmatpush1.bf16.msra.mxu0 0
        %1551 = vmatprep.subr.bf16.mxu0 0
        %1552 = vmatpush1.bf16.msra.mxu0 0
        %1553 = vmatprep.subr.bf16.mxu0 0
        %1554 = vmatpush1.bf16.msra.mxu0 0
        %1555 = vmatprep.subr.bf16.mxu0 0
        %1556 = vmatpush1.bf16.msra.mxu0 0
        %1557 = vmatprep.subr.bf16.mxu0 0
        %1558 = vmatpush1.bf16.msra.mxu0 0
        %1559 = vmatprep.subr.bf16.mxu0 0
        %1560 = vmatpush1.bf16.msra.mxu0 0
        %1561 = vmatprep.subr.bf16.mxu0 0
        %1562 = vmatpush1.bf16.msra.mxu0 0
        %1563 = vmatprep.subr.bf16.mxu0 0
        %1564 = vmatpush1.bf16.msra.mxu0 0
        %1565 = vmatprep.subr.bf16.mxu0 0
        %1566 = vmatpush1.bf16.msra.mxu0 0
        %1567 = vmatprep.subr.bf16.mxu0 0
        %1568 = vmatpush1.bf16.msra.mxu0 0
        %1569 = vmatprep.subr.bf16.mxu0 0
        %1570 = vmatpush1.bf16.msra.mxu0 0
        %1571 = vmatprep.subr.bf16.mxu0 0
        %1572 = vmatpush1.bf16.msra.mxu0 0
        %1573 = vmatprep.mubr.bf16.mxu0 0
        %1574 = vmatmul.mubr.bf16.gmra.mrb[0].mxu0 %v497
        %v1575 = vpop.f32.mrb[0].mxu0
        %v1576 = vadd.f32 %v1533, %v1575
        %v1577 = vpop.f32.mrb[0].mxu0
        %v1578 = vpop.f32.mrb[0].mxu0
        %v1579 = vpop.f32.mrb[0].mxu0
        %1580 = vdwg.mxu0
        %s1581 = scalar_lea.vmem %s3, 88
        %v1582 = vld [vmem:[%s1581] sm:$0xf]
        %v1583 = vld [vmem:[%s1581 + $0x4] sm:$0xf]
        %s1584 = scalar_lea.vmem %s4, 11
        %v1585 = vld [vmem:[%s1584] sm:$0x1]
        %v1587 = vlaneseq
        %v1588 = vshrl.u32 %v1587, 7
        %v1589 = vsub.s32 0, %v1588
        %v1590 = vrot.slane %v1585, %v1589
        %v1594 = vunpack.c.l.b16 %v1582
        %v1595 = vunpack.c.l.b16 %v1583
        %v1596 = vpack.c.b16 %v1595, %v1594
        %1598 = vmatprep.subr.bf16.mxu0 0
        %1599 = vmatpush1.bf16.msra.mxu0 %v1596
        %1600 = vmatprep.subr.bf16.mxu0 0
        %1601 = vmatpush1.bf16.msra.mxu0 0
        %1602 = vmatprep.subr.bf16.mxu0 0
        %1603 = vmatpush1.bf16.msra.mxu0 0
        %1604 = vmatprep.subr.bf16.mxu0 0
        %1605 = vmatpush1.bf16.msra.mxu0 0
        %1606 = vmatprep.subr.bf16.mxu0 0
        %1607 = vmatpush1.bf16.msra.mxu0 0
        %1608 = vmatprep.subr.bf16.mxu0 0
        %1609 = vmatpush1.bf16.msra.mxu0 0
        %1610 = vmatprep.subr.bf16.mxu0 0
        %1611 = vmatpush1.bf16.msra.mxu0 0
        %1612 = vmatprep.subr.bf16.mxu0 0
        %1613 = vmatpush1.bf16.msra.mxu0 0
        %1614 = vmatprep.subr.bf16.mxu0 0
        %1615 = vmatpush1.bf16.msra.mxu0 0
        %1616 = vmatprep.subr.bf16.mxu0 0
        %1617 = vmatpush1.bf16.msra.mxu0 0
        %1618 = vmatprep.subr.bf16.mxu0 0
        %1619 = vmatpush1.bf16.msra.mxu0 0
        %1620 = vmatprep.subr.bf16.mxu0 0
        %1621 = vmatpush1.bf16.msra.mxu0 0
        %1622 = vmatprep.subr.bf16.mxu0 0
        %1623 = vmatpush1.bf16.msra.mxu0 0
        %1624 = vmatprep.subr.bf16.mxu0 0
        %1625 = vmatpush1.bf16.msra.mxu0 0
        %1626 = vmatprep.subr.bf16.mxu0 0
        %1627 = vmatpush1.bf16.msra.mxu0 0
        %1628 = vmatprep.subr.bf16.mxu0 0
        %1629 = vmatpush1.bf16.msra.mxu0 0
        %1630 = vmatprep.mubr.bf16.mxu0 0
        %1631 = vmatmul.mubr.bf16.gmra.mrb[0].mxu0 %v497
        %v1632 = vpop.f32.mrb[0].mxu0
        %v1633 = vadd.f32 %v1590, %v1632
        %v1634 = vpop.f32.mrb[0].mxu0
        %v1635 = vpop.f32.mrb[0].mxu0
        %v1636 = vpop.f32.mrb[0].mxu0
        %1637 = vdwg.mxu0
        %v1638 = vpack.c.bf16 %v1519, %v1519
        %v1639 = vpack.c.bf16 %v1576, %v1576
        %v1641 = vsel %vm655, %v1638, 0
        %v1644 = vsel %vm655, %v1639, 0
        %1646 = vmatprep.subr.bf16.mxu0 0
        %1647 = vmatpush1.bf16.xpose.msra.mxu0 %v1644
        %1648 = vmatprep.subr.bf16.mxu0 0
        %1649 = vmatpush1.bf16.xpose.msra.mxu0 0
        %1650 = vmatprep.subr.bf16.mxu0 0
        %1651 = vmatpush1.bf16.xpose.msra.mxu0 0
        %1652 = vmatprep.subr.bf16.mxu0 0
        %1653 = vmatpush1.bf16.xpose.msra.mxu0 0
        %1654 = vmatprep.subr.bf16.mxu0 0
        %1655 = vmatpush1.bf16.xpose.msra.mxu0 0
        %1656 = vmatprep.subr.bf16.mxu0 0
        %1657 = vmatpush1.bf16.xpose.msra.mxu0 0
        %1658 = vmatprep.subr.bf16.mxu0 0
        %1659 = vmatpush1.bf16.xpose.msra.mxu0 0
        %1660 = vmatprep.subr.bf16.mxu0 0
        %1661 = vmatpush1.bf16.xpose.msra.mxu0 0
        %1662 = vmatprep.subr.bf16.mxu0 0
        %1663 = vmatpush1.bf16.xpose.msra.mxu0 0
        %1664 = vmatprep.subr.bf16.mxu0 0
        %1665 = vmatpush1.bf16.xpose.msra.mxu0 0
        %1666 = vmatprep.subr.bf16.mxu0 0
        %1667 = vmatpush1.bf16.xpose.msra.mxu0 0
        %1668 = vmatprep.subr.bf16.mxu0 0
        %1669 = vmatpush1.bf16.xpose.msra.mxu0 0
        %1670 = vmatprep.subr.bf16.mxu0 0
        %1671 = vmatpush1.bf16.xpose.msra.mxu0 0
        %1672 = vmatprep.subr.bf16.mxu0 0
        %1673 = vmatpush1.bf16.xpose.msra.mxu0 0
        %1674 = vmatprep.subr.bf16.mxu0 0
        %1675 = vmatpush1.bf16.xpose.msra.mxu0 0
        %1676 = vmatprep.subr.bf16.mxu0 0
        %1677 = vmatpush1.bf16.xpose.msra.mxu0 0
        %1678 = vmatprep.mubr.bf16.mxu0 0
        %1679 = vmatmul.mubr.bf16.gmra.mrb[0].mxu0 %v1641
        %v1680 = vpop.f32.mrb[0].mxu0
        %v1681 = vadd.f32 0.0, %v1680
        %v1682 = vpop.f32.mrb[0].mxu0
        %v1683 = vpop.f32.mrb[0].mxu0
        %v1684 = vpop.f32.mrb[0].mxu0
        %1685 = vdwg.mxu0
        %v1686 = vsel %vm702, %v1681, -inf
        %1687 = vmax.xlane.f32.xlu0 %v1686
        %v1688 = vpop.xlane.xlu0 %1687
        %v1689 = vsub.f32 %v1681, %v1688
        %v1690 = vmul.f32 %v1689, 1.442695
        %v1691 = vpow.pop %v1690
        %v1692 = vsel %vm702, %v1691, 0.0
        %1693 = vadd.xlane.f32.xlu0 %v1692
        %v1694 = vpop.xlane.xlu0 %1693
        %v1695 = vrcp.pop %v1694
        %v1696 = vmul.f32 %v1691, %v1695
        %v1697 = vpack.c.bf16 %v1696, %v1696
        %v1698 = vpack.c.bf16 %v1633, %v1633
        %v1700 = vsel %vm702, %v1697, 0
        %v1703 = vsel %vm719, %v1698, 0
        %1705 = vmatprep.subr.bf16.mxu0 0
        %1706 = vmatpush1.bf16.msra.mxu0 %v1703
        %1707 = vmatprep.subr.bf16.mxu0 0
        %1708 = vmatpush1.bf16.msra.mxu0 0
        %1709 = vmatprep.subr.bf16.mxu0 0
        %1710 = vmatpush1.bf16.msra.mxu0 0
        %1711 = vmatprep.subr.bf16.mxu0 0
        %1712 = vmatpush1.bf16.msra.mxu0 0
        %1713 = vmatprep.subr.bf16.mxu0 0
        %1714 = vmatpush1.bf16.msra.mxu0 0
        %1715 = vmatprep.subr.bf16.mxu0 0
        %1716 = vmatpush1.bf16.msra.mxu0 0
        %1717 = vmatprep.subr.bf16.mxu0 0
        %1718 = vmatpush1.bf16.msra.mxu0 0
        %1719 = vmatprep.subr.bf16.mxu0 0
        %1720 = vmatpush1.bf16.msra.mxu0 0
        %1721 = vmatprep.subr.bf16.mxu0 0
        %1722 = vmatpush1.bf16.msra.mxu0 0
        %1723 = vmatprep.subr.bf16.mxu0 0
        %1724 = vmatpush1.bf16.msra.mxu0 0
        %1725 = vmatprep.subr.bf16.mxu0 0
        %1726 = vmatpush1.bf16.msra.mxu0 0
        %1727 = vmatprep.subr.bf16.mxu0 0
        %1728 = vmatpush1.bf16.msra.mxu0 0
        %1729 = vmatprep.subr.bf16.mxu0 0
        %1730 = vmatpush1.bf16.msra.mxu0 0
        %1731 = vmatprep.subr.bf16.mxu0 0
        %1732 = vmatpush1.bf16.msra.mxu0 0
        %1733 = vmatprep.subr.bf16.mxu0 0
        %1734 = vmatpush1.bf16.msra.mxu0 0
        %1735 = vmatprep.subr.bf16.mxu0 0
        %1736 = vmatpush1.bf16.msra.mxu0 0
        %1737 = vmatprep.mubr.bf16.mxu0 0
        %1738 = vmatmul.mubr.bf16.gmra.mrb[0].mxu0 %v1700
        %v1739 = vpop.f32.mrb[0].mxu0
        %v1740 = vadd.f32 0.0, %v1739
        %v1741 = vpop.f32.mrb[0].mxu0
        %v1742 = vpop.f32.mrb[0].mxu0
        %v1743 = vpop.f32.mrb[0].mxu0
        %1744 = vdwg.mxu0
        %v1745 = vpack.c.bf16 %v1740, %v1740
        %s1746 = scalar_lea.vmem %s5, 6
        %v1747 = vld [vmem:[%s1746] sm:$0x3]
        %v1749 = vsel %vm655, %v1745, 0
        %v1752 = vsel %vm1049, %v1747, 0
        %1754 = vmatprep.subr.bf16.mxu0 0
        %1755 = vmatpush1.bf16.msra.mxu0 %v1752
        %1756 = vmatprep.subr.bf16.mxu0 0
        %1757 = vmatpush1.bf16.msra.mxu0 0
        %1758 = vmatprep.subr.bf16.mxu0 0
        %1759 = vmatpush1.bf16.msra.mxu0 0
        %1760 = vmatprep.subr.bf16.mxu0 0
        %1761 = vmatpush1.bf16.msra.mxu0 0
        %1762 = vmatprep.subr.bf16.mxu0 0
        %1763 = vmatpush1.bf16.msra.mxu0 0
        %1764 = vmatprep.subr.bf16.mxu0 0
        %1765 = vmatpush1.bf16.msra.mxu0 0
        %1766 = vmatprep.subr.bf16.mxu0 0
        %1767 = vmatpush1.bf16.msra.mxu0 0
        %1768 = vmatprep.subr.bf16.mxu0 0
        %1769 = vmatpush1.bf16.msra.mxu0 0
        %1770 = vmatprep.subr.bf16.mxu0 0
        %1771 = vmatpush1.bf16.msra.mxu0 0
        %1772 = vmatprep.subr.bf16.mxu0 0
        %1773 = vmatpush1.bf16.msra.mxu0 0
        %1774 = vmatprep.subr.bf16.mxu0 0
        %1775 = vmatpush1.bf16.msra.mxu0 0
        %1776 = vmatprep.subr.bf16.mxu0 0
        %1777 = vmatpush1.bf16.msra.mxu0 0
        %1778 = vmatprep.subr.bf16.mxu0 0
        %1779 = vmatpush1.bf16.msra.mxu0 0
        %1780 = vmatprep.subr.bf16.mxu0 0
        %1781 = vmatpush1.bf16.msra.mxu0 0
        %1782 = vmatprep.subr.bf16.mxu0 0
        %1783 = vmatpush1.bf16.msra.mxu0 0
        %1784 = vmatprep.subr.bf16.mxu0 0
        %1785 = vmatpush1.bf16.msra.mxu0 0
        %1786 = vmatprep.mubr.bf16.mxu0 0
        %1787 = vmatmul.mubr.bf16.gmra.mrb[0].mxu0 %v1749
        %v1788 = vpop.f32.mrb[0].mxu0
        %v1789 = vadd.f32 0.0, %v1788
        %v1790 = vpop.f32.mrb[0].mxu0
        %v1791 = vpop.f32.mrb[0].mxu0
        %v1792 = vpop.f32.mrb[0].mxu0
        %1793 = vdwg.mxu0
        %v1794 = vadd.f32 %v1466, %v1789
        %v1795 = vld [vmem:[%s9] sm:$0x1]
        %v1797 = vlaneseq
        %v1798 = vshrl.u32 %v1797, 7
        %v1799 = vsub.s32 0, %v1798
        %v1800 = vrot.slane %v1795, %v1799
        %v1802 = vadd.f32 %v1794, %v1800
        %v1803 = vadd.f32 %v1802, %v474
        %s1804 = scalar_lea.vmem %s9, 1
        %v1805 = vld [vmem:[%s1804] sm:$0x1]
        %s1806 = scalar_lea.vmem %s9, 2
        %v1807 = vld [vmem:[%s1806] sm:$0x1]
        %v1808 = vsel %vm495, %v1803, 0.0
        %1809 = vadd.xlane.f32.xlu0 %v1808
        %v1810 = vpop.xlane.xlu0 %1809
        %v1811 = vrcp.pop 16.0
        %v1812 = vmul.f32 %v1810, %v1811
        %v1813 = vsub.f32 %v1803, %v1812
        %v1814 = vmul.f32 %v1813, %v1813
        %v1815 = vsel %vm495, %v1814, 0.0
        %1816 = vadd.xlane.f32.xlu0 %v1815
        %v1817 = vpop.xlane.xlu0 %1816
        %v1818 = vmul.f32 %v1817, %v1811
        %v1819 = vadd.f32 %v1818, 1e-12
        %v1820 = vrsqrt.pop %v1819
        %v1821 = vmul.f32 %v1813, %v1820
        %v1823 = vlaneseq
        %v1824 = vshrl.u32 %v1823, 7
        %v1825 = vsub.s32 0, %v1824
        %v1826 = vrot.slane %v1805, %v1825
        %v1828 = vmul.f32 %v1821, %v1826
        %v1830 = vlaneseq
        %v1831 = vshrl.u32 %v1830, 7
        %v1832 = vsub.s32 0, %v1831
        %v1833 = vrot.slane %v1807, %v1832
        %v1835 = vadd.f32 %v1828, %v1833
        %v1836 = vpack.c.bf16 %v1835, %v1835
        %v1837 = vld [vmem:[%s6] sm:$0xf]
        %v1838 = vld [vmem:[%s6 + $0x4] sm:$0xf]
        %v1839 = vld [vmem:[%s7] sm:$0x1]
        %v1841 = vlaneseq
        %v1842 = vshrl.u32 %v1841, 7
        %v1843 = vsub.s32 0, %v1842
        %v1844 = vrot.slane %v1839, %v1843
        %v1848 = vunpack.c.l.b16 %v1837
        %v1849 = vunpack.c.l.b16 %v1838
        %v1850 = vpack.c.b16 %v1849, %v1848
        %v1853 = vsel %vm495, %v1836, 0
        %1855 = vmatprep.subr.bf16.mxu0 0
        %1856 = vmatpush1.bf16.msra.mxu0 %v1850
        %1857 = vmatprep.subr.bf16.mxu0 0
        %1858 = vmatpush1.bf16.msra.mxu0 0
        %1859 = vmatprep.subr.bf16.mxu0 0
        %1860 = vmatpush1.bf16.msra.mxu0 0
        %1861 = vmatprep.subr.bf16.mxu0 0
        %1862 = vmatpush1.bf16.msra.mxu0 0
        %1863 = vmatprep.subr.bf16.mxu0 0
        %1864 = vmatpush1.bf16.msra.mxu0 0
        %1865 = vmatprep.subr.bf16.mxu0 0
        %1866 = vmatpush1.bf16.msra.mxu0 0
        %1867 = vmatprep.subr.bf16.mxu0 0
        %1868 = vmatpush1.bf16.msra.mxu0 0
        %1869 = vmatprep.subr.bf16.mxu0 0
        %1870 = vmatpush1.bf16.msra.mxu0 0
        %1871 = vmatprep.subr.bf16.mxu0 0
        %1872 = vmatpush1.bf16.msra.mxu0 0
        %1873 = vmatprep.subr.bf16.mxu0 0
        %1874 = vmatpush1.bf16.msra.mxu0 0
        %1875 = vmatprep.subr.bf16.mxu0 0
        %1876 = vmatpush1.bf16.msra.mxu0 0
        %1877 = vmatprep.subr.bf16.mxu0 0
        %1878 = vmatpush1.bf16.msra.mxu0 0
        %1879 = vmatprep.subr.bf16.mxu0 0
        %1880 = vmatpush1.bf16.msra.mxu0 0
        %1881 = vmatprep.subr.bf16.mxu0 0
        %1882 = vmatpush1.bf16.msra.mxu0 0
        %1883 = vmatprep.subr.bf16.mxu0 0
        %1884 = vmatpush1.bf16.msra.mxu0 0
        %1885 = vmatprep.subr.bf16.mxu0 0
        %1886 = vmatpush1.bf16.msra.mxu0 0
        %1887 = vmatprep.mubr.bf16.mxu0 0
        %1888 = vmatmul.mubr.bf16.gmra.mrb[0].mxu0 %v1853
        %v1889 = vpop.f32.mrb[0].mxu0
        %v1890 = vadd.f32 %v1844, %v1889
        %v1891 = vpop.f32.mrb[0].mxu0
        %v1892 = vpop.f32.mrb[0].mxu0
        %v1893 = vpop.f32.mrb[0].mxu0
        %1894 = vdwg.mxu0
        %v1895 = vmul.f32 %v1890, 0.5
        %v1896 = vmul.f32 %v1890, 0.044715
        %v1897 = vmul.f32 %v1896, %v1890
        %v1898 = vmul.f32 %v1897, %v1890
        %v1899 = vadd.f32 %v1890, %v1898
        %v1900 = vmul.f32 %v1899, 0.7978846
        %v1901 = vtanh.pop %v1900
        %v1902 = vadd.f32 %v1901, 1.0
        %v1903 = vmul.f32 %v1895, %v1902
        %v1904 = vpack.c.bf16 %v1903, %v1903
        %v1905 = vld [vmem:[%s8] sm:$0xf]
        %v1906 = vld [vmem:[%s8 + $0x4] sm:$0xf]
        %v1907 = vld [vmem:[%s8 + $0x8] sm:$0xf]
        %v1908 = vld [vmem:[%s8 + $0xc] sm:$0xf]
        %v1909 = vld [vmem:[%s8 + $0x10] sm:$0xf]
        %v1910 = vld [vmem:[%s8 + $0x14] sm:$0xf]
        %v1911 = vld [vmem:[%s8 + $0x18] sm:$0xf]
        %v1912 = vld [vmem:[%s8 + $0x1c] sm:$0xf]
        %s1913 = scalar_lea.vmem %s9, 3
        %v1914 = vld [vmem:[%s1913] sm:$0x1]
        %v1916 = vlaneseq
        %v1917 = vshrl.u32 %v1916, 7
        %v1918 = vsub.s32 0, %v1917
        %v1919 = vrot.slane %v1914, %v1918
        %v1929 = vunpack.c.l.b16 %v1905
        %v1930 = vunpack.c.l.b16 %v1906
        %v1931 = vunpack.c.l.b16 %v1907
        %v1932 = vunpack.c.l.b16 %v1908
        %v1933 = vunpack.c.l.b16 %v1909
        %v1934 = vunpack.c.l.b16 %v1910
        %v1935 = vunpack.c.l.b16 %v1911
        %v1936 = vunpack.c.l.b16 %v1912
        %v1937 = vpack.c.b16 %v1930, %v1929
        %v1938 = vpack.c.b16 %v1932, %v1931
        %v1939 = vpack.c.b16 %v1934, %v1933
        %v1940 = vpack.c.b16 %v1936, %v1935
        %vm1945 = vcmask 523264
        %v1947 = vsel %vm1945, %v1904, 0
        %1949 = vmatprep.subr.bf16.mxu0 0
        %1950 = vmatpush1.bf16.msra.mxu0 %v1937
        %1951 = vmatprep.subr.bf16.mxu0 0
        %1952 = vmatpush1.bf16.msra.mxu0 %v1938
        %1953 = vmatprep.subr.bf16.mxu0 0
        %1954 = vmatpush1.bf16.msra.mxu0 %v1939
        %1955 = vmatprep.subr.bf16.mxu0 0
        %1956 = vmatpush1.bf16.msra.mxu0 %v1940
        %1957 = vmatprep.subr.bf16.mxu0 0
        %1958 = vmatpush1.bf16.msra.mxu0 0
        %1959 = vmatprep.subr.bf16.mxu0 0
        %1960 = vmatpush1.bf16.msra.mxu0 0
        %1961 = vmatprep.subr.bf16.mxu0 0
        %1962 = vmatpush1.bf16.msra.mxu0 0
        %1963 = vmatprep.subr.bf16.mxu0 0
        %1964 = vmatpush1.bf16.msra.mxu0 0
        %1965 = vmatprep.subr.bf16.mxu0 0
        %1966 = vmatpush1.bf16.msra.mxu0 0
        %1967 = vmatprep.subr.bf16.mxu0 0
        %1968 = vmatpush1.bf16.msra.mxu0 0
        %1969 = vmatprep.subr.bf16.mxu0 0
        %1970 = vmatpush1.bf16.msra.mxu0 0
        %1971 = vmatprep.subr.bf16.mxu0 0
        %1972 = vmatpush1.bf16.msra.mxu0 0
        %1973 = vmatprep.subr.bf16.mxu0 0
        %1974 = vmatpush1.bf16.msra.mxu0 0
        %1975 = vmatprep.subr.bf16.mxu0 0
        %1976 = vmatpush1.bf16.msra.mxu0 0
        %1977 = vmatprep.subr.bf16.mxu0 0
        %1978 = vmatpush1.bf16.msra.mxu0 0
        %1979 = vmatprep.subr.bf16.mxu0 0
        %1980 = vmatpush1.bf16.msra.mxu0 0
        %1981 = vmatprep.mubr.bf16.mxu0 0
        %1982 = vmatmul.mubr.bf16.gmra.mrb[0].mxu0 %v1947
        %v1983 = vpop.f32.mrb[0].mxu0
        %v1984 = vadd.f32 %v1919, %v1983
        %v1985 = vpop.f32.mrb[0].mxu0
        %v1986 = vpop.f32.mrb[0].mxu0
        %v1987 = vpop.f32.mrb[0].mxu0
        %1988 = vdwg.mxu0
        %v1989 = vadd.f32 %v1984, %v1835
        %s1990 = scalar_lea.vmem %s9, 4
        %v1991 = vld [vmem:[%s1990] sm:$0x1]
        %s1992 = scalar_lea.vmem %s9, 5
        %v1993 = vld [vmem:[%s1992] sm:$0x1]
        %v1994 = vsel %vm495, %v1989, 0.0
        %1995 = vadd.xlane.f32.xlu0 %v1994
        %v1996 = vpop.xlane.xlu0 %1995
        %v1997 = vmul.f32 %v1996, %v1811
        %v1998 = vsub.f32 %v1989, %v1997
        %v1999 = vmul.f32 %v1998, %v1998
        %v2000 = vsel %vm495, %v1999, 0.0
        %2001 = vadd.xlane.f32.xlu0 %v2000
        %v2002 = vpop.xlane.xlu0 %2001
        %v2003 = vmul.f32 %v2002, %v1811
        %v2004 = vadd.f32 %v2003, 1e-12
        %v2005 = vrsqrt.pop %v2004
        %v2006 = vmul.f32 %v1998, %v2005
        %v2008 = vlaneseq
        %v2009 = vshrl.u32 %v2008, 7
        %v2010 = vsub.s32 0, %v2009
        %v2011 = vrot.slane %v1991, %v2010
        %v2013 = vmul.f32 %v2006, %v2011
        %v2015 = vlaneseq
        %v2016 = vshrl.u32 %v2015, 7
        %v2017 = vsub.s32 0, %v2016
        %v2018 = vrot.slane %v1993, %v2017
        %v2020 = vadd.f32 %v2013, %v2018
        %v2021 = vpack.c.bf16 %v2020, %v2020
        %s2022 = scalar_lea.vmem %s3, 96
        %v2023 = vld [vmem:[%s2022] sm:$0xf]
        %v2024 = vld [vmem:[%s2022 + $0x4] sm:$0xf]
        %s2025 = scalar_lea.vmem %s4, 12
        %v2026 = vld [vmem:[%s2025] sm:$0x1]
        %v2028 = vlaneseq
        %v2029 = vshrl.u32 %v2028, 7
        %v2030 = vsub.s32 0, %v2029
        %v2031 = vrot.slane %v2026, %v2030
        %v2035 = vunpack.c.l.b16 %v2023
        %v2036 = vunpack.c.l.b16 %v2024
        %v2037 = vpack.c.b16 %v2036, %v2035
        %v2040 = vsel %vm495, %v2021, 0
        %2042 = vmatprep.subr.bf16.mxu0 0
        %2043 = vmatpush1.bf16.msra.mxu0 %v2037
        %2044 = vmatprep.subr.bf16.mxu0 0
        %2045 = vmatpush1.bf16.msra.mxu0 0
        %2046 = vmatprep.subr.bf16.mxu0 0
        %2047 = vmatpush1.bf16.msra.mxu0 0
        %2048 = vmatprep.subr.bf16.mxu0 0
        %2049 = vmatpush1.bf16.msra.mxu0 0
        %2050 = vmatprep.subr.bf16.mxu0 0
        %2051 = vmatpush1.bf16.msra.mxu0 0
        %2052 = vmatprep.subr.bf16.mxu0 0
        %2053 = vmatpush1.bf16.msra.mxu0 0
        %2054 = vmatprep.subr.bf16.mxu0 0
        %2055 = vmatpush1.bf16.msra.mxu0 0
        %2056 = vmatprep.subr.bf16.mxu0 0
        %2057 = vmatpush1.bf16.msra.mxu0 0
        %2058 = vmatprep.subr.bf16.mxu0 0
        %2059 = vmatpush1.bf16.msra.mxu0 0
        %2060 = vmatprep.subr.bf16.mxu0 0
        %2061 = vmatpush1.bf16.msra.mxu0 0
        %2062 = vmatprep.subr.bf16.mxu0 0
        %2063 = vmatpush1.bf16.msra.mxu0 0
        %2064 = vmatprep.subr.bf16.mxu0 0
        %2065 = vmatpush1.bf16.msra.mxu0 0
        %2066 = vmatprep.subr.bf16.mxu0 0
        %2067 = vmatpush1.bf16.msra.mxu0 0
        %2068 = vmatprep.subr.bf16.mxu0 0
        %2069 = vmatpush1.bf16.msra.mxu0 0
        %2070 = vmatprep.subr.bf16.mxu0 0
        %2071 = vmatpush1.bf16.msra.mxu0 0
        %2072 = vmatprep.subr.bf16.mxu0 0
        %2073 = vmatpush1.bf16.msra.mxu0 0
        %2074 = vmatprep.mubr.bf16.mxu0 0
        %2075 = vmatmul.mubr.bf16.gmra.mrb[0].mxu0 %v2040
        %v2076 = vpop.f32.mrb[0].mxu0
        %v2077 = vadd.f32 %v2031, %v2076
        %v2078 = vpop.f32.mrb[0].mxu0
        %v2079 = vpop.f32.mrb[0].mxu0
        %v2080 = vpop.f32.mrb[0].mxu0
        %2081 = vdwg.mxu0
        %s2082 = scalar_lea.vmem %s3, 128
        %v2083 = vld [vmem:[%s2082] sm:$0xf]
        %v2084 = vld [vmem:[%s2082 + $0x4] sm:$0xf]
        %s2085 = scalar_lea.vmem %s4, 16
        %v2086 = vld [vmem:[%s2085] sm:$0x1]
        %v2088 = vlaneseq
        %v2089 = vshrl.u32 %v2088, 7
        %v2090 = vsub.s32 0, %v2089
        %v2091 = vrot.slane %v2086, %v2090
        %v2095 = vunpack.c.l.b16 %v2083
        %v2096 = vunpack.c.l.b16 %v2084
        %v2097 = vpack.c.b16 %v2096, %v2095
        %2099 = vmatprep.subr.bf16.mxu0 0
        %2100 = vmatpush1.bf16.msra.mxu0 %v2097
        %2101 = vmatprep.subr.bf16.mxu0 0
        %2102 = vmatpush1.bf16.msra.mxu0 0
        %2103 = vmatprep.subr.bf16.mxu0 0
        %2104 = vmatpush1.bf16.msra.mxu0 0
        %2105 = vmatprep.subr.bf16.mxu0 0
        %2106 = vmatpush1.bf16.msra.mxu0 0
        %2107 = vmatprep.subr.bf16.mxu0 0
        %2108 = vmatpush1.bf16.msra.mxu0 0
        %2109 = vmatprep.subr.bf16.mxu0 0
        %2110 = vmatpush1.bf16.msra.mxu0 0
        %2111 = vmatprep.subr.bf16.mxu0 0
        %2112 = vmatpush1.bf16.msra.mxu0 0
        %2113 = vmatprep.subr.bf16.mxu0 0
        %2114 = vmatpush1.bf16.msra.mxu0 0
        %2115 = vmatprep.subr.bf16.mxu0 0
        %2116 = vmatpush1.bf16.msra.mxu0 0
        %2117 = vmatprep.subr.bf16.mxu0 0
        %2118 = vmatpush1.bf16.msra.mxu0 0
        %2119 = vmatprep.subr.bf16.mxu0 0
        %2120 = vmatpush1.bf16.msra.mxu0 0
        %2121 = vmatprep.subr.bf16.mxu0 0
        %2122 = vmatpush1.bf16.msra.mxu0 0
        %2123 = vmatprep.subr.bf16.mxu0 0
        %2124 = vmatpush1.bf16.msra.mxu0 0
        %2125 = vmatprep.subr.bf16.mxu0 0
        %2126 = vmatpush1.bf16.msra.mxu0 0
        %2127 = vmatprep.subr.bf16.mxu0 0
        %2128 = vmatpush1.bf16.msra.mxu0 0
        %2129 = vmatprep.subr.bf16.mxu0 0
        %2130 = vmatpush1.bf16.msra.mxu0 0
        %2131 = vmatprep.mubr.bf16.mxu0 0
        %2132 = vmatmul.mubr.bf16.gmra.mrb[0].mxu0 %v2040
        %v2133 = vpop.f32.mrb[0].mxu0
        %v2134 = vadd.f32 %v2091, %v2133
        %v2135 = vpop.f32.mrb[0].mxu0
        %v2136 = vpop.f32.mrb[0].mxu0
        %v2137 = vpop.f32.mrb[0].mxu0
        %2138 = vdwg.mxu0
        %s2139 = scalar_lea.vmem %s3, 160
        %v2140 = vld [vmem:[%s2139] sm:$0xf]
        %v2141 = vld [vmem:[%s2139 + $0x4] sm:$0xf]
        %s2142 = scalar_lea.vmem %s4, 20
        %v2143 = vld [vmem:[%s2142] sm:$0x1]
        %v2145 = vlaneseq
        %v2146 = vshrl.u32 %v2145, 7
        %v2147 = vsub.s32 0, %v2146
        %v2148 = vrot.slane %v2143, %v2147
        %v2152 = vunpack.c.l.b16 %v2140
        %v2153 = vunpack.c.l.b16 %v2141
        %v2154 = vpack.c.b16 %v2153, %v2152
        %2156 = vmatprep.subr.bf16.mxu0 0
        %2157 = vmatpush1.bf16.msra.mxu0 %v2154
        %2158 = vmatprep.subr.bf16.mxu0 0
        %2159 = vmatpush1.bf16.msra.mxu0 0
        %2160 = vmatprep.subr.bf16.mxu0 0
        %2161 = vmatpush1.bf16.msra.mxu0 0
        %2162 = vmatprep.subr.bf16.mxu0 0
        %2163 = vmatpush1.bf16.msra.mxu0 0
        %2164 = vmatprep.subr.bf16.mxu0 0
        %2165 = vmatpush1.bf16.msra.mxu0 0
        %2166 = vmatprep.subr.bf16.mxu0 0
        %2167 = vmatpush1.bf16.msra.mxu0 0
        %2168 = vmatprep.subr.bf16.mxu0 0
        %2169 = vmatpush1.bf16.msra.mxu0 0
        %2170 = vmatprep.subr.bf16.mxu0 0
        %2171 = vmatpush1.bf16.msra.mxu0 0
        %2172 = vmatprep.subr.bf16.mxu0 0
        %2173 = vmatpush1.bf16.msra.mxu0 0
        %2174 = vmatprep.subr.bf16.mxu0 0
        %2175 = vmatpush1.bf16.msra.mxu0 0
        %2176 = vmatprep.subr.bf16.mxu0 0
        %2177 = vmatpush1.bf16.msra.mxu0 0
        %2178 = vmatprep.subr.bf16.mxu0 0
        %2179 = vmatpush1.bf16.msra.mxu0 0
        %2180 = vmatprep.subr.bf16.mxu0 0
        %2181 = vmatpush1.bf16.msra.mxu0 0
        %2182 = vmatprep.subr.bf16.mxu0 0
        %2183 = vmatpush1.bf16.msra.mxu0 0
        %2184 = vmatprep.subr.bf16.mxu0 0
        %2185 = vmatpush1.bf16.msra.mxu0 0
        %2186 = vmatprep.subr.bf16.mxu0 0
        %2187 = vmatpush1.bf16.msra.mxu0 0
        %2188 = vmatprep.mubr.bf16.mxu0 0
        %2189 = vmatmul.mubr.bf16.gmra.mrb[0].mxu0 %v2040
        %v2190 = vpop.f32.mrb[0].mxu0
        %v2191 = vadd.f32 %v2148, %v2190
        %v2192 = vpop.f32.mrb[0].mxu0
        %v2193 = vpop.f32.mrb[0].mxu0
        %v2194 = vpop.f32.mrb[0].mxu0
        %2195 = vdwg.mxu0
        %v2196 = vpack.c.bf16 %v2077, %v2077
        %v2197 = vpack.c.bf16 %v2134, %v2134
        %v2199 = vsel %vm655, %v2196, 0
        %v2202 = vsel %vm655, %v2197, 0
        %2204 = vmatprep.subr.bf16.mxu0 0
        %2205 = vmatpush1.bf16.xpose.msra.mxu0 %v2202
        %2206 = vmatprep.subr.bf16.mxu0 0
        %2207 = vmatpush1.bf16.xpose.msra.mxu0 0
        %2208 = vmatprep.subr.bf16.mxu0 0
        %2209 = vmatpush1.bf16.xpose.msra.mxu0 0
        %2210 = vmatprep.subr.bf16.mxu0 0
        %2211 = vmatpush1.bf16.xpose.msra.mxu0 0
        %2212 = vmatprep.subr.bf16.mxu0 0
        %2213 = vmatpush1.bf16.xpose.msra.mxu0 0
        %2214 = vmatprep.subr.bf16.mxu0 0
        %2215 = vmatpush1.bf16.xpose.msra.mxu0 0
        %2216 = vmatprep.subr.bf16.mxu0 0
        %2217 = vmatpush1.bf16.xpose.msra.mxu0 0
        %2218 = vmatprep.subr.bf16.mxu0 0
        %2219 = vmatpush1.bf16.xpose.msra.mxu0 0
        %2220 = vmatprep.subr.bf16.mxu0 0
        %2221 = vmatpush1.bf16.xpose.msra.mxu0 0
        %2222 = vmatprep.subr.bf16.mxu0 0
        %2223 = vmatpush1.bf16.xpose.msra.mxu0 0
        %2224 = vmatprep.subr.bf16.mxu0 0
        %2225 = vmatpush1.bf16.xpose.msra.mxu0 0
        %2226 = vmatprep.subr.bf16.mxu0 0
        %2227 = vmatpush1.bf16.xpose.msra.mxu0 0
        %2228 = vmatprep.subr.bf16.mxu0 0
        %2229 = vmatpush1.bf16.xpose.msra.mxu0 0
        %2230 = vmatprep.subr.bf16.mxu0 0
        %2231 = vmatpush1.bf16.xpose.msra.mxu0 0
        %2232 = vmatprep.subr.bf16.mxu0 0
        %2233 = vmatpush1.bf16.xpose.msra.mxu0 0
        %2234 = vmatprep.subr.bf16.mxu0 0
        %2235 = vmatpush1.bf16.xpose.msra.mxu0 0
        %2236 = vmatprep.mubr.bf16.mxu0 0
        %2237 = vmatmul.mubr.bf16.gmra.mrb[0].mxu0 %v2199
        %v2238 = vpop.f32.mrb[0].mxu0
        %v2239 = vadd.f32 0.0, %v2238
        %v2240 = vpop.f32.mrb[0].mxu0
        %v2241 = vpop.f32.mrb[0].mxu0
        %v2242 = vpop.f32.mrb[0].mxu0
        %2243 = vdwg.mxu0
        %v2244 = vsel %vm702, %v2239, -inf
        %2245 = vmax.xlane.f32.xlu0 %v2244
        %v2246 = vpop.xlane.xlu0 %2245
        %v2247 = vsub.f32 %v2239, %v2246
        %v2248 = vmul.f32 %v2247, 1.442695
        %v2249 = vpow.pop %v2248
        %v2250 = vsel %vm702, %v2249, 0.0
        %2251 = vadd.xlane.f32.xlu0 %v2250
        %v2252 = vpop.xlane.xlu0 %2251
        %v2253 = vrcp.pop %v2252
        %v2254 = vmul.f32 %v2249, %v2253
        %v2255 = vpack.c.bf16 %v2254, %v2254
        %v2256 = vpack.c.bf16 %v2191, %v2191
        %v2258 = vsel %vm702, %v2255, 0
        %v2261 = vsel %vm719, %v2256, 0
        %2263 = vmatprep.subr.bf16.mxu0 0
        %2264 = vmatpush1.bf16.msra.mxu0 %v2261
        %2265 = vmatprep.subr.bf16.mxu0 0
        %2266 = vmatpush1.bf16.msra.mxu0 0
        %2267 = vmatprep.subr.bf16.mxu0 0
        %2268 = vmatpush1.bf16.msra.mxu0 0
        %2269 = vmatprep.subr.bf16.mxu0 0
        %2270 = vmatpush1.bf16.msra.mxu0 0
        %2271 = vmatprep.subr.bf16.mxu0 0
        %2272 = vmatpush1.bf16.msra.mxu0 0
        %2273 = vmatprep.subr.bf16.mxu0 0
        %2274 = vmatpush1.bf16.msra.mxu0 0
        %2275 = vmatprep.subr.bf16.mxu0 0
        %2276 = vmatpush1.bf16.msra.mxu0 0
        %2277 = vmatprep.subr.bf16.mxu0 0
        %2278 = vmatpush1.bf16.msra.mxu0 0
        %2279 = vmatprep.subr.bf16.mxu0 0
        %2280 = vmatpush1.bf16.msra.mxu0 0
        %2281 = vmatprep.subr.bf16.mxu0 0
        %2282 = vmatpush1.bf16.msra.mxu0 0
        %2283 = vmatprep.subr.bf16.mxu0 0
        %2284 = vmatpush1.bf16.msra.mxu0 0
        %2285 = vmatprep.subr.bf16.mxu0 0
        %2286 = vmatpush1.bf16.msra.mxu0 0
        %2287 = vmatprep.subr.bf16.mxu0 0
        %2288 = vmatpush1.bf16.msra.mxu0 0
        %2289 = vmatprep.subr.bf16.mxu0 0
        %2290 = vmatpush1.bf16.msra.mxu0 0
        %2291 = vmatprep.subr.bf16.mxu0 0
        %2292 = vmatpush1.bf16.msra.mxu0 0
        %2293 = vmatprep.subr.bf16.mxu0 0
        %2294 = vmatpush1.bf16.msra.mxu0 0
        %2295 = vmatprep.mubr.bf16.mxu0 0
        %2296 = vmatmul.mubr.bf16.gmra.mrb[0].mxu0 %v2258
        %v2297 = vpop.f32.mrb[0].mxu0
        %v2298 = vadd.f32 0.0, %v2297
        %v2299 = vpop.f32.mrb[0].mxu0
        %v2300 = vpop.f32.mrb[0].mxu0
        %v2301 = vpop.f32.mrb[0].mxu0
        %2302 = vdwg.mxu0
        %v2303 = vpack.c.bf16 %v2298, %v2298
        %s2304 = scalar_lea.vmem %s5, 8
        %v2305 = vld [vmem:[%s2304] sm:$0x3]
        %s2306 = scalar_lea.vmem %s3, 104
        %v2307 = vld [vmem:[%s2306] sm:$0xf]
        %v2308 = vld [vmem:[%s2306 + $0x4] sm:$0xf]
        %s2309 = scalar_lea.vmem %s4, 13
        %v2310 = vld [vmem:[%s2309] sm:$0x1]
        %v2312 = vlaneseq
        %v2313 = vshrl.u32 %v2312, 7
        %v2314 = vsub.s32 0, %v2313
        %v2315 = vrot.slane %v2310, %v2314
        %v2319 = vunpack.c.l.b16 %v2307
        %v2320 = vunpack.c.l.b16 %v2308
        %v2321 = vpack.c.b16 %v2320, %v2319
        %2323 = vmatprep.subr.bf16.mxu0 0
        %2324 = vmatpush1.bf16.msra.mxu0 %v2321
        %2325 = vmatprep.subr.bf16.mxu0 0
        %2326 = vmatpush1.bf16.msra.mxu0 0
        %2327 = vmatprep.subr.bf16.mxu0 0
        %2328 = vmatpush1.bf16.msra.mxu0 0
        %2329 = vmatprep.subr.bf16.mxu0 0
        %2330 = vmatpush1.bf16.msra.mxu0 0
        %2331 = vmatprep.subr.bf16.mxu0 0
        %2332 = vmatpush1.bf16.msra.mxu0 0
        %2333 = vmatprep.subr.bf16.mxu0 0
        %2334 = vmatpush1.bf16.msra.mxu0 0
        %2335 = vmatprep.subr.bf16.mxu0 0
        %2336 = vmatpush1.bf16.msra.mxu0 0
        %2337 = vmatprep.subr.bf16.mxu0 0
        %2338 = vmatpush1.bf16.msra.mxu0 0
        %2339 = vmatprep.subr.bf16.mxu0 0
        %2340 = vmatpush1.bf16.msra.mxu0 0
        %2341 = vmatprep.subr.bf16.mxu0 0
        %2342 = vmatpush1.bf16.msra.mxu0 0
        %2343 = vmatprep.subr.bf16.mxu0 0
        %2344 = vmatpush1.bf16.msra.mxu0 0
        %2345 = vmatprep.subr.bf16.mxu0 0
        %2346 = vmatpush1.bf16.msra.mxu0 0
        %2347 = vmatprep.subr.bf16.mxu0 0
        %2348 = vmatpush1.bf16.msra.mxu0 0
        %2349 = vmatprep.subr.bf16.mxu0 0
        %2350 = vmatpush1.bf16.msra.mxu0 0
        %2351 = vmatprep.subr.bf16.mxu0 0
        %2352 = vmatpush1.bf16.msra.mxu0 0
        %2353 = vmatprep.subr.bf16.mxu0 0
        %2354 = vmatpush1.bf16.msra.mxu0 0
        %2355 = vmatprep.mubr.bf16.mxu0 0
        %2356 = vmatmul.mubr.bf16.gmra.mrb[0].mxu0 %v2040
        %v2357 = vpop.f32.mrb[0].mxu0
        %v2358 = vadd.f32 %v2315, %v2357
        %v2359 = vpop.f32.mrb[0].mxu0
        %v2360 = vpop.f32.mrb[0].mxu0
        %v2361 = vpop.f32.mrb[0].mxu0
        %2362 = vdwg.mxu0
        %s2363 = scalar_lea.vmem %s3, 136
        %v2364 = vld [vmem:[%s2363] sm:$0xf]
        %v2365 = vld [vmem:[%s2363 + $0x4] sm:$0xf]
        %s2366 = scalar_lea.vmem %s4, 17
        %v2367 = vld [vmem:[%s2366] sm:$0x1]
        %v2369 = vlaneseq
        %v2370 = vshrl.u32 %v2369, 7
        %v2371 = vsub.s32 0, %v2370
        %v2372 = vrot.slane %v2367, %v2371
        %v2376 = vunpack.c.l.b16 %v2364
        %v2377 = vunpack.c.l.b16 %v2365
        %v2378 = vpack.c.b16 %v2377, %v2376
        %2380 = vmatprep.subr.bf16.mxu0 0
        %2381 = vmatpush1.bf16.msra.mxu0 %v2378
        %2382 = vmatprep.subr.bf16.mxu0 0
        %2383 = vmatpush1.bf16.msra.mxu0 0
        %2384 = vmatprep.subr.bf16.mxu0 0
        %2385 = vmatpush1.bf16.msra.mxu0 0
        %2386 = vmatprep.subr.bf16.mxu0 0
        %2387 = vmatpush1.bf16.msra.mxu0 0
        %2388 = vmatprep.subr.bf16.mxu0 0
        %2389 = vmatpush1.bf16.msra.mxu0 0
        %2390 = vmatprep.subr.bf16.mxu0 0
        %2391 = vmatpush1.bf16.msra.mxu0 0
        %2392 = vmatprep.subr.bf16.mxu0 0
        %2393 = vmatpush1.bf16.msra.mxu0 0
        %2394 = vmatprep.subr.bf16.mxu0 0
        %2395 = vmatpush1.bf16.msra.mxu0 0
        %2396 = vmatprep.subr.bf16.mxu0 0
        %2397 = vmatpush1.bf16.msra.mxu0 0
        %2398 = vmatprep.subr.bf16.mxu0 0
        %2399 = vmatpush1.bf16.msra.mxu0 0
        %2400 = vmatprep.subr.bf16.mxu0 0
        %2401 = vmatpush1.bf16.msra.mxu0 0
        %2402 = vmatprep.subr.bf16.mxu0 0
        %2403 = vmatpush1.bf16.msra.mxu0 0
        %2404 = vmatprep.subr.bf16.mxu0 0
        %2405 = vmatpush1.bf16.msra.mxu0 0
        %2406 = vmatprep.subr.bf16.mxu0 0
        %2407 = vmatpush1.bf16.msra.mxu0 0
        %2408 = vmatprep.subr.bf16.mxu0 0
        %2409 = vmatpush1.bf16.msra.mxu0 0
        %2410 = vmatprep.subr.bf16.mxu0 0
        %2411 = vmatpush1.bf16.msra.mxu0 0
        %2412 = vmatprep.mubr.bf16.mxu0 0
        %2413 = vmatmul.mubr.bf16.gmra.mrb[0].mxu0 %v2040
        %v2414 = vpop.f32.mrb[0].mxu0
        %v2415 = vadd.f32 %v2372, %v2414
        %v2416 = vpop.f32.mrb[0].mxu0
        %v2417 = vpop.f32.mrb[0].mxu0
        %v2418 = vpop.f32.mrb[0].mxu0
        %2419 = vdwg.mxu0
        %s2420 = scalar_lea.vmem %s3, 168
        %v2421 = vld [vmem:[%s2420] sm:$0xf]
        %v2422 = vld [vmem:[%s2420 + $0x4] sm:$0xf]
        %s2423 = scalar_lea.vmem %s4, 21
        %v2424 = vld [vmem:[%s2423] sm:$0x1]
        %v2426 = vlaneseq
        %v2427 = vshrl.u32 %v2426, 7
        %v2428 = vsub.s32 0, %v2427
        %v2429 = vrot.slane %v2424, %v2428
        %v2433 = vunpack.c.l.b16 %v2421
        %v2434 = vunpack.c.l.b16 %v2422
        %v2435 = vpack.c.b16 %v2434, %v2433
        %2437 = vmatprep.subr.bf16.mxu0 0
        %2438 = vmatpush1.bf16.msra.mxu0 %v2435
        %2439 = vmatprep.subr.bf16.mxu0 0
        %2440 = vmatpush1.bf16.msra.mxu0 0
        %2441 = vmatprep.subr.bf16.mxu0 0
        %2442 = vmatpush1.bf16.msra.mxu0 0
        %2443 = vmatprep.subr.bf16.mxu0 0
        %2444 = vmatpush1.bf16.msra.mxu0 0
        %2445 = vmatprep.subr.bf16.mxu0 0
        %2446 = vmatpush1.bf16.msra.mxu0 0
        %2447 = vmatprep.subr.bf16.mxu0 0
        %2448 = vmatpush1.bf16.msra.mxu0 0
        %2449 = vmatprep.subr.bf16.mxu0 0
        %2450 = vmatpush1.bf16.msra.mxu0 0
        %2451 = vmatprep.subr.bf16.mxu0 0
        %2452 = vmatpush1.bf16.msra.mxu0 0
        %2453 = vmatprep.subr.bf16.mxu0 0
        %2454 = vmatpush1.bf16.msra.mxu0 0
        %2455 = vmatprep.subr.bf16.mxu0 0
        %2456 = vmatpush1.bf16.msra.mxu0 0
        %2457 = vmatprep.subr.bf16.mxu0 0
        %2458 = vmatpush1.bf16.msra.mxu0 0
        %2459 = vmatprep.subr.bf16.mxu0 0
        %2460 = vmatpush1.bf16.msra.mxu0 0
        %2461 = vmatprep.subr.bf16.mxu0 0
        %2462 = vmatpush1.bf16.msra.mxu0 0
        %2463 = vmatprep.subr.bf16.mxu0 0
        %2464 = vmatpush1.bf16.msra.mxu0 0
        %2465 = vmatprep.subr.bf16.mxu0 0
        %2466 = vmatpush1.bf16.msra.mxu0 0
        %2467 = vmatprep.subr.bf16.mxu0 0
        %2468 = vmatpush1.bf16.msra.mxu0 0
        %2469 = vmatprep.mubr.bf16.mxu0 0
        %2470 = vmatmul.mubr.bf16.gmra.mrb[0].mxu0 %v2040
        %v2471 = vpop.f32.mrb[0].mxu0
        %v2472 = vadd.f32 %v2429, %v2471
        %v2473 = vpop.f32.mrb[0].mxu0
        %v2474 = vpop.f32.mrb[0].mxu0
        %v2475 = vpop.f32.mrb[0].mxu0
        %2476 = vdwg.mxu0
        %v2477 = vpack.c.bf16 %v2358, %v2358
        %v2478 = vpack.c.bf16 %v2415, %v2415
        %v2480 = vsel %vm655, %v2477, 0
        %v2483 = vsel %vm655, %v2478, 0
        %2485 = vmatprep.subr.bf16.mxu0 0
        %2486 = vmatpush1.bf16.xpose.msra.mxu0 %v2483
        %2487 = vmatprep.subr.bf16.mxu0 0
        %2488 = vmatpush1.bf16.xpose.msra.mxu0 0
        %2489 = vmatprep.subr.bf16.mxu0 0
        %2490 = vmatpush1.bf16.xpose.msra.mxu0 0
        %2491 = vmatprep.subr.bf16.mxu0 0
        %2492 = vmatpush1.bf16.xpose.msra.mxu0 0
        %2493 = vmatprep.subr.bf16.mxu0 0
        %2494 = vmatpush1.bf16.xpose.msra.mxu0 0
        %2495 = vmatprep.subr.bf16.mxu0 0
        %2496 = vmatpush1.bf16.xpose.msra.mxu0 0
        %2497 = vmatprep.subr.bf16.mxu0 0
        %2498 = vmatpush1.bf16.xpose.msra.mxu0 0
        %2499 = vmatprep.subr.bf16.mxu0 0
        %2500 = vmatpush1.bf16.xpose.msra.mxu0 0
        %2501 = vmatprep.subr.bf16.mxu0 0
        %2502 = vmatpush1.bf16.xpose.msra.mxu0 0
        %2503 = vmatprep.subr.bf16.mxu0 0
        %2504 = vmatpush1.bf16.xpose.msra.mxu0 0
        %2505 = vmatprep.subr.bf16.mxu0 0
        %2506 = vmatpush1.bf16.xpose.msra.mxu0 0
        %2507 = vmatprep.subr.bf16.mxu0 0
        %2508 = vmatpush1.bf16.xpose.msra.mxu0 0
        %2509 = vmatprep.subr.bf16.mxu0 0
        %2510 = vmatpush1.bf16.xpose.msra.mxu0 0
        %2511 = vmatprep.subr.bf16.mxu0 0
        %2512 = vmatpush1.bf16.xpose.msra.mxu0 0
        %2513 = vmatprep.subr.bf16.mxu0 0
        %2514 = vmatpush1.bf16.xpose.msra.mxu0 0
        %2515 = vmatprep.subr.bf16.mxu0 0
        %2516 = vmatpush1.bf16.xpose.msra.mxu0 0
        %2517 = vmatprep.mubr.bf16.mxu0 0
        %2518 = vmatmul.mubr.bf16.gmra.mrb[0].mxu0 %v2480
        %v2519 = vpop.f32.mrb[0].mxu0
        %v2520 = vadd.f32 0.0, %v2519
        %v2521 = vpop.f32.mrb[0].mxu0
        %v2522 = vpop.f32.mrb[0].mxu0
        %v2523 = vpop.f32.mrb[0].mxu0
        %2524 = vdwg.mxu0
        %v2525 = vsel %vm702, %v2520, -inf
        %2526 = vmax.xlane.f32.xlu0 %v2525
        %v2527 = vpop.xlane.xlu0 %2526
        %v2528 = vsub.f32 %v2520, %v2527
        %v2529 = vmul.f32 %v2528, 1.442695
        %v2530 = vpow.pop %v2529
        %v2531 = vsel %vm702, %v2530, 0.0
        %2532 = vadd.xlane.f32.xlu0 %v2531
        %v2533 = vpop.xlane.xlu0 %2532
        %v2534 = vrcp.pop %v2533
        %v2535 = vmul.f32 %v2530, %v2534
        %v2536 = vpack.c.bf16 %v2535, %v2535
        %v2537 = vpack.c.bf16 %v2472, %v2472
        %v2539 = vsel %vm702, %v2536, 0
        %v2542 = vsel %vm719, %v2537, 0
        %2544 = vmatprep.subr.bf16.mxu0 0
        %2545 = vmatpush1.bf16.msra.mxu0 %v2542
        %2546 = vmatprep.subr.bf16.mxu0 0
        %2547 = vmatpush1.bf16.msra.mxu0 0
        %2548 = vmatprep.subr.bf16.mxu0 0
        %2549 = vmatpush1.bf16.msra.mxu0 0
        %2550 = vmatprep.subr.bf16.mxu0 0
        %2551 = vmatpush1.bf16.msra.mxu0 0
        %2552 = vmatprep.subr.bf16.mxu0 0
        %2553 = vmatpush1.bf16.msra.mxu0 0
        %2554 = vmatprep.subr.bf16.mxu0 0
        %2555 = vmatpush1.bf16.msra.mxu0 0
        %2556 = vmatprep.subr.bf16.mxu0 0
        %2557 = vmatpush1.bf16.msra.mxu0 0
        %2558 = vmatprep.subr.bf16.mxu0 0
        %2559 = vmatpush1.bf16.msra.mxu0 0
        %2560 = vmatprep.subr.bf16.mxu0 0
        %2561 = vmatpush1.bf16.msra.mxu0 0
        %2562 = vmatprep.subr.bf16.mxu0 0
        %2563 = vmatpush1.bf16.msra.mxu0 0
        %2564 = vmatprep.subr.bf16.mxu0 0
        %2565 = vmatpush1.bf16.msra.mxu0 0
        %2566 = vmatprep.subr.bf16.mxu0 0
        %2567 = vmatpush1.bf16.msra.mxu0 0
        %2568 = vmatprep.subr.bf16.mxu0 0
        %2569 = vmatpush1.bf16.msra.mxu0 0
        %2570 = vmatprep.subr.bf16.mxu0 0
        %2571 = vmatpush1.bf16.msra.mxu0 0
        %2572 = vmatprep.subr.bf16.mxu0 0
        %2573 = vmatpush1.bf16.msra.mxu0 0
        %2574 = vmatprep.subr.bf16.mxu0 0
        %2575 = vmatpush1.bf16.msra.mxu0 0
        %2576 = vmatprep.mubr.bf16.mxu0 0
        %2577 = vmatmul.mubr.bf16.gmra.mrb[0].mxu0 %v2539
        %v2578 = vpop.f32.mrb[0].mxu0
        %v2579 = vadd.f32 0.0, %v2578
        %v2580 = vpop.f32.mrb[0].mxu0
        %v2581 = vpop.f32.mrb[0].mxu0
        %v2582 = vpop.f32.mrb[0].mxu0
        %2583 = vdwg.mxu0
        %v2584 = vpack.c.bf16 %v2579, %v2579
        %s2585 = scalar_lea.vmem %s5, 10
        %v2586 = vld [vmem:[%s2585] sm:$0x3]
        %v2588 = vsel %vm655, %v2584, 0
        %v2591 = vsel %vm1049, %v2586, 0
        %2593 = vmatprep.subr.bf16.mxu0 0
        %2594 = vmatpush1.bf16.msra.mxu0 %v2591
        %2595 = vmatprep.subr.bf16.mxu0 0
        %2596 = vmatpush1.bf16.msra.mxu0 0
        %2597 = vmatprep.subr.bf16.mxu0 0
        %2598 = vmatpush1.bf16.msra.mxu0 0
        %2599 = vmatprep.subr.bf16.mxu0 0
        %2600 = vmatpush1.bf16.msra.mxu0 0
        %2601 = vmatprep.subr.bf16.mxu0 0
        %2602 = vmatpush1.bf16.msra.mxu0 0
        %2603 = vmatprep.subr.bf16.mxu0 0
        %2604 = vmatpush1.bf16.msra.mxu0 0
        %2605 = vmatprep.subr.bf16.mxu0 0
        %2606 = vmatpush1.bf16.msra.mxu0 0
        %2607 = vmatprep.subr.bf16.mxu0 0
        %2608 = vmatpush1.bf16.msra.mxu0 0
        %2609 = vmatprep.subr.bf16.mxu0 0
        %2610 = vmatpush1.bf16.msra.mxu0 0
        %2611 = vmatprep.subr.bf16.mxu0 0
        %2612 = vmatpush1.bf16.msra.mxu0 0
        %2613 = vmatprep.subr.bf16.mxu0 0
        %2614 = vmatpush1.bf16.msra.mxu0 0
        %2615 = vmatprep.subr.bf16.mxu0 0
        %2616 = vmatpush1.bf16.msra.mxu0 0
        %2617 = vmatprep.subr.bf16.mxu0 0
        %2618 = vmatpush1.bf16.msra.mxu0 0
        %2619 = vmatprep.subr.bf16.mxu0 0
        %2620 = vmatpush1.bf16.msra.mxu0 0
        %2621 = vmatprep.subr.bf16.mxu0 0
        %2622 = vmatpush1.bf16.msra.mxu0 0
        %2623 = vmatprep.subr.bf16.mxu0 0
        %2624 = vmatpush1.bf16.msra.mxu0 0
        %2625 = vmatprep.mubr.bf16.mxu0 0
        %2626 = vmatmul.mubr.bf16.gmra.mrb[0].mxu0 %v2588
        %v2627 = vpop.f32.mrb[0].mxu0
        %v2628 = vadd.f32 0.0, %v2627
        %v2629 = vpop.f32.mrb[0].mxu0
        %v2630 = vpop.f32.mrb[0].mxu0
        %v2631 = vpop.f32.mrb[0].mxu0
        %2632 = vdwg.mxu0
        %v2634 = vsel %vm655, %v2303, 0
        %v2637 = vsel %vm1049, %v2305, 0
        %2639 = vmatprep.subr.bf16.mxu0 0
        %2640 = vmatpush1.bf16.msra.mxu0 %v2637
        %2641 = vmatprep.subr.bf16.mxu0 0
        %2642 = vmatpush1.bf16.msra.mxu0 0
        %2643 = vmatprep.subr.bf16.mxu0 0
        %2644 = vmatpush1.bf16.msra.mxu0 0
        %2645 = vmatprep.subr.bf16.mxu0 0
        %2646 = vmatpush1.bf16.msra.mxu0 0
        %2647 = vmatprep.subr.bf16.mxu0 0
        %2648 = vmatpush1.bf16.msra.mxu0 0
        %2649 = vmatprep.subr.bf16.mxu0 0
        %2650 = vmatpush1.bf16.msra.mxu0 0
        %2651 = vmatprep.subr.bf16.mxu0 0
        %2652 = vmatpush1.bf16.msra.mxu0 0
        %2653 = vmatprep.subr.bf16.mxu0 0
        %2654 = vmatpush1.bf16.msra.mxu0 0
        %2655 = vmatprep.subr.bf16.mxu0 0
        %2656 = vmatpush1.bf16.msra.mxu0 0
        %2657 = vmatprep.subr.bf16.mxu0 0
        %2658 = vmatpush1.bf16.msra.mxu0 0
        %2659 = vmatprep.subr.bf16.mxu0 0
        %2660 = vmatpush1.bf16.msra.mxu0 0
        %2661 = vmatprep.subr.bf16.mxu0 0
        %2662 = vmatpush1.bf16.msra.mxu0 0
        %2663 = vmatprep.subr.bf16.mxu0 0
        %2664 = vmatpush1.bf16.msra.mxu0 0
        %2665 = vmatprep.subr.bf16.mxu0 0
        %2666 = vmatpush1.bf16.msra.mxu0 0
        %2667 = vmatprep.subr.bf16.mxu0 0
        %2668 = vmatpush1.bf16.msra.mxu0 0
        %2669 = vmatprep.subr.bf16.mxu0 0
        %2670 = vmatpush1.bf16.msra.mxu0 0
        %2671 = vmatprep.mubr.bf16.mxu0 0
        %2672 = vmatmul.mubr.bf16.gmra.mrb[0].mxu0 %v2634
        %v2673 = vpop.f32.mrb[0].mxu0
        %v2674 = vadd.f32 %v2628, %v2673
        %v2675 = vpop.f32.mrb[0].mxu0
        %v2676 = vpop.f32.mrb[0].mxu0
        %v2677 = vpop.f32.mrb[0].mxu0
        %2678 = vdwg.mxu0
        %s2679 = scalar_lea.vmem %s3, 112
        %v2680 = vld [vmem:[%s2679] sm:$0xf]
        %v2681 = vld [vmem:[%s2679 + $0x4] sm:$0xf]
        %s2682 = scalar_lea.vmem %s4, 14
        %v2683 = vld [vmem:[%s2682] sm:$0x1]
        %v2685 = vlaneseq
        %v2686 = vshrl.u32 %v2685, 7
        %v2687 = vsub.s32 0, %v2686
        %v2688 = vrot.slane %v2683, %v2687
        %v2692 = vunpack.c.l.b16 %v2680
        %v2693 = vunpack.c.l.b16 %v2681
        %v2694 = vpack.c.b16 %v2693, %v2692
        %2696 = vmatprep.subr.bf16.mxu0 0
        %2697 = vmatpush1.bf16.msra.mxu0 %v2694
        %2698 = vmatprep.subr.bf16.mxu0 0
        %2699 = vmatpush1.bf16.msra.mxu0 0
        %2700 = vmatprep.subr.bf16.mxu0 0
        %2701 = vmatpush1.bf16.msra.mxu0 0
        %2702 = vmatprep.subr.bf16.mxu0 0
        %2703 = vmatpush1.bf16.msra.mxu0 0
        %2704 = vmatprep.subr.bf16.mxu0 0
        %2705 = vmatpush1.bf16.msra.mxu0 0
        %2706 = vmatprep.subr.bf16.mxu0 0
        %2707 = vmatpush1.bf16.msra.mxu0 0
        %2708 = vmatprep.subr.bf16.mxu0 0
        %2709 = vmatpush1.bf16.msra.mxu0 0
        %2710 = vmatprep.subr.bf16.mxu0 0
        %2711 = vmatpush1.bf16.msra.mxu0 0
        %2712 = vmatprep.subr.bf16.mxu0 0
        %2713 = vmatpush1.bf16.msra.mxu0 0
        %2714 = vmatprep.subr.bf16.mxu0 0
        %2715 = vmatpush1.bf16.msra.mxu0 0
        %2716 = vmatprep.subr.bf16.mxu0 0
        %2717 = vmatpush1.bf16.msra.mxu0 0
        %2718 = vmatprep.subr.bf16.mxu0 0
        %2719 = vmatpush1.bf16.msra.mxu0 0
        %2720 = vmatprep.subr.bf16.mxu0 0
        %2721 = vmatpush1.bf16.msra.mxu0 0
        %2722 = vmatprep.subr.bf16.mxu0 0
        %2723 = vmatpush1.bf16.msra.mxu0 0
        %2724 = vmatprep.subr.bf16.mxu0 0
        %2725 = vmatpush1.bf16.msra.mxu0 0
        %2726 = vmatprep.subr.bf16.mxu0 0
        %2727 = vmatpush1.bf16.msra.mxu0 0
        %2728 = vmatprep.mubr.bf16.mxu0 0
        %2729 = vmatmul.mubr.bf16.gmra.mrb[0].mxu0 %v2040
        %v2730 = vpop.f32.mrb[0].mxu0
        %v2731 = vadd.f32 %v2688, %v2730
        %v2732 = vpop.f32.mrb[0].mxu0
        %v2733 = vpop.f32.mrb[0].mxu0
        %v2734 = vpop.f32.mrb[0].mxu0
        %2735 = vdwg.mxu0
        %s2736 = scalar_lea.vmem %s3, 144
        %v2737 = vld [vmem:[%s2736] sm:$0xf]
        %v2738 = vld [vmem:[%s2736 + $0x4] sm:$0xf]
        %s2739 = scalar_lea.vmem %s4, 18
        %v2740 = vld [vmem:[%s2739] sm:$0x1]
        %v2742 = vlaneseq
        %v2743 = vshrl.u32 %v2742, 7
        %v2744 = vsub.s32 0, %v2743
        %v2745 = vrot.slane %v2740, %v2744
        %v2749 = vunpack.c.l.b16 %v2737
        %v2750 = vunpack.c.l.b16 %v2738
        %v2751 = vpack.c.b16 %v2750, %v2749
        %2753 = vmatprep.subr.bf16.mxu0 0
        %2754 = vmatpush1.bf16.msra.mxu0 %v2751
        %2755 = vmatprep.subr.bf16.mxu0 0
        %2756 = vmatpush1.bf16.msra.mxu0 0
        %2757 = vmatprep.subr.bf16.mxu0 0
        %2758 = vmatpush1.bf16.msra.mxu0 0
        %2759 = vmatprep.subr.bf16.mxu0 0
        %2760 = vmatpush1.bf16.msra.mxu0 0
        %2761 = vmatprep.subr.bf16.mxu0 0
        %2762 = vmatpush1.bf16.msra.mxu0 0
        %2763 = vmatprep.subr.bf16.mxu0 0
        %2764 = vmatpush1.bf16.msra.mxu0 0
        %2765 = vmatprep.subr.bf16.mxu0 0
        %2766 = vmatpush1.bf16.msra.mxu0 0
        %2767 = vmatprep.subr.bf16.mxu0 0
        %2768 = vmatpush1.bf16.msra.mxu0 0
        %2769 = vmatprep.subr.bf16.mxu0 0
        %2770 = vmatpush1.bf16.msra.mxu0 0
        %2771 = vmatprep.subr.bf16.mxu0 0
        %2772 = vmatpush1.bf16.msra.mxu0 0
        %2773 = vmatprep.subr.bf16.mxu0 0
        %2774 = vmatpush1.bf16.msra.mxu0 0
        %2775 = vmatprep.subr.bf16.mxu0 0
        %2776 = vmatpush1.bf16.msra.mxu0 0
        %2777 = vmatprep.subr.bf16.mxu0 0
        %2778 = vmatpush1.bf16.msra.mxu0 0
        %2779 = vmatprep.subr.bf16.mxu0 0
        %2780 = vmatpush1.bf16.msra.mxu0 0
        %2781 = vmatprep.subr.bf16.mxu0 0
        %2782 = vmatpush1.bf16.msra.mxu0 0
        %2783 = vmatprep.subr.bf16.mxu0 0
        %2784 = vmatpush1.bf16.msra.mxu0 0
        %2785 = vmatprep.mubr.bf16.mxu0 0
        %2786 = vmatmul.mubr.bf16.gmra.mrb[0].mxu0 %v2040
        %v2787 = vpop.f32.mrb[0].mxu0
        %v2788 = vadd.f32 %v2745, %v2787
        %v2789 = vpop.f32.mrb[0].mxu0
        %v2790 = vpop.f32.mrb[0].mxu0
        %v2791 = vpop.f32.mrb[0].mxu0
        %2792 = vdwg.mxu0
        %s2793 = scalar_lea.vmem %s3, 176
        %v2794 = vld [vmem:[%s2793] sm:$0xf]
        %v2795 = vld [vmem:[%s2793 + $0x4] sm:$0xf]
        %s2796 = scalar_lea.vmem %s4, 22
        %v2797 = vld [vmem:[%s2796] sm:$0x1]
        %v2799 = vlaneseq
        %v2800 = vshrl.u32 %v2799, 7
        %v2801 = vsub.s32 0, %v2800
        %v2802 = vrot.slane %v2797, %v2801
        %v2806 = vunpack.c.l.b16 %v2794
        %v2807 = vunpack.c.l.b16 %v2795
        %v2808 = vpack.c.b16 %v2807, %v2806
        %2810 = vmatprep.subr.bf16.mxu0 0
        %2811 = vmatpush1.bf16.msra.mxu0 %v2808
        %2812 = vmatprep.subr.bf16.mxu0 0
        %2813 = vmatpush1.bf16.msra.mxu0 0
        %2814 = vmatprep.subr.bf16.mxu0 0
        %2815 = vmatpush1.bf16.msra.mxu0 0
        %2816 = vmatprep.subr.bf16.mxu0 0
        %2817 = vmatpush1.bf16.msra.mxu0 0
        %2818 = vmatprep.subr.bf16.mxu0 0
        %2819 = vmatpush1.bf16.msra.mxu0 0
        %2820 = vmatprep.subr.bf16.mxu0 0
        %2821 = vmatpush1.bf16.msra.mxu0 0
        %2822 = vmatprep.subr.bf16.mxu0 0
        %2823 = vmatpush1.bf16.msra.mxu0 0
        %2824 = vmatprep.subr.bf16.mxu0 0
        %2825 = vmatpush1.bf16.msra.mxu0 0
        %2826 = vmatprep.subr.bf16.mxu0 0
        %2827 = vmatpush1.bf16.msra.mxu0 0
        %2828 = vmatprep.subr.bf16.mxu0 0
        %2829 = vmatpush1.bf16.msra.mxu0 0
        %2830 = vmatprep.subr.bf16.mxu0 0
        %2831 = vmatpush1.bf16.msra.mxu0 0
        %2832 = vmatprep.subr.bf16.mxu0 0
        %2833 = vmatpush1.bf16.msra.mxu0 0
        %2834 = vmatprep.subr.bf16.mxu0 0
        %2835 = vmatpush1.bf16.msra.mxu0 0
        %2836 = vmatprep.subr.bf16.mxu0 0
        %2837 = vmatpush1.bf16.msra.mxu0 0
        %2838 = vmatprep.subr.bf16.mxu0 0
        %2839 = vmatpush1.bf16.msra.mxu0 0
        %2840 = vmatprep.subr.bf16.mxu0 0
        %2841 = vmatpush1.bf16.msra.mxu0 0
        %2842 = vmatprep.mubr.bf16.mxu0 0
        %2843 = vmatmul.mubr.bf16.gmra.mrb[0].mxu0 %v2040
        %v2844 = vpop.f32.mrb[0].mxu0
        %v2845 = vadd.f32 %v2802, %v2844
        %v2846 = vpop.f32.mrb[0].mxu0
        %v2847 = vpop.f32.mrb[0].mxu0
        %v2848 = vpop.f32.mrb[0].mxu0
        %2849 = vdwg.mxu0
        %v2850 = vpack.c.bf16 %v2731, %v2731
        %v2851 = vpack.c.bf16 %v2788, %v2788
        %v2853 = vsel %vm655, %v2850, 0
        %v2856 = vsel %vm655, %v2851, 0
        %2858 = vmatprep.subr.bf16.mxu0 0
        %2859 = vmatpush1.bf16.xpose.msra.mxu0 %v2856
        %2860 = vmatprep.subr.bf16.mxu0 0
        %2861 = vmatpush1.bf16.xpose.msra.mxu0 0
        %2862 = vmatprep.subr.bf16.mxu0 0
        %2863 = vmatpush1.bf16.xpose.msra.mxu0 0
        %2864 = vmatprep.subr.bf16.mxu0 0
        %2865 = vmatpush1.bf16.xpose.msra.mxu0 0
        %2866 = vmatprep.subr.bf16.mxu0 0
        %2867 = vmatpush1.bf16.xpose.msra.mxu0 0
        %2868 = vmatprep.subr.bf16.mxu0 0
        %2869 = vmatpush1.bf16.xpose.msra.mxu0 0
        %2870 = vmatprep.subr.bf16.mxu0 0
        %2871 = vmatpush1.bf16.xpose.msra.mxu0 0
        %2872 = vmatprep.subr.bf16.mxu0 0
        %2873 = vmatpush1.bf16.xpose.msra.mxu0 0
        %2874 = vmatprep.subr.bf16.mxu0 0
        %2875 = vmatpush1.bf16.xpose.msra.mxu0 0
        %2876 = vmatprep.subr.bf16.mxu0 0
        %2877 = vmatpush1.bf16.xpose.msra.mxu0 0
        %2878 = vmatprep.subr.bf16.mxu0 0
        %2879 = vmatpush1.bf16.xpose.msra.mxu0 0
        %2880 = vmatprep.subr.bf16.mxu0 0
        %2881 = vmatpush1.bf16.xpose.msra.mxu0 0
        %2882 = vmatprep.subr.bf16.mxu0 0
        %2883 = vmatpush1.bf16.xpose.msra.mxu0 0
        %2884 = vmatprep.subr.bf16.mxu0 0
        %2885 = vmatpush1.bf16.xpose.msra.mxu0 0
        %2886 = vmatprep.subr.bf16.mxu0 0
        %2887 = vmatpush1.bf16.xpose.msra.mxu0 0
        %2888 = vmatprep.subr.bf16.mxu0 0
        %2889 = vmatpush1.bf16.xpose.msra.mxu0 0
        %2890 = vmatprep.mubr.bf16.mxu0 0
        %2891 = vmatmul.mubr.bf16.gmra.mrb[0].mxu0 %v2853
        %v2892 = vpop.f32.mrb[0].mxu0
        %v2893 = vadd.f32 0.0, %v2892
        %v2894 = vpop.f32.mrb[0].mxu0
        %v2895 = vpop.f32.mrb[0].mxu0
        %v2896 = vpop.f32.mrb[0].mxu0
        %2897 = vdwg.mxu0
        %v2898 = vsel %vm702, %v2893, -inf
        %2899 = vmax.xlane.f32.xlu0 %v2898
        %v2900 = vpop.xlane.xlu0 %2899
        %v2901 = vsub.f32 %v2893, %v2900
        %v2902 = vmul.f32 %v2901, 1.442695
        %v2903 = vpow.pop %v2902
        %v2904 = vsel %vm702, %v2903, 0.0
        %2905 = vadd.xlane.f32.xlu0 %v2904
        %v2906 = vpop.xlane.xlu0 %2905
        %v2907 = vrcp.pop %v2906
        %v2908 = vmul.f32 %v2903, %v2907
        %v2909 = vpack.c.bf16 %v2908, %v2908
        %v2910 = vpack.c.bf16 %v2845, %v2845
        %v2912 = vsel %vm702, %v2909, 0
        %v2915 = vsel %vm719, %v2910, 0
        %2917 = vmatprep.subr.bf16.mxu0 0
        %2918 = vmatpush1.bf16.msra.mxu0 %v2915
        %2919 = vmatprep.subr.bf16.mxu0 0
        %2920 = vmatpush1.bf16.msra.mxu0 0
        %2921 = vmatprep.subr.bf16.mxu0 0
        %2922 = vmatpush1.bf16.msra.mxu0 0
        %2923 = vmatprep.subr.bf16.mxu0 0
        %2924 = vmatpush1.bf16.msra.mxu0 0
        %2925 = vmatprep.subr.bf16.mxu0 0
        %2926 = vmatpush1.bf16.msra.mxu0 0
        %2927 = vmatprep.subr.bf16.mxu0 0
        %2928 = vmatpush1.bf16.msra.mxu0 0
        %2929 = vmatprep.subr.bf16.mxu0 0
        %2930 = vmatpush1.bf16.msra.mxu0 0
        %2931 = vmatprep.subr.bf16.mxu0 0
        %2932 = vmatpush1.bf16.msra.mxu0 0
        %2933 = vmatprep.subr.bf16.mxu0 0
        %2934 = vmatpush1.bf16.msra.mxu0 0
        %2935 = vmatprep.subr.bf16.mxu0 0
        %2936 = vmatpush1.bf16.msra.mxu0 0
        %2937 = vmatprep.subr.bf16.mxu0 0
        %2938 = vmatpush1.bf16.msra.mxu0 0
        %2939 = vmatprep.subr.bf16.mxu0 0
        %2940 = vmatpush1.bf16.msra.mxu0 0
        %2941 = vmatprep.subr.bf16.mxu0 0
        %2942 = vmatpush1.bf16.msra.mxu0 0
        %2943 = vmatprep.subr.bf16.mxu0 0
        %2944 = vmatpush1.bf16.msra.mxu0 0
        %2945 = vmatprep.subr.bf16.mxu0 0
        %2946 = vmatpush1.bf16.msra.mxu0 0
        %2947 = vmatprep.subr.bf16.mxu0 0
        %2948 = vmatpush1.bf16.msra.mxu0 0
        %2949 = vmatprep.mubr.bf16.mxu0 0
        %2950 = vmatmul.mubr.bf16.gmra.mrb[0].mxu0 %v2912
        %v2951 = vpop.f32.mrb[0].mxu0
        %v2952 = vadd.f32 0.0, %v2951
        %v2953 = vpop.f32.mrb[0].mxu0
        %v2954 = vpop.f32.mrb[0].mxu0
        %v2955 = vpop.f32.mrb[0].mxu0
        %2956 = vdwg.mxu0
        %v2957 = vpack.c.bf16 %v2952, %v2952
        %s2958 = scalar_lea.vmem %s5, 12
        %v2959 = vld [vmem:[%s2958] sm:$0x3]
        %v2961 = vsel %vm655, %v2957, 0
        %v2964 = vsel %vm1049, %v2959, 0
        %2966 = vmatprep.subr.bf16.mxu0 0
        %2967 = vmatpush1.bf16.msra.mxu0 %v2964
        %2968 = vmatprep.subr.bf16.mxu0 0
        %2969 = vmatpush1.bf16.msra.mxu0 0
        %2970 = vmatprep.subr.bf16.mxu0 0
        %2971 = vmatpush1.bf16.msra.mxu0 0
        %2972 = vmatprep.subr.bf16.mxu0 0
        %2973 = vmatpush1.bf16.msra.mxu0 0
        %2974 = vmatprep.subr.bf16.mxu0 0
        %2975 = vmatpush1.bf16.msra.mxu0 0
        %2976 = vmatprep.subr.bf16.mxu0 0
        %2977 = vmatpush1.bf16.msra.mxu0 0
        %2978 = vmatprep.subr.bf16.mxu0 0
        %2979 = vmatpush1.bf16.msra.mxu0 0
        %2980 = vmatprep.subr.bf16.mxu0 0
        %2981 = vmatpush1.bf16.msra.mxu0 0
        %2982 = vmatprep.subr.bf16.mxu0 0
        %2983 = vmatpush1.bf16.msra.mxu0 0
        %2984 = vmatprep.subr.bf16.mxu0 0
        %2985 = vmatpush1.bf16.msra.mxu0 0
        %2986 = vmatprep.subr.bf16.mxu0 0
        %2987 = vmatpush1.bf16.msra.mxu0 0
        %2988 = vmatprep.subr.bf16.mxu0 0
        %2989 = vmatpush1.bf16.msra.mxu0 0
        %2990 = vmatprep.subr.bf16.mxu0 0
        %2991 = vmatpush1.bf16.msra.mxu0 0
        %2992 = vmatprep.subr.bf16.mxu0 0
        %2993 = vmatpush1.bf16.msra.mxu0 0
        %2994 = vmatprep.subr.bf16.mxu0 0
        %2995 = vmatpush1.bf16.msra.mxu0 0
        %2996 = vmatprep.subr.bf16.mxu0 0
        %2997 = vmatpush1.bf16.msra.mxu0 0
        %2998 = vmatprep.mubr.bf16.mxu0 0
        %2999 = vmatmul.mubr.bf16.gmra.mrb[0].mxu0 %v2961
        %v3000 = vpop.f32.mrb[0].mxu0
        %v3001 = vadd.f32 0.0, %v3000
        %v3002 = vpop.f32.mrb[0].mxu0
        %v3003 = vpop.f32.mrb[0].mxu0
        %v3004 = vpop.f32.mrb[0].mxu0
        %3005 = vdwg.mxu0
        %v3006 = vadd.f32 %v2674, %v3001
        %s3007 = scalar_lea.vmem %s3, 120
        %v3008 = vld [vmem:[%s3007] sm:$0xf]
        %v3009 = vld [vmem:[%s3007 + $0x4] sm:$0xf]
        %s3010 = scalar_lea.vmem %s4, 15
        %v3011 = vld [vmem:[%s3010] sm:$0x1]
        %v3013 = vlaneseq
        %v3014 = vshrl.u32 %v3013, 7
        %v3015 = vsub.s32 0, %v3014
        %v3016 = vrot.slane %v3011, %v3015
        %v3020 = vunpack.c.l.b16 %v3008
        %v3021 = vunpack.c.l.b16 %v3009
        %v3022 = vpack.c.b16 %v3021, %v3020
        %3024 = vmatprep.subr.bf16.mxu0 0
        %3025 = vmatpush1.bf16.msra.mxu0 %v3022
        %3026 = vmatprep.subr.bf16.mxu0 0
        %3027 = vmatpush1.bf16.msra.mxu0 0
        %3028 = vmatprep.subr.bf16.mxu0 0
        %3029 = vmatpush1.bf16.msra.mxu0 0
        %3030 = vmatprep.subr.bf16.mxu0 0
        %3031 = vmatpush1.bf16.msra.mxu0 0
        %3032 = vmatprep.subr.bf16.mxu0 0
        %3033 = vmatpush1.bf16.msra.mxu0 0
        %3034 = vmatprep.subr.bf16.mxu0 0
        %3035 = vmatpush1.bf16.msra.mxu0 0
        %3036 = vmatprep.subr.bf16.mxu0 0
        %3037 = vmatpush1.bf16.msra.mxu0 0
        %3038 = vmatprep.subr.bf16.mxu0 0
        %3039 = vmatpush1.bf16.msra.mxu0 0
        %3040 = vmatprep.subr.bf16.mxu0 0
        %3041 = vmatpush1.bf16.msra.mxu0 0
        %3042 = vmatprep.subr.bf16.mxu0 0
        %3043 = vmatpush1.bf16.msra.mxu0 0
        %3044 = vmatprep.subr.bf16.mxu0 0
        %3045 = vmatpush1.bf16.msra.mxu0 0
        %3046 = vmatprep.subr.bf16.mxu0 0
        %3047 = vmatpush1.bf16.msra.mxu0 0
        %3048 = vmatprep.subr.bf16.mxu0 0
        %3049 = vmatpush1.bf16.msra.mxu0 0
        %3050 = vmatprep.subr.bf16.mxu0 0
        %3051 = vmatpush1.bf16.msra.mxu0 0
        %3052 = vmatprep.subr.bf16.mxu0 0
        %3053 = vmatpush1.bf16.msra.mxu0 0
        %3054 = vmatprep.subr.bf16.mxu0 0
        %3055 = vmatpush1.bf16.msra.mxu0 0
        %3056 = vmatprep.mubr.bf16.mxu0 0
        %3057 = vmatmul.mubr.bf16.gmra.mrb[0].mxu0 %v2040
        %v3058 = vpop.f32.mrb[0].mxu0
        %v3059 = vadd.f32 %v3016, %v3058
        %v3060 = vpop.f32.mrb[0].mxu0
        %v3061 = vpop.f32.mrb[0].mxu0
        %v3062 = vpop.f32.mrb[0].mxu0
        %3063 = vdwg.mxu0
        %s3064 = scalar_lea.vmem %s3, 152
        %v3065 = vld [vmem:[%s3064] sm:$0xf]
        %v3066 = vld [vmem:[%s3064 + $0x4] sm:$0xf]
        %s3067 = scalar_lea.vmem %s4, 19
        %v3068 = vld [vmem:[%s3067] sm:$0x1]
        %v3070 = vlaneseq
        %v3071 = vshrl.u32 %v3070, 7
        %v3072 = vsub.s32 0, %v3071
        %v3073 = vrot.slane %v3068, %v3072
        %v3077 = vunpack.c.l.b16 %v3065
        %v3078 = vunpack.c.l.b16 %v3066
        %v3079 = vpack.c.b16 %v3078, %v3077
        %3081 = vmatprep.subr.bf16.mxu0 0
        %3082 = vmatpush1.bf16.msra.mxu0 %v3079
        %3083 = vmatprep.subr.bf16.mxu0 0
        %3084 = vmatpush1.bf16.msra.mxu0 0
        %3085 = vmatprep.subr.bf16.mxu0 0
        %3086 = vmatpush1.bf16.msra.mxu0 0
        %3087 = vmatprep.subr.bf16.mxu0 0
        %3088 = vmatpush1.bf16.msra.mxu0 0
        %3089 = vmatprep.subr.bf16.mxu0 0
        %3090 = vmatpush1.bf16.msra.mxu0 0
        %3091 = vmatprep.subr.bf16.mxu0 0
        %3092 = vmatpush1.bf16.msra.mxu0 0
        %3093 = vmatprep.subr.bf16.mxu0 0
        %3094 = vmatpush1.bf16.msra.mxu0 0
        %3095 = vmatprep.subr.bf16.mxu0 0
        %3096 = vmatpush1.bf16.msra.mxu0 0
        %3097 = vmatprep.subr.bf16.mxu0 0
        %3098 = vmatpush1.bf16.msra.mxu0 0
        %3099 = vmatprep.subr.bf16.mxu0 0
        %3100 = vmatpush1.bf16.msra.mxu0 0
        %3101 = vmatprep.subr.bf16.mxu0 0
        %3102 = vmatpush1.bf16.msra.mxu0 0
        %3103 = vmatprep.subr.bf16.mxu0 0
        %3104 = vmatpush1.bf16.msra.mxu0 0
        %3105 = vmatprep.subr.bf16.mxu0 0
        %3106 = vmatpush1.bf16.msra.mxu0 0
        %3107 = vmatprep.subr.bf16.mxu0 0
        %3108 = vmatpush1.bf16.msra.mxu0 0
        %3109 = vmatprep.subr.bf16.mxu0 0
        %3110 = vmatpush1.bf16.msra.mxu0 0
        %3111 = vmatprep.subr.bf16.mxu0 0
        %3112 = vmatpush1.bf16.msra.mxu0 0
        %3113 = vmatprep.mubr.bf16.mxu0 0
        %3114 = vmatmul.mubr.bf16.gmra.mrb[0].mxu0 %v2040
        %v3115 = vpop.f32.mrb[0].mxu0
        %v3116 = vadd.f32 %v3073, %v3115
        %v3117 = vpop.f32.mrb[0].mxu0
        %v3118 = vpop.f32.mrb[0].mxu0
        %v3119 = vpop.f32.mrb[0].mxu0
        %3120 = vdwg.mxu0
        %s3121 = scalar_lea.vmem %s3, 184
        %v3122 = vld [vmem:[%s3121] sm:$0xf]
        %v3123 = vld [vmem:[%s3121 + $0x4] sm:$0xf]
        %s3124 = scalar_lea.vmem %s4, 23
        %v3125 = vld [vmem:[%s3124] sm:$0x1]
        %v3127 = vlaneseq
        %v3128 = vshrl.u32 %v3127, 7
        %v3129 = vsub.s32 0, %v3128
        %v3130 = vrot.slane %v3125, %v3129
        %v3134 = vunpack.c.l.b16 %v3122
        %v3135 = vunpack.c.l.b16 %v3123
        %v3136 = vpack.c.b16 %v3135, %v3134
        %3138 = vmatprep.subr.bf16.mxu0 0
        %3139 = vmatpush1.bf16.msra.mxu0 %v3136
        %3140 = vmatprep.subr.bf16.mxu0 0
        %3141 = vmatpush1.bf16.msra.mxu0 0
        %3142 = vmatprep.subr.bf16.mxu0 0
        %3143 = vmatpush1.bf16.msra.mxu0 0
        %3144 = vmatprep.subr.bf16.mxu0 0
        %3145 = vmatpush1.bf16.msra.mxu0 0
        %3146 = vmatprep.subr.bf16.mxu0 0
        %3147 = vmatpush1.bf16.msra.mxu0 0
        %3148 = vmatprep.subr.bf16.mxu0 0
        %3149 = vmatpush1.bf16.msra.mxu0 0
        %3150 = vmatprep.subr.bf16.mxu0 0
        %3151 = vmatpush1.bf16.msra.mxu0 0
        %3152 = vmatprep.subr.bf16.mxu0 0
        %3153 = vmatpush1.bf16.msra.mxu0 0
        %3154 = vmatprep.subr.bf16.mxu0 0
        %3155 = vmatpush1.bf16.msra.mxu0 0
        %3156 = vmatprep.subr.bf16.mxu0 0
        %3157 = vmatpush1.bf16.msra.mxu0 0
        %3158 = vmatprep.subr.bf16.mxu0 0
        %3159 = vmatpush1.bf16.msra.mxu0 0
        %3160 = vmatprep.subr.bf16.mxu0 0
        %3161 = vmatpush1.bf16.msra.mxu0 0
        %3162 = vmatprep.subr.bf16.mxu0 0
        %3163 = vmatpush1.bf16.msra.mxu0 0
        %3164 = vmatprep.subr.bf16.mxu0 0
        %3165 = vmatpush1.bf16.msra.mxu0 0
        %3166 = vmatprep.subr.bf16.mxu0 0
        %3167 = vmatpush1.bf16.msra.mxu0 0
        %3168 = vmatprep.subr.bf16.mxu0 0
        %3169 = vmatpush1.bf16.msra.mxu0 0
        %3170 = vmatprep.mubr.bf16.mxu0 0
        %3171 = vmatmul.mubr.bf16.gmra.mrb[0].mxu0 %v2040
        %v3172 = vpop.f32.mrb[0].mxu0
        %v3173 = vadd.f32 %v3130, %v3172
        %v3174 = vpop.f32.mrb[0].mxu0
        %v3175 = vpop.f32.mrb[0].mxu0
        %v3176 = vpop.f32.mrb[0].mxu0
        %3177 = vdwg.mxu0
        %v3178 = vpack.c.bf16 %v3059, %v3059
        %v3179 = vpack.c.bf16 %v3116, %v3116
        %v3181 = vsel %vm655, %v3178, 0
        %v3184 = vsel %vm655, %v3179, 0
        %3186 = vmatprep.subr.bf16.mxu0 0
        %3187 = vmatpush1.bf16.xpose.msra.mxu0 %v3184
        %3188 = vmatprep.subr.bf16.mxu0 0
        %3189 = vmatpush1.bf16.xpose.msra.mxu0 0
        %3190 = vmatprep.subr.bf16.mxu0 0
        %3191 = vmatpush1.bf16.xpose.msra.mxu0 0
        %3192 = vmatprep.subr.bf16.mxu0 0
        %3193 = vmatpush1.bf16.xpose.msra.mxu0 0
        %3194 = vmatprep.subr.bf16.mxu0 0
        %3195 = vmatpush1.bf16.xpose.msra.mxu0 0
        %3196 = vmatprep.subr.bf16.mxu0 0
        %3197 = vmatpush1.bf16.xpose.msra.mxu0 0
        %3198 = vmatprep.subr.bf16.mxu0 0
        %3199 = vmatpush1.bf16.xpose.msra.mxu0 0
        %3200 = vmatprep.subr.bf16.mxu0 0
        %3201 = vmatpush1.bf16.xpose.msra.mxu0 0
        %3202 = vmatprep.subr.bf16.mxu0 0
        %3203 = vmatpush1.bf16.xpose.msra.mxu0 0
        %3204 = vmatprep.subr.bf16.mxu0 0
        %3205 = vmatpush1.bf16.xpose.msra.mxu0 0
        %3206 = vmatprep.subr.bf16.mxu0 0
        %3207 = vmatpush1.bf16.xpose.msra.mxu0 0
        %3208 = vmatprep.subr.bf16.mxu0 0
        %3209 = vmatpush1.bf16.xpose.msra.mxu0 0
        %3210 = vmatprep.subr.bf16.mxu0 0
        %3211 = vmatpush1.bf16.xpose.msra.mxu0 0
        %3212 = vmatprep.subr.bf16.mxu0 0
        %3213 = vmatpush1.bf16.xpose.msra.mxu0 0
        %3214 = vmatprep.subr.bf16.mxu0 0
        %3215 = vmatpush1.bf16.xpose.msra.mxu0 0
        %3216 = vmatprep.subr.bf16.mxu0 0
        %3217 = vmatpush1.bf16.xpose.msra.mxu0 0
        %3218 = vmatprep.mubr.bf16.mxu0 0
        %3219 = vmatmul.mubr.bf16.gmra.mrb[0].mxu0 %v3181
        %v3220 = vpop.f32.mrb[0].mxu0
        %v3221 = vadd.f32 0.0, %v3220
        %v3222 = vpop.f32.mrb[0].mxu0
        %v3223 = vpop.f32.mrb[0].mxu0
        %v3224 = vpop.f32.mrb[0].mxu0
        %3225 = vdwg.mxu0
        %v3226 = vsel %vm702, %v3221, -inf
        %3227 = vmax.xlane.f32.xlu0 %v3226
        %v3228 = vpop.xlane.xlu0 %3227
        %v3229 = vsub.f32 %v3221, %v3228
        %v3230 = vmul.f32 %v3229, 1.442695
        %v3231 = vpow.pop %v3230
        %v3232 = vsel %vm702, %v3231, 0.0
        %3233 = vadd.xlane.f32.xlu0 %v3232
        %v3234 = vpop.xlane.xlu0 %3233
        %v3235 = vrcp.pop %v3234
        %v3236 = vmul.f32 %v3231, %v3235
        %v3237 = vpack.c.bf16 %v3236, %v3236
        %v3238 = vpack.c.bf16 %v3173, %v3173
        %v3240 = vsel %vm702, %v3237, 0
        %v3243 = vsel %vm719, %v3238, 0
        %3245 = vmatprep.subr.bf16.mxu0 0
        %3246 = vmatpush1.bf16.msra.mxu0 %v3243
        %3247 = vmatprep.subr.bf16.mxu0 0
        %3248 = vmatpush1.bf16.msra.mxu0 0
        %3249 = vmatprep.subr.bf16.mxu0 0
        %3250 = vmatpush1.bf16.msra.mxu0 0
        %3251 = vmatprep.subr.bf16.mxu0 0
        %3252 = vmatpush1.bf16.msra.mxu0 0
        %3253 = vmatprep.subr.bf16.mxu0 0
        %3254 = vmatpush1.bf16.msra.mxu0 0
        %3255 = vmatprep.subr.bf16.mxu0 0
        %3256 = vmatpush1.bf16.msra.mxu0 0
        %3257 = vmatprep.subr.bf16.mxu0 0
        %3258 = vmatpush1.bf16.msra.mxu0 0
        %3259 = vmatprep.subr.bf16.mxu0 0
        %3260 = vmatpush1.bf16.msra.mxu0 0
        %3261 = vmatprep.subr.bf16.mxu0 0
        %3262 = vmatpush1.bf16.msra.mxu0 0
        %3263 = vmatprep.subr.bf16.mxu0 0
        %3264 = vmatpush1.bf16.msra.mxu0 0
        %3265 = vmatprep.subr.bf16.mxu0 0
        %3266 = vmatpush1.bf16.msra.mxu0 0
        %3267 = vmatprep.subr.bf16.mxu0 0
        %3268 = vmatpush1.bf16.msra.mxu0 0
        %3269 = vmatprep.subr.bf16.mxu0 0
        %3270 = vmatpush1.bf16.msra.mxu0 0
        %3271 = vmatprep.subr.bf16.mxu0 0
        %3272 = vmatpush1.bf16.msra.mxu0 0
        %3273 = vmatprep.subr.bf16.mxu0 0
        %3274 = vmatpush1.bf16.msra.mxu0 0
        %3275 = vmatprep.subr.bf16.mxu0 0
        %3276 = vmatpush1.bf16.msra.mxu0 0
        %3277 = vmatprep.mubr.bf16.mxu0 0
        %3278 = vmatmul.mubr.bf16.gmra.mrb[0].mxu0 %v3240
        %v3279 = vpop.f32.mrb[0].mxu0
        %v3280 = vadd.f32 0.0, %v3279
        %v3281 = vpop.f32.mrb[0].mxu0
        %v3282 = vpop.f32.mrb[0].mxu0
        %v3283 = vpop.f32.mrb[0].mxu0
        %3284 = vdwg.mxu0
        %v3285 = vpack.c.bf16 %v3280, %v3280
        %s3286 = scalar_lea.vmem %s5, 14
        %v3287 = vld [vmem:[%s3286] sm:$0x3]
        %v3289 = vsel %vm655, %v3285, 0
        %v3292 = vsel %vm1049, %v3287, 0
        %3294 = vmatprep.subr.bf16.mxu0 0
        %3295 = vmatpush1.bf16.msra.mxu0 %v3292
        %3296 = vmatprep.subr.bf16.mxu0 0
        %3297 = vmatpush1.bf16.msra.mxu0 0
        %3298 = vmatprep.subr.bf16.mxu0 0
        %3299 = vmatpush1.bf16.msra.mxu0 0
        %3300 = vmatprep.subr.bf16.mxu0 0
        %3301 = vmatpush1.bf16.msra.mxu0 0
        %3302 = vmatprep.subr.bf16.mxu0 0
        %3303 = vmatpush1.bf16.msra.mxu0 0
        %3304 = vmatprep.subr.bf16.mxu0 0
        %3305 = vmatpush1.bf16.msra.mxu0 0
        %3306 = vmatprep.subr.bf16.mxu0 0
        %3307 = vmatpush1.bf16.msra.mxu0 0
        %3308 = vmatprep.subr.bf16.mxu0 0
        %3309 = vmatpush1.bf16.msra.mxu0 0
        %3310 = vmatprep.subr.bf16.mxu0 0
        %3311 = vmatpush1.bf16.msra.mxu0 0
        %3312 = vmatprep.subr.bf16.mxu0 0
        %3313 = vmatpush1.bf16.msra.mxu0 0
        %3314 = vmatprep.subr.bf16.mxu0 0
        %3315 = vmatpush1.bf16.msra.mxu0 0
        %3316 = vmatprep.subr.bf16.mxu0 0
        %3317 = vmatpush1.bf16.msra.mxu0 0
        %3318 = vmatprep.subr.bf16.mxu0 0
        %3319 = vmatpush1.bf16.msra.mxu0 0
        %3320 = vmatprep.subr.bf16.mxu0 0
        %3321 = vmatpush1.bf16.msra.mxu0 0
        %3322 = vmatprep.subr.bf16.mxu0 0
        %3323 = vmatpush1.bf16.msra.mxu0 0
        %3324 = vmatprep.subr.bf16.mxu0 0
        %3325 = vmatpush1.bf16.msra.mxu0 0
        %3326 = vmatprep.mubr.bf16.mxu0 0
        %3327 = vmatmul.mubr.bf16.gmra.mrb[0].mxu0 %v3289
        %v3328 = vpop.f32.mrb[0].mxu0
        %v3329 = vadd.f32 0.0, %v3328
        %v3330 = vpop.f32.mrb[0].mxu0
        %v3331 = vpop.f32.mrb[0].mxu0
        %v3332 = vpop.f32.mrb[0].mxu0
        %3333 = vdwg.mxu0
        %v3334 = vadd.f32 %v3006, %v3329
        %s3335 = scalar_lea.vmem %s9, 6
        %v3336 = vld [vmem:[%s3335] sm:$0x1]
        %v3338 = vlaneseq
        %v3339 = vshrl.u32 %v3338, 7
        %v3340 = vsub.s32 0, %v3339
        %v3341 = vrot.slane %v3336, %v3340
        %v3343 = vadd.f32 %v3334, %v3341
        %v3344 = vadd.f32 %v3343, %v2020
        %s3345 = scalar_lea.vmem %s9, 7
        %v3346 = vld [vmem:[%s3345] sm:$0x1]
        %s3347 = scalar_lea.vmem %s9, 8
        %v3348 = vld [vmem:[%s3347] sm:$0x1]
        %v3349 = vsel %vm495, %v3344, 0.0
        %3350 = vadd.xlane.f32.xlu0 %v3349
        %v3351 = vpop.xlane.xlu0 %3350
        %v3352 = vmul.f32 %v3351, %v1811
        %v3353 = vsub.f32 %v3344, %v3352
        %v3354 = vmul.f32 %v3353, %v3353
        %v3355 = vsel %vm495, %v3354, 0.0
        %3356 = vadd.xlane.f32.xlu0 %v3355
        %v3357 = vpop.xlane.xlu0 %3356
        %v3358 = vmul.f32 %v3357, %v1811
        %v3359 = vadd.f32 %v3358, 1e-12
        %v3360 = vrsqrt.pop %v3359
        %v3361 = vmul.f32 %v3353, %v3360
        %v3363 = vlaneseq
        %v3364 = vshrl.u32 %v3363, 7
        %v3365 = vsub.s32 0, %v3364
        %v3366 = vrot.slane %v3346, %v3365
        %v3368 = vmul.f32 %v3361, %v3366
        %v3370 = vlaneseq
        %v3371 = vshrl.u32 %v3370, 7
        %v3372 = vsub.s32 0, %v3371
        %v3373 = vrot.slane %v3348, %v3372
        %v3375 = vadd.f32 %v3368, %v3373
        %v3376 = vpack.c.bf16 %v3375, %v3375
        %s3377 = scalar_lea.vmem %s6, 8
        %v3378 = vld [vmem:[%s3377] sm:$0xf]
        %v3379 = vld [vmem:[%s3377 + $0x4] sm:$0xf]
        %s3380 = scalar_lea.vmem %s7, 1
        %v3381 = vld [vmem:[%s3380] sm:$0x1]
        %v3383 = vlaneseq
        %v3384 = vshrl.u32 %v3383, 7
        %v3385 = vsub.s32 0, %v3384
        %v3386 = vrot.slane %v3381, %v3385
        %v3390 = vunpack.c.l.b16 %v3378
        %v3391 = vunpack.c.l.b16 %v3379
        %v3392 = vpack.c.b16 %v3391, %v3390
        %v3395 = vsel %vm495, %v3376, 0
        %3397 = vmatprep.subr.bf16.mxu0 0
        %3398 = vmatpush1.bf16.msra.mxu0 %v3392
        %3399 = vmatprep.subr.bf16.mxu0 0
        %3400 = vmatpush1.bf16.msra.mxu0 0
        %3401 = vmatprep.subr.bf16.mxu0 0
        %3402 = vmatpush1.bf16.msra.mxu0 0
        %3403 = vmatprep.subr.bf16.mxu0 0
        %3404 = vmatpush1.bf16.msra.mxu0 0
        %3405 = vmatprep.subr.bf16.mxu0 0
        %3406 = vmatpush1.bf16.msra.mxu0 0
        %3407 = vmatprep.subr.bf16.mxu0 0
        %3408 = vmatpush1.bf16.msra.mxu0 0
        %3409 = vmatprep.subr.bf16.mxu0 0
        %3410 = vmatpush1.bf16.msra.mxu0 0
        %3411 = vmatprep.subr.bf16.mxu0 0
        %3412 = vmatpush1.bf16.msra.mxu0 0
        %3413 = vmatprep.subr.bf16.mxu0 0
        %3414 = vmatpush1.bf16.msra.mxu0 0
        %3415 = vmatprep.subr.bf16.mxu0 0
        %3416 = vmatpush1.bf16.msra.mxu0 0
        %3417 = vmatprep.subr.bf16.mxu0 0
        %3418 = vmatpush1.bf16.msra.mxu0 0
        %3419 = vmatprep.subr.bf16.mxu0 0
        %3420 = vmatpush1.bf16.msra.mxu0 0
        %3421 = vmatprep.subr.bf16.mxu0 0
        %3422 = vmatpush1.bf16.msra.mxu0 0
        %3423 = vmatprep.subr.bf16.mxu0 0
        %3424 = vmatpush1.bf16.msra.mxu0 0
        %3425 = vmatprep.subr.bf16.mxu0 0
        %3426 = vmatpush1.bf16.msra.mxu0 0
        %3427 = vmatprep.subr.bf16.mxu0 0
        %3428 = vmatpush1.bf16.msra.mxu0 0
        %3429 = vmatprep.mubr.bf16.mxu0 0
        %3430 = vmatmul.mubr.bf16.gmra.mrb[0].mxu0 %v3395
        %v3431 = vpop.f32.mrb[0].mxu0
        %v3432 = vadd.f32 %v3386, %v3431
        %v3433 = vpop.f32.mrb[0].mxu0
        %v3434 = vpop.f32.mrb[0].mxu0
        %v3435 = vpop.f32.mrb[0].mxu0
        %3436 = vdwg.mxu0
        %v3437 = vmul.f32 %v3432, 0.5
        %v3438 = vmul.f32 %v3432, 0.044715
        %v3439 = vmul.f32 %v3438, %v3432
        %v3440 = vmul.f32 %v3439, %v3432
        %v3441 = vadd.f32 %v3432, %v3440
        %v3442 = vmul.f32 %v3441, 0.7978846
        %v3443 = vtanh.pop %v3442
        %v3444 = vadd.f32 %v3443, 1.0
        %v3445 = vmul.f32 %v3437, %v3444
        %v3446 = vpack.c.bf16 %v3445, %v3445
        %s3447 = scalar_lea.vmem %s8, 32
        %v3448 = vld [vmem:[%s3447] sm:$0xf]
        %v3449 = vld [vmem:[%s3447 + $0x4] sm:$0xf]
        %v3450 = vld [vmem:[%s3447 + $0x8] sm:$0xf]
        %v3451 = vld [vmem:[%s3447 + $0xc] sm:$0xf]
        %v3452 = vld [vmem:[%s3447 + $0x10] sm:$0xf]
        %v3453 = vld [vmem:[%s3447 + $0x14] sm:$0xf]
        %v3454 = vld [vmem:[%s3447 + $0x18] sm:$0xf]
        %v3455 = vld [vmem:[%s3447 + $0x1c] sm:$0xf]
        %s3456 = scalar_lea.vmem %s9, 9
        %v3457 = vld [vmem:[%s3456] sm:$0x1]
        %v3459 = vlaneseq
        %v3460 = vshrl.u32 %v3459, 7
        %v3461 = vsub.s32 0, %v3460
        %v3462 = vrot.slane %v3457, %v3461
        %v3472 = vunpack.c.l.b16 %v3448
        %v3473 = vunpack.c.l.b16 %v3449
        %v3474 = vunpack.c.l.b16 %v3450
        %v3475 = vunpack.c.l.b16 %v3451
        %v3476 = vunpack.c.l.b16 %v3452
        %v3477 = vunpack.c.l.b16 %v3453
        %v3478 = vunpack.c.l.b16 %v3454
        %v3479 = vunpack.c.l.b16 %v3455
        %v3480 = vpack.c.b16 %v3473, %v3472
        %v3481 = vpack.c.b16 %v3475, %v3474
        %v3482 = vpack.c.b16 %v3477, %v3476
        %v3483 = vpack.c.b16 %v3479, %v3478
        %v3489 = vsel %vm1945, %v3446, 0
        %3491 = vmatprep.subr.bf16.mxu0 0
        %3492 = vmatpush1.bf16.msra.mxu0 %v3480
        %3493 = vmatprep.subr.bf16.mxu0 0
        %3494 = vmatpush1.bf16.msra.mxu0 %v3481
        %3495 = vmatprep.subr.bf16.mxu0 0
        %3496 = vmatpush1.bf16.msra.mxu0 %v3482
        %3497 = vmatprep.subr.bf16.mxu0 0
        %3498 = vmatpush1.bf16.msra.mxu0 %v3483
        %3499 = vmatprep.subr.bf16.mxu0 0
        %3500 = vmatpush1.bf16.msra.mxu0 0
        %3501 = vmatprep.subr.bf16.mxu0 0
        %3502 = vmatpush1.bf16.msra.mxu0 0
        %3503 = vmatprep.subr.bf16.mxu0 0
        %3504 = vmatpush1.bf16.msra.mxu0 0
        %3505 = vmatprep.subr.bf16.mxu0 0
        %3506 = vmatpush1.bf16.msra.mxu0 0
        %3507 = vmatprep.subr.bf16.mxu0 0
        %3508 = vmatpush1.bf16.msra.mxu0 0
        %3509 = vmatprep.subr.bf16.mxu0 0
        %3510 = vmatpush1.bf16.msra.mxu0 0
        %3511 = vmatprep.subr.bf16.mxu0 0
        %3512 = vmatpush1.bf16.msra.mxu0 0
        %3513 = vmatprep.subr.bf16.mxu0 0
        %3514 = vmatpush1.bf16.msra.mxu0 0
        %3515 = vmatprep.subr.bf16.mxu0 0
        %3516 = vmatpush1.bf16.msra.mxu0 0
        %3517 = vmatprep.subr.bf16.mxu0 0
        %3518 = vmatpush1.bf16.msra.mxu0 0
        %3519 = vmatprep.subr.bf16.mxu0 0
        %3520 = vmatpush1.bf16.msra.mxu0 0
        %3521 = vmatprep.subr.bf16.mxu0 0
        %3522 = vmatpush1.bf16.msra.mxu0 0
        %3523 = vmatprep.mubr.bf16.mxu0 0
        %3524 = vmatmul.mubr.bf16.gmra.mrb[0].mxu0 %v3489
        %v3525 = vpop.f32.mrb[0].mxu0
        %v3526 = vadd.f32 %v3462, %v3525
        %v3527 = vpop.f32.mrb[0].mxu0
        %v3528 = vpop.f32.mrb[0].mxu0
        %v3529 = vpop.f32.mrb[0].mxu0
        %3530 = vdwg.mxu0
        %v3531 = vadd.f32 %v3526, %v3375
        %s3532 = scalar_lea.vmem %s9, 10
        %v3533 = vld [vmem:[%s3532] sm:$0x1]
        %s3534 = scalar_lea.vmem %s9, 11
        %v3535 = vld [vmem:[%s3534] sm:$0x1]
        %v3536 = vsel %vm495, %v3531, 0.0
        %3537 = vadd.xlane.f32.xlu0 %v3536
        %v3538 = vpop.xlane.xlu0 %3537
        %v3539 = vmul.f32 %v3538, %v1811
        %v3540 = vsub.f32 %v3531, %v3539
        %v3541 = vmul.f32 %v3540, %v3540
        %v3542 = vsel %vm495, %v3541, 0.0
        %3543 = vadd.xlane.f32.xlu0 %v3542
        %v3544 = vpop.xlane.xlu0 %3543
        %v3545 = vmul.f32 %v3544, %v1811
        %v3546 = vadd.f32 %v3545, 1e-12
        %v3547 = vrsqrt.pop %v3546
        %v3548 = vmul.f32 %v3540, %v3547
        %v3550 = vlaneseq
        %v3551 = vshrl.u32 %v3550, 7
        %v3552 = vsub.s32 0, %v3551
        %v3553 = vrot.slane %v3533, %v3552
        %v3555 = vmul.f32 %v3548, %v3553
        %v3557 = vlaneseq
        %v3558 = vshrl.u32 %v3557, 7
        %v3559 = vsub.s32 0, %v3558
        %v3560 = vrot.slane %v3535, %v3559
        %v3562 = vadd.f32 %v3555, %v3560
        %v3563 = vpack.c.bf16 %v3562, %v3562
        %v3564 = vld [vmem:[%s10] sm:$0xf]
        %v3565 = vld [vmem:[%s10 + $0x4] sm:$0xf]
        %v3566 = vld [vmem:[%s11] sm:$0x1]
        %v3568 = vlaneseq
        %v3569 = vshrl.u32 %v3568, 7
        %v3570 = vsub.s32 0, %v3569
        %v3571 = vrot.slane %v3566, %v3570
        %v3575 = vunpack.c.l.b16 %v3564
        %v3576 = vunpack.c.l.b16 %v3565
        %v3577 = vpack.c.b16 %v3576, %v3575
        %v3580 = vsel %vm495, %v3563, 0
        %3582 = vmatprep.subr.bf16.mxu0 0
        %3583 = vmatpush1.bf16.msra.mxu0 %v3577
        %3584 = vmatprep.subr.bf16.mxu0 0
        %3585 = vmatpush1.bf16.msra.mxu0 0
        %3586 = vmatprep.subr.bf16.mxu0 0
        %3587 = vmatpush1.bf16.msra.mxu0 0
        %3588 = vmatprep.subr.bf16.mxu0 0
        %3589 = vmatpush1.bf16.msra.mxu0 0
        %3590 = vmatprep.subr.bf16.mxu0 0
        %3591 = vmatpush1.bf16.msra.mxu0 0
        %3592 = vmatprep.subr.bf16.mxu0 0
        %3593 = vmatpush1.bf16.msra.mxu0 0
        %3594 = vmatprep.subr.bf16.mxu0 0
        %3595 = vmatpush1.bf16.msra.mxu0 0
        %3596 = vmatprep.subr.bf16.mxu0 0
        %3597 = vmatpush1.bf16.msra.mxu0 0
        %3598 = vmatprep.subr.bf16.mxu0 0
        %3599 = vmatpush1.bf16.msra.mxu0 0
        %3600 = vmatprep.subr.bf16.mxu0 0
        %3601 = vmatpush1.bf16.msra.mxu0 0
        %3602 = vmatprep.subr.bf16.mxu0 0
        %3603 = vmatpush1.bf16.msra.mxu0 0
        %3604 = vmatprep.subr.bf16.mxu0 0
        %3605 = vmatpush1.bf16.msra.mxu0 0
        %3606 = vmatprep.subr.bf16.mxu0 0
        %3607 = vmatpush1.bf16.msra.mxu0 0
        %3608 = vmatprep.subr.bf16.mxu0 0
        %3609 = vmatpush1.bf16.msra.mxu0 0
        %3610 = vmatprep.subr.bf16.mxu0 0
        %3611 = vmatpush1.bf16.msra.mxu0 0
        %3612 = vmatprep.subr.bf16.mxu0 0
        %3613 = vmatpush1.bf16.msra.mxu0 0
        %3614 = vmatprep.mubr.bf16.mxu0 0
        %3615 = vmatmul.mubr.bf16.gmra.mrb[0].mxu0 %v3580
        %v3616 = vpop.f32.mrb[0].mxu0
        %v3617 = vadd.f32 %v3571, %v3616
        %v3618 = vpop.f32.mrb[0].mxu0
        %v3619 = vpop.f32.mrb[0].mxu0
        %v3620 = vpop.f32.mrb[0].mxu0
        %3621 = vdwg.mxu0
        %v3622 = vadd.f32 %v410, %v3617
        %3623 = vst.msk [vmem:[%s404] sm:$0xff] %vm435, %v3622
        %s3624 = sand.u32 %s291, 1
        %s3625 = scalar_lea.sflag [#allocation3], %s3624
        %s3626 = sand.u32 %s291, 1
        %s3627 = smul.addr %s3626, 8
        %s3628 = scalar_lea.vmem [#allocation2], %s3627
        // Predicated region
        $region69: #{tpu_custom_call.1} parent=67 // pred_check
          %p3629 = pneg %p301
        $region70: #{tpu_custom_call.1} parent=67 // pred_check_branch
          %3631 = sbr.rel (%p3629) target = $region72
        $region71: #{tpu_custom_call.1} parent=67 // pred_region
          %s3633 = ssub.s32 128, 128
          %3634 = vsyncadd %s3625, %s3633
          %s3635 = smul.addr %s26, 128
          %s3636 = scalar_lea.hbm %s12, %s3635
          %s3638 = sshll.u32 %s3628, 4
          %s3639 = int_to_ptr.vmem [resolvable:$true] %s3638
          %3641 = dma.vmem_to_hbm [thread:$0]  %s3639, 128, %s3636, %s3625
        $region72: #{tpu_custom_call.1} parent=67 // pred_fallthru
          _
      $region68: #{tpu_custom_call.1} parent=5 // pred_fallthru
        _
      %p3642 = scmp.le.s32.totalorder 2, %s21
      // Predicated region
      $region73: #{tpu_custom_call.1} parent=5 // pred_check
        %p3643 = pneg %p3642
      $region74: #{tpu_custom_call.1} parent=5 // pred_check_branch
        %3645 = sbr.rel (%p3643) target = $region76
      $region75: #{tpu_custom_call.1} parent=5 // pred_region
        %s3646 = ssub.s32 %s21, 2
        // Predicated region
        $region77: #{tpu_custom_call.1} parent=75 // pred_check
          %p3647 = pneg %p307
        $region78: #{tpu_custom_call.1} parent=75 // pred_check_branch
          %3649 = sbr.rel (%p3647) target = $region80
        $region79: #{tpu_custom_call.1} parent=75 // pred_region
          %s3650 = sand.u32 %s292, 1
          %s3651 = scalar_lea.sflag [#allocation3], %s3650
          %s3652 = sand.u32 %s292, 1
          %s3653 = smul.addr %s3652, 8
          %s3654 = scalar_lea.vmem [#allocation2], %s3653
          %3655 = dma.done %s3651, 128
        $region80: #{tpu_custom_call.1} parent=75 // pred_fallthru
          _
      $region76: #{tpu_custom_call.1} parent=5 // pred_fallthru
        _
    $region6: #{tpu_custom_call.1} parent=1 // loop_footer
      %s25 = sadd.s32 1, %s21
    $region7: #{tpu_custom_call.1} parent=1 // loop_footer_branch
      %20 = sbr.rel target = $region3
    $region8: #{tpu_custom_call.1} parent=1 // loop_exit
      _
    %3656 = vsyncpa [#allocation3], 1
    %s3657 = scalar_lea.sflag [#allocation3], 1
    %3658 = vsyncpa %s3657, 1

</llo_original>
